<compile_context>
chip_gen: v5e
topology: v5e:2x2
jax: 0.10.0
libtpu: 0.0.40
codegen_flags: <defaults>
</compile_context>

<pallas_src>
import math

import jax
import jax.numpy as jnp
import numpy as np
from jax.experimental import pallas as pl
from jax.experimental.pallas import tpu as pltpu

N_FRAMES = 10    # frames per state
N_TOKENS = 10    # tokens per frame (intraframe sequence length)
D_INTER = 21     # interframe attention output dim
D_HID1 = 256
D_HID2 = 128


# -----------------------------------------------------------------------------
# Pallas kernel: one batch block per grid step, everything batched inside.
# -----------------------------------------------------------------------------
def qmodel_kernel(state_ref, action_ref, pos1_ref, intra_ref,
                  we_ref, wo_ref, c_ref,
                  w1s_ref, w1a_ref, b1_ref, w2_ref, b2_ref, w3_ref, b3_ref,
                  out_ref):
    tb = state_ref.shape[0]
    f32 = jnp.float32

    # intraframe positional embedding over the 10 token positions
    x1 = state_ref[...] + pos1_ref[...]                       # (tb,10,10)

    # ---- intraframe MHA: num_inputs=1, num_outputs=2, heads=2, d_head=1 ----
    head_out = []
    for h in range(2):
        wq = intra_ref[0 + h]; bq = intra_ref[2 + h]           # SMEM scalars
        wk = intra_ref[4 + h]; bk = intra_ref[6 + h]
        wv = intra_ref[8 + h]; bv = intra_ref[10 + h]
        q = x1 * wq + bq                                       # (tb,10,10)
        k = x1 * wk + bk
        v = x1 * wv + bv
        s = q[..., :, None] * k[..., None, :]                  # (tb,10,10,10), scale=1
        s = s - jnp.max(s, axis=-1, keepdims=True)
        e = jnp.exp(s)
        inv = pl.reciprocal(jnp.sum(e, axis=-1, keepdims=True), approx=True)
        attn = e * inv
        head_out.append(jnp.sum(attn * v[..., None, :], axis=-1))   # (tb,10,10)
    out0, out1 = head_out      # head interleave is folded into (we, wo)

    # ---- interframe attention (heads=1, d=21): fused Q/K/V projection ----
    # qkv[:, :, 0:21]=Q, 21:42=K, 42:63=V; pos-embedding + bias folded into c.
    we_b = jnp.broadcast_to(we_ref[...], (tb, N_TOKENS, 3 * D_INTER))
    wo_b = jnp.broadcast_to(wo_ref[...], (tb, N_TOKENS, 3 * D_INTER))
    qkv = (jnp.einsum('bfi,bio->bfo', out0, we_b, preferred_element_type=f32)
           + jnp.einsum('bfi,bio->bfo', out1, wo_b, preferred_element_type=f32)
           + c_ref[...])                                       # (tb,10,63)
    q2 = qkv[:, :, 0:D_INTER]
    k2 = qkv[:, :, D_INTER:2 * D_INTER]
    v2 = qkv[:, :, 2 * D_INTER:3 * D_INTER]

    s2 = jnp.einsum('bqd,bkd->bqk', q2, k2,
                    preferred_element_type=f32) * (1.0 / math.sqrt(float(D_INTER)))
    s2 = s2 - jnp.max(s2, axis=-1, keepdims=True)
    e2 = jnp.exp(s2)
    inv2 = pl.reciprocal(jnp.sum(e2, axis=-1, keepdims=True), approx=True)
    p2 = e2 * inv2
    o2 = jnp.einsum('bqk,bkd->bqd', p2, v2,
                    preferred_element_type=f32)                # (tb,10,21)

    # ---- MLP head ----
    # action columns (K=2) handled on the VPU, bias folded in.
    h1 = (b1_ref[...]
          + action_ref[:, 0:1] * w1a_ref[0:1, :]
          + action_ref[:, 1:2] * w1a_ref[1:2, :])              # (tb,256)
    # (B,210)@(210,256) contraction, accumulated over the 10 frames (M=tb each).
    for f in range(N_FRAMES):
        h1 = h1 + jnp.dot(o2[:, f, :], w1s_ref[f], preferred_element_type=f32)
    h1 = jnp.maximum(h1, 0.0)                 # Dropout(0.5) -> identity (eval)
    h2 = jnp.maximum(
        jnp.dot(h1, w2_ref[...], preferred_element_type=f32) + b2_ref[...], 0.0)
    # final 128->1 as a lane reduction instead of an N=1 MXU matmul
    out_ref[...] = (jnp.sum(h2 * w3_ref[...], axis=-1, keepdims=True)
                    + b3_ref[...])                             # (tb,1)


# -----------------------------------------------------------------------------
# Host wrapper: parameter folding (pure glue) + pallas_call with a batch grid
# -----------------------------------------------------------------------------
def qmodel_forward(state, action, p, *, block_b=128):
    B = state.shape[0]
    state3 = state.reshape(B, N_FRAMES, N_TOKENS).astype(jnp.float32)
    action = action.astype(jnp.float32)

    # batch block: whole batch if small, else 128 rows (multiple of 8 sublanes,
    # matches the 128-wide MXU on v5e; "parallel" grid splits across v7x cores).
    tb = B if B <= block_b else block_b
    grid = (pl.cdiv(B, tb),)

    pos1 = p['pos1'].reshape(1, 1, N_TOKENS).astype(jnp.float32)

    # intraframe scalar params, flat in SMEM: [wq0,wq1,bq0,bq1,wk0,...,bv1]
    intra = jnp.concatenate([p['wq1'][0], p['bq1'], p['wk1'][0], p['bk1'],
                             p['wv1'][0], p['bv1']]).astype(jnp.float32)   # (12,)

    # interframe: x2[:, 2t+h] = head_h[:, t]; fold interleave + pos-emb + bias,
    # and stack q/k/v weights along N so the projection is one matmul per head.
    wcat = jnp.concatenate([p['wq2'], p['wk2'], p['wv2']], axis=1)   # (20,63)
    bcat = jnp.concatenate([p['bq2'], p['bk2'], p['bv2']])           # (63,)
    w_e = wcat[0::2]                                                  # (10,63)
    w_o = wcat[1::2]                                                  # (10,63)
    c_qkv = (p['pos2'] @ wcat + bcat)[None]                           # (1,10,63)

    # Linear(212->256): attention part (210) + action part (2)
    w1s = p['w1'][:N_FRAMES * D_INTER].reshape(N_FRAMES, D_INTER, D_HID1)
    w1a = p['w1'][N_FRAMES * D_INTER:]                                # (2,256)
    b1 = p['b1'].reshape(1, D_HID1)
    b2 = p['b2'].reshape(1, D_HID2)
    w3 = p['w3'].reshape(1, D_HID2)
    b3 = p['b3'].reshape(1, 1)

    def full(shape):
        return pl.BlockSpec(shape, lambda i, _s=shape: (0,) * len(_s))

    in_specs = [
        pl.BlockSpec((tb, N_FRAMES, N_TOKENS), lambda i: (i, 0, 0)),   # state
        pl.BlockSpec((tb, 2), lambda i: (i, 0)),                       # action
        full((1, 1, N_TOKENS)),                                        # pos1
        pl.BlockSpec((12,), lambda i: (0,),
                     memory_space=pltpu.MemorySpace.SMEM),             # intra scalars
        full((N_TOKENS, 3 * D_INTER)),                                 # w_e
        full((N_TOKENS, 3 * D_INTER)),                                 # w_o
        full((1, N_FRAMES, 3 * D_INTER)),                              # c_qkv
        full((N_FRAMES, D_INTER, D_HID1)),                             # w1s
        full((2, D_HID1)),                                             # w1a
        full((1, D_HID1)),                                             # b1
        full((D_HID1, D_HID2)),                                        # w2
        full((1, D_HID2)),                                             # b2
        full((1, D_HID2)),                                             # w3 (row)
        full((1, 1)),                                                  # b3
    ]
    out_specs = pl.BlockSpec((tb, 1), lambda i: (i, 0))

    # advisory cost (approximate): MXU/VPU flops, exp count, HBM bytes
    flops_per_b = (2 * (600 + 4000)                      # intraframe (2 heads)
                   + 2 * 2 * N_TOKENS * N_TOKENS * 3 * D_INTER
                   + 2 * 2 * N_FRAMES * N_FRAMES * D_INTER
                   + 2 * (210 * D_HID1 + 2 * D_HID1 + D_HID1 * D_HID2 + D_HID2))
    cost = pl.CostEstimate(
        flops=int(B * flops_per_b),
        transcendentals=int(B * (2 * 1000 + 100)),
        bytes_accessed=int(4 * (B * (N_FRAMES * N_TOKENS + 2 + 1) + 100_000)))

    return pl.pallas_call(
        qmodel_kernel,
        out_shape=jax.ShapeDtypeStruct((B, 1), jnp.float32),
        grid=grid,
        in_specs=in_specs,
        out_specs=out_specs,
        compiler_params=pltpu.CompilerParams(
            dimension_semantics=("parallel",),
            vmem_limit_bytes=32 * 1024 * 1024),
        cost_estimate=cost,
    )(state3, action, pos1, intra, w_e, w_o, c_qkv,
      w1s, w1a, b1, p['w2'].astype(jnp.float32), b2, w3, b3)


# -----------------------------------------------------------------------------
# Deterministic parameter init + pure-JAX reference (mirrors the PyTorch module)
# -----------------------------------------------------------------------------
def init_params(key):
    ks = jax.random.split(key, 20)

    def u(k, shape, scale=0.1):
        return jax.random.uniform(k, shape, jnp.float32, -1.0, 1.0) * scale

    return dict(
        pos1=u(ks[0], (N_TOKENS,)),
        wq1=u(ks[1], (1, 2)), bq1=u(ks[2], (2,)),
        wk1=u(ks[3], (1, 2)), bk1=u(ks[4], (2,)),
        wv1=u(ks[5], (1, 2)), bv1=u(ks[6], (2,)),
        pos2=u(ks[7], (N_FRAMES, 20)),
        wq2=u(ks[8], (20, D_INTER)), bq2=u(ks[9], (D_INTER,)),
        wk2=u(ks[10], (20, D_INTER)), bk2=u(ks[11], (D_INTER,)),
        wv2=u(ks[12], (20, D_INTER)), bv2=u(ks[13], (D_INTER,)),
        w1=u(ks[14], (212, 256)), b1=u(ks[15], (256,)),
        w2=u(ks[16], (256, 128)), b2=u(ks[17], (128,)),
        w3=u(ks[18], (128, 1)), b3=u(ks[19], (1,)),
    )


def reference_forward(state, action, p):
    """Plain-JAX mirror of QModel.forward (structured like the PyTorch code)."""
    B = state.shape[0]
    frames = state.reshape(B, N_FRAMES, N_TOKENS, 1)
    x = frames + p['pos1'][None, None, :, None]
    q = x @ p['wq1'] + p['bq1']
    k = x @ p['wk1'] + p['bk1']
    v = x @ p['wv1'] + p['bv1']
    heads = []
    for h in range(2):
        qh, kh, vh = q[..., h], k[..., h], v[..., h]
        s = qh[..., :, None] * kh[..., None, :]
        pr = jax.nn.softmax(s, axis=-1)
        heads.append(jnp.einsum('bfij,bfj->bfi', pr, vh))
    new_frames = jnp.stack(heads, axis=-1).reshape(B, N_FRAMES, 20)

    x2 = new_frames + p['pos2'][None]
    q2 = x2 @ p['wq2'] + p['bq2']
    k2 = x2 @ p['wk2'] + p['bk2']
    v2 = x2 @ p['wv2'] + p['bv2']
    s2 = jnp.einsum('bqo,bko->bqk', q2, k2) / jnp.sqrt(float(D_INTER))
    pr2 = jax.nn.softmax(s2, axis=-1)
    o2 = jnp.einsum('bqk,bko->bqo', pr2, v2)

    feat = jnp.concatenate([o2.reshape(B, 210), action], axis=1)
    h1 = jax.nn.relu(feat @ p['w1'] + p['b1'])
    h2 = jax.nn.relu(h1 @ p['w2'] + p['b2'])
    return h2 @ p['w3'] + p['b3']


if __name__ == "__main__":
    key = jax.random.PRNGKey(0)
    kp, ks, ka = jax.random.split(key, 3)
    params = init_params(kp)

    B = 2
    state = jax.random.normal(ks, (B, 100), jnp.float32)   # 10 frames x 10 values
    action = jax.random.normal(ka, (B, 2), jnp.float32)    # action dim 2 (212-210)

    out = jax.jit(qmodel_forward)(state, action, params)
    out = jax.block_until_ready(out)

    ref = reference_forward(state, action, params)
    assert out.shape == (B, 1)
    np.testing.assert_allclose(np.asarray(out), np.asarray(ref), rtol=2e-2, atol=2e-2)
    print("KERNEL_OK")
</pallas_src>

<mosaic_0001>
module attributes {stable_mosaic.version = 11 : i64} {
  func.func @qmodel_kernel(%arg0: i32, %arg1: memref<2x10x10xf32, #tpu.memory_space<vmem>>, %arg2: memref<2x2xf32, #tpu.memory_space<vmem>>, %arg3: memref<1x1x10xf32, #tpu.memory_space<vmem>>, %arg4: memref<12xf32, #tpu.memory_space<smem>>, %arg5: memref<10x63xf32, #tpu.memory_space<vmem>>, %arg6: memref<10x63xf32, #tpu.memory_space<vmem>>, %arg7: memref<1x10x63xf32, #tpu.memory_space<vmem>>, %arg8: memref<10x21x256xf32, #tpu.memory_space<vmem>>, %arg9: memref<2x256xf32, #tpu.memory_space<vmem>>, %arg10: memref<1x256xf32, #tpu.memory_space<vmem>>, %arg11: memref<256x128xf32, #tpu.memory_space<vmem>>, %arg12: memref<1x128xf32, #tpu.memory_space<vmem>>, %arg13: memref<1x128xf32, #tpu.memory_space<vmem>>, %arg14: memref<1x1xf32, #tpu.memory_space<vmem>>, %arg15: memref<2x1xf32, #tpu.memory_space<vmem>>) attributes {dimension_semantics = [#tpu.dimension_semantics<parallel>], iteration_bounds = array<i64: 1>, scalar_prefetch = 0 : i64, scratch_operands = 0 : i64, tpu.core_type = #tpu.core_type<tc>, window_params = [{transform_indices = @transform_0, window_bounds = array<i64: 2, 10, 10>}, {transform_indices = @transform_1, window_bounds = array<i64: 2, 2>}, {pipeline_mode = #tpu.pipeline_mode<synchronous>, transform_indices = @transform_2, window_bounds = array<i64: 1, 1, 10>}, {transform_indices = @transform_3, window_bounds = array<i64: 12>}, {pipeline_mode = #tpu.pipeline_mode<synchronous>, transform_indices = @transform_4, window_bounds = array<i64: 10, 63>}, {pipeline_mode = #tpu.pipeline_mode<synchronous>, transform_indices = @transform_5, window_bounds = array<i64: 10, 63>}, {pipeline_mode = #tpu.pipeline_mode<synchronous>, transform_indices = @transform_6, window_bounds = array<i64: 1, 10, 63>}, {pipeline_mode = #tpu.pipeline_mode<synchronous>, transform_indices = @transform_7, window_bounds = array<i64: 10, 21, 256>}, {pipeline_mode = #tpu.pipeline_mode<synchronous>, transform_indices = @transform_8, window_bounds = array<i64: 2, 256>}, {pipeline_mode = #tpu.pipeline_mode<synchronous>, transform_indices = @transform_9, window_bounds = array<i64: 1, 256>}, {pipeline_mode = #tpu.pipeline_mode<synchronous>, transform_indices = @transform_10, window_bounds = array<i64: 256, 128>}, {pipeline_mode = #tpu.pipeline_mode<synchronous>, transform_indices = @transform_11, window_bounds = array<i64: 1, 128>}, {pipeline_mode = #tpu.pipeline_mode<synchronous>, transform_indices = @transform_12, window_bounds = array<i64: 1, 128>}, {pipeline_mode = #tpu.pipeline_mode<synchronous>, transform_indices = @transform_13, window_bounds = array<i64: 1, 1>}, {transform_indices = @transform_14, window_bounds = array<i64: 2, 1>}]} {
    %c0 = arith.constant 0 : index
    %c0_0 = arith.constant 0 : index
    %c0_1 = arith.constant 0 : index
    %0 = vector.load %arg1[%c0, %c0_0, %c0_1] : memref<2x10x10xf32, #tpu.memory_space<vmem>>, vector<2x10x10xf32>
    %c0_2 = arith.constant 0 : index
    %c0_3 = arith.constant 0 : index
    %c0_4 = arith.constant 0 : index
    %1 = vector.load %arg3[%c0_2, %c0_3, %c0_4] : memref<1x1x10xf32, #tpu.memory_space<vmem>>, vector<1x1x10xf32>
    %2 = vector.broadcast %1 : vector<1x1x10xf32> to vector<2x10x10xf32>
    %3 = arith.addf %0, %2 : vector<2x10x10xf32>
    %c0_5 = arith.constant 0 : index
    %4 = memref.load %arg4[%c0_5] : memref<12xf32, #tpu.memory_space<smem>>
    %c2 = arith.constant 2 : index
    %5 = memref.load %arg4[%c2] : memref<12xf32, #tpu.memory_space<smem>>
    %c4 = arith.constant 4 : index
    %6 = memref.load %arg4[%c4] : memref<12xf32, #tpu.memory_space<smem>>
    %c6 = arith.constant 6 : index
    %7 = memref.load %arg4[%c6] : memref<12xf32, #tpu.memory_space<smem>>
    %c8 = arith.constant 8 : index
    %8 = memref.load %arg4[%c8] : memref<12xf32, #tpu.memory_space<smem>>
    %c10 = arith.constant 10 : index
    %9 = memref.load %arg4[%c10] : memref<12xf32, #tpu.memory_space<smem>>
    %10 = vector.broadcast %4 : f32 to vector<2x10x10xf32>
    %11 = arith.mulf %3, %10 : vector<2x10x10xf32>
    %12 = vector.broadcast %5 : f32 to vector<2x10x10xf32>
    %13 = arith.addf %11, %12 : vector<2x10x10xf32>
    %14 = vector.broadcast %6 : f32 to vector<2x10x10xf32>
    %15 = arith.mulf %3, %14 : vector<2x10x10xf32>
    %16 = vector.broadcast %7 : f32 to vector<2x10x10xf32>
    %17 = arith.addf %15, %16 : vector<2x10x10xf32>
    %18 = vector.broadcast %8 : f32 to vector<2x10x10xf32>
    %19 = arith.mulf %3, %18 : vector<2x10x10xf32>
    %20 = vector.broadcast %9 : f32 to vector<2x10x10xf32>
    %21 = arith.addf %19, %20 : vector<2x10x10xf32>
    %22 = vector.shape_cast %13 : vector<2x10x10xf32> to vector<2x10x10x1xf32>
    %23 = vector.shape_cast %17 : vector<2x10x10xf32> to vector<2x10x1x10xf32>
    %24 = vector.broadcast %22 : vector<2x10x10x1xf32> to vector<2x10x10x10xf32>
    %25 = vector.broadcast %23 : vector<2x10x1x10xf32> to vector<2x10x10x10xf32>
    %26 = arith.mulf %24, %25 : vector<2x10x10x10xf32>
    %cst = arith.constant dense<0xFF800000> : vector<2x10x10xf32>
    %27 = vector.multi_reduction <maximumf>, %26, %cst [3] : vector<2x10x10x10xf32> to vector<2x10x10xf32>
    %28 = vector.shape_cast %27 : vector<2x10x10xf32> to vector<2x10x10x1xf32>
    %29 = vector.broadcast %28 : vector<2x10x10x1xf32> to vector<2x10x10x10xf32>
    %30 = arith.subf %26, %29 : vector<2x10x10x10xf32>
    %31 = math.exp %30 : vector<2x10x10x10xf32>
    %cst_6 = arith.constant dense<0.000000e+00> : vector<2x10x10xf32>
    %32 = vector.multi_reduction <add>, %31, %cst_6 [3] : vector<2x10x10x10xf32> to vector<2x10x10xf32>
    %33 = vector.shape_cast %32 : vector<2x10x10xf32> to vector<2x10x10x1xf32>
    %34 = tpu.reciprocal %33 {approx = true} : vector<2x10x10x1xf32> -> vector<2x10x10x1xf32>
    %35 = vector.broadcast %34 : vector<2x10x10x1xf32> to vector<2x10x10x10xf32>
    %36 = arith.mulf %31, %35 : vector<2x10x10x10xf32>
    %37 = vector.shape_cast %21 : vector<2x10x10xf32> to vector<2x10x1x10xf32>
    %38 = vector.broadcast %37 : vector<2x10x1x10xf32> to vector<2x10x10x10xf32>
    %39 = arith.mulf %36, %38 : vector<2x10x10x10xf32>
    %cst_7 = arith.constant dense<0.000000e+00> : vector<2x10x10xf32>
    %40 = vector.multi_reduction <add>, %39, %cst_7 [3] : vector<2x10x10x10xf32> to vector<2x10x10xf32>
    %c1 = arith.constant 1 : index
    %41 = memref.load %arg4[%c1] : memref<12xf32, #tpu.memory_space<smem>>
    %c3 = arith.constant 3 : index
    %42 = memref.load %arg4[%c3] : memref<12xf32, #tpu.memory_space<smem>>
    %c5 = arith.constant 5 : index
    %43 = memref.load %arg4[%c5] : memref<12xf32, #tpu.memory_space<smem>>
    %c7 = arith.constant 7 : index
    %44 = memref.load %arg4[%c7] : memref<12xf32, #tpu.memory_space<smem>>
    %c9 = arith.constant 9 : index
    %45 = memref.load %arg4[%c9] : memref<12xf32, #tpu.memory_space<smem>>
    %c11 = arith.constant 11 : index
    %46 = memref.load %arg4[%c11] : memref<12xf32, #tpu.memory_space<smem>>
    %47 = vector.broadcast %41 : f32 to vector<2x10x10xf32>
    %48 = arith.mulf %3, %47 : vector<2x10x10xf32>
    %49 = vector.broadcast %42 : f32 to vector<2x10x10xf32>
    %50 = arith.addf %48, %49 : vector<2x10x10xf32>
    %51 = vector.broadcast %43 : f32 to vector<2x10x10xf32>
    %52 = arith.mulf %3, %51 : vector<2x10x10xf32>
    %53 = vector.broadcast %44 : f32 to vector<2x10x10xf32>
    %54 = arith.addf %52, %53 : vector<2x10x10xf32>
    %55 = vector.broadcast %45 : f32 to vector<2x10x10xf32>
    %56 = arith.mulf %3, %55 : vector<2x10x10xf32>
    %57 = vector.broadcast %46 : f32 to vector<2x10x10xf32>
    %58 = arith.addf %56, %57 : vector<2x10x10xf32>
    %59 = vector.shape_cast %50 : vector<2x10x10xf32> to vector<2x10x10x1xf32>
    %60 = vector.shape_cast %54 : vector<2x10x10xf32> to vector<2x10x1x10xf32>
    %61 = vector.broadcast %59 : vector<2x10x10x1xf32> to vector<2x10x10x10xf32>
    %62 = vector.broadcast %60 : vector<2x10x1x10xf32> to vector<2x10x10x10xf32>
    %63 = arith.mulf %61, %62 : vector<2x10x10x10xf32>
    %cst_8 = arith.constant dense<0xFF800000> : vector<2x10x10xf32>
    %64 = vector.multi_reduction <maximumf>, %63, %cst_8 [3] : vector<2x10x10x10xf32> to vector<2x10x10xf32>
    %65 = vector.shape_cast %64 : vector<2x10x10xf32> to vector<2x10x10x1xf32>
    %66 = vector.broadcast %65 : vector<2x10x10x1xf32> to vector<2x10x10x10xf32>
    %67 = arith.subf %63, %66 : vector<2x10x10x10xf32>
    %68 = math.exp %67 : vector<2x10x10x10xf32>
    %cst_9 = arith.constant dense<0.000000e+00> : vector<2x10x10xf32>
    %69 = vector.multi_reduction <add>, %68, %cst_9 [3] : vector<2x10x10x10xf32> to vector<2x10x10xf32>
    %70 = vector.shape_cast %69 : vector<2x10x10xf32> to vector<2x10x10x1xf32>
    %71 = tpu.reciprocal %70 {approx = true} : vector<2x10x10x1xf32> -> vector<2x10x10x1xf32>
    %72 = vector.broadcast %71 : vector<2x10x10x1xf32> to vector<2x10x10x10xf32>
    %73 = arith.mulf %68, %72 : vector<2x10x10x10xf32>
    %74 = vector.shape_cast %58 : vector<2x10x10xf32> to vector<2x10x1x10xf32>
    %75 = vector.broadcast %74 : vector<2x10x1x10xf32> to vector<2x10x10x10xf32>
    %76 = arith.mulf %73, %75 : vector<2x10x10x10xf32>
    %cst_10 = arith.constant dense<0.000000e+00> : vector<2x10x10xf32>
    %77 = vector.multi_reduction <add>, %76, %cst_10 [3] : vector<2x10x10x10xf32> to vector<2x10x10xf32>
    %c0_11 = arith.constant 0 : index
    %c0_12 = arith.constant 0 : index
    %78 = vector.load %arg5[%c0_11, %c0_12] : memref<10x63xf32, #tpu.memory_space<vmem>>, vector<10x63xf32>
    %79 = vector.shape_cast %78 : vector<10x63xf32> to vector<1x10x63xf32>
    %80 = vector.broadcast %79 : vector<1x10x63xf32> to vector<2x10x63xf32>
    %c0_13 = arith.constant 0 : index
    %c0_14 = arith.constant 0 : index
    %81 = vector.load %arg6[%c0_13, %c0_14] : memref<10x63xf32, #tpu.memory_space<vmem>>, vector<10x63xf32>
    %82 = vector.shape_cast %81 : vector<10x63xf32> to vector<1x10x63xf32>
    %83 = vector.broadcast %82 : vector<1x10x63xf32> to vector<2x10x63xf32>
    "tpu.trace_start"() <{level = 10 : i32, message = "bfi,bio->bfo"}> : () -> ()
    %cst_15 = arith.constant dense<0.000000e+00> : vector<2x10x63xf32>
    %84 = tpu.matmul %40, %80, %cst_15 {dimension_numbers = #tpu.dot_dimension_numbers<[2], [1], [1], [2], [0, 0, 0, 1, 1, 2], [0], [0]>} : vector<2x10x10xf32>, vector<2x10x63xf32>, vector<2x10x63xf32> -> vector<2x10x63xf32>
    %cst_16 = arith.constant dense<0.000000e+00> : vector<2x10x63xf32>
    %85 = tpu.matmul %77, %83, %cst_16 {dimension_numbers = #tpu.dot_dimension_numbers<[2], [1], [1], [2], [0, 0, 0, 1, 1, 2], [0], [0]>} : vector<2x10x10xf32>, vector<2x10x63xf32>, vector<2x10x63xf32> -> vector<2x10x63xf32>
    "tpu.trace_stop"() : () -> ()
    %86 = arith.addf %84, %85 : vector<2x10x63xf32>
    %c0_17 = arith.constant 0 : index
    %c0_18 = arith.constant 0 : index
    %c0_19 = arith.constant 0 : index
    %87 = vector.load %arg7[%c0_17, %c0_18, %c0_19] : memref<1x10x63xf32, #tpu.memory_space<vmem>>, vector<1x10x63xf32>
    %88 = vector.broadcast %87 : vector<1x10x63xf32> to vector<2x10x63xf32>
    %89 = arith.addf %86, %88 : vector<2x10x63xf32>
    %90 = vector.extract_strided_slice %89 {offsets = [0, 0, 0], sizes = [2, 10, 21], strides = [1, 1, 1]} : vector<2x10x63xf32> to vector<2x10x21xf32>
    %91 = vector.extract_strided_slice %89 {offsets = [0, 0, 21], sizes = [2, 10, 21], strides = [1, 1, 1]} : vector<2x10x63xf32> to vector<2x10x21xf32>
    %92 = vector.extract_strided_slice %89 {offsets = [0, 0, 42], sizes = [2, 10, 21], strides = [1, 1, 1]} : vector<2x10x63xf32> to vector<2x10x21xf32>
    "tpu.trace_start"() <{level = 10 : i32, message = "bqd,bkd->bqk"}> : () -> ()
    %cst_20 = arith.constant dense<0.000000e+00> : vector<2x10x10xf32>
    %93 = tpu.matmul %90, %91, %cst_20 {dimension_numbers = #tpu.dot_dimension_numbers<[2], [2], [1], [1], [0, 0, 0, 1, 1, 1], [0], [0]>} : vector<2x10x21xf32>, vector<2x10x21xf32>, vector<2x10x10xf32> -> vector<2x10x10xf32>
    "tpu.trace_stop"() : () -> ()
    %cst_21 = arith.constant 0.218217894 : f32
    %94 = vector.broadcast %cst_21 : f32 to vector<2x10x10xf32>
    %95 = arith.mulf %93, %94 : vector<2x10x10xf32>
    %cst_22 = arith.constant dense<0xFF800000> : vector<2x10xf32>
    %96 = vector.multi_reduction <maximumf>, %95, %cst_22 [2] : vector<2x10x10xf32> to vector<2x10xf32>
    %97 = vector.shape_cast %96 : vector<2x10xf32> to vector<2x10x1xf32>
    %98 = vector.broadcast %97 : vector<2x10x1xf32> to vector<2x10x10xf32>
    %99 = arith.subf %95, %98 : vector<2x10x10xf32>
    %100 = math.exp %99 : vector<2x10x10xf32>
    %cst_23 = arith.constant dense<0.000000e+00> : vector<2x10xf32>
    %101 = vector.multi_reduction <add>, %100, %cst_23 [2] : vector<2x10x10xf32> to vector<2x10xf32>
    %102 = vector.shape_cast %101 : vector<2x10xf32> to vector<2x10x1xf32>
    %103 = tpu.reciprocal %102 {approx = true} : vector<2x10x1xf32> -> vector<2x10x1xf32>
    %104 = vector.broadcast %103 : vector<2x10x1xf32> to vector<2x10x10xf32>
    %105 = arith.mulf %100, %104 : vector<2x10x10xf32>
    "tpu.trace_start"() <{level = 10 : i32, message = "bqk,bkd->bqd"}> : () -> ()
    %cst_24 = arith.constant dense<0.000000e+00> : vector<2x10x21xf32>
    %106 = tpu.matmul %105, %92, %cst_24 {dimension_numbers = #tpu.dot_dimension_numbers<[2], [1], [1], [2], [0, 0, 0, 1, 1, 2], [0], [0]>} : vector<2x10x10xf32>, vector<2x10x21xf32>, vector<2x10x21xf32> -> vector<2x10x21xf32>
    "tpu.trace_stop"() : () -> ()
    %c0_25 = arith.constant 0 : index
    %c0_26 = arith.constant 0 : index
    %107 = vector.load %arg10[%c0_25, %c0_26] : memref<1x256xf32, #tpu.memory_space<vmem>>, vector<1x256xf32>
    %c0_27 = arith.constant 0 : index
    %c0_28 = arith.constant 0 : index
    %108 = vector.load %arg2[%c0_27, %c0_28] : memref<2x2xf32, #tpu.memory_space<vmem>>, vector<2x1xf32>
    %c0_29 = arith.constant 0 : index
    %c0_30 = arith.constant 0 : index
    %109 = vector.load %arg9[%c0_29, %c0_30] : memref<2x256xf32, #tpu.memory_space<vmem>>, vector<1x256xf32>
    %110 = vector.broadcast %108 : vector<2x1xf32> to vector<2x256xf32>
    %111 = vector.broadcast %109 : vector<1x256xf32> to vector<2x256xf32>
    %112 = arith.mulf %110, %111 : vector<2x256xf32>
    %113 = vector.broadcast %107 : vector<1x256xf32> to vector<2x256xf32>
    %114 = arith.addf %113, %112 : vector<2x256xf32>
    %c0_31 = arith.constant 0 : index
    %c1_32 = arith.constant 1 : index
    %115 = vector.load %arg2[%c0_31, %c1_32] : memref<2x2xf32, #tpu.memory_space<vmem>>, vector<2x1xf32>
    %c1_33 = arith.constant 1 : index
    %c0_34 = arith.constant 0 : index
    %116 = vector.load %arg9[%c1_33, %c0_34] : memref<2x256xf32, #tpu.memory_space<vmem>>, vector<1x256xf32>
    %117 = vector.broadcast %115 : vector<2x1xf32> to vector<2x256xf32>
    %118 = vector.broadcast %116 : vector<1x256xf32> to vector<2x256xf32>
    %119 = arith.mulf %117, %118 : vector<2x256xf32>
    %120 = arith.addf %114, %119 : vector<2x256xf32>
    %121 = vector.extract_strided_slice %106 {offsets = [0, 0, 0], sizes = [2, 1, 21], strides = [1, 1, 1]} : vector<2x10x21xf32> to vector<2x1x21xf32>
    %122 = vector.shape_cast %121 : vector<2x1x21xf32> to vector<2x21xf32>
    %c0_35 = arith.constant 0 : index
    %c0_36 = arith.constant 0 : index
    %c0_37 = arith.constant 0 : index
    %123 = vector.load %arg8[%c0_35, %c0_36, %c0_37] : memref<10x21x256xf32, #tpu.memory_space<vmem>>, vector<1x21x256xf32>
    %124 = vector.shape_cast %123 : vector<1x21x256xf32> to vector<21x256xf32>
    %cst_38 = arith.constant dense<0.000000e+00> : vector<2x256xf32>
    %125 = tpu.matmul %122, %124, %cst_38 {dimension_numbers = #tpu.dot_dimension_numbers<[1], [0], [0], [1], [0, 0, 1, 1], [], []>} : vector<2x21xf32>, vector<21x256xf32>, vector<2x256xf32> -> vector<2x256xf32>
    %126 = arith.addf %120, %125 : vector<2x256xf32>
    %127 = vector.extract_strided_slice %106 {offsets = [0, 1, 0], sizes = [2, 1, 21], strides = [1, 1, 1]} : vector<2x10x21xf32> to vector<2x1x21xf32>
    %128 = vector.shape_cast %127 : vector<2x1x21xf32> to vector<2x21xf32>
    %c1_39 = arith.constant 1 : index
    %c0_40 = arith.constant 0 : index
    %c0_41 = arith.constant 0 : index
    %129 = vector.load %arg8[%c1_39, %c0_40, %c0_41] : memref<10x21x256xf32, #tpu.memory_space<vmem>>, vector<1x21x256xf32>
    %130 = vector.shape_cast %129 : vector<1x21x256xf32> to vector<21x256xf32>
    %cst_42 = arith.constant dense<0.000000e+00> : vector<2x256xf32>
    %131 = tpu.matmul %128, %130, %cst_42 {dimension_numbers = #tpu.dot_dimension_numbers<[1], [0], [0], [1], [0, 0, 1, 1], [], []>} : vector<2x21xf32>, vector<21x256xf32>, vector<2x256xf32> -> vector<2x256xf32>
    %132 = arith.addf %126, %131 : vector<2x256xf32>
    %133 = vector.extract_strided_slice %106 {offsets = [0, 2, 0], sizes = [2, 1, 21], strides = [1, 1, 1]} : vector<2x10x21xf32> to vector<2x1x21xf32>
    %134 = vector.shape_cast %133 : vector<2x1x21xf32> to vector<2x21xf32>
    %c2_43 = arith.constant 2 : index
    %c0_44 = arith.constant 0 : index
    %c0_45 = arith.constant 0 : index
    %135 = vector.load %arg8[%c2_43, %c0_44, %c0_45] : memref<10x21x256xf32, #tpu.memory_space<vmem>>, vector<1x21x256xf32>
    %136 = vector.shape_cast %135 : vector<1x21x256xf32> to vector<21x256xf32>
    %cst_46 = arith.constant dense<0.000000e+00> : vector<2x256xf32>
    %137 = tpu.matmul %134, %136, %cst_46 {dimension_numbers = #tpu.dot_dimension_numbers<[1], [0], [0], [1], [0, 0, 1, 1], [], []>} : vector<2x21xf32>, vector<21x256xf32>, vector<2x256xf32> -> vector<2x256xf32>
    %138 = arith.addf %132, %137 : vector<2x256xf32>
    %139 = vector.extract_strided_slice %106 {offsets = [0, 3, 0], sizes = [2, 1, 21], strides = [1, 1, 1]} : vector<2x10x21xf32> to vector<2x1x21xf32>
    %140 = vector.shape_cast %139 : vector<2x1x21xf32> to vector<2x21xf32>
    %c3_47 = arith.constant 3 : index
    %c0_48 = arith.constant 0 : index
    %c0_49 = arith.constant 0 : index
    %141 = vector.load %arg8[%c3_47, %c0_48, %c0_49] : memref<10x21x256xf32, #tpu.memory_space<vmem>>, vector<1x21x256xf32>
    %142 = vector.shape_cast %141 : vector<1x21x256xf32> to vector<21x256xf32>
    %cst_50 = arith.constant dense<0.000000e+00> : vector<2x256xf32>
    %143 = tpu.matmul %140, %142, %cst_50 {dimension_numbers = #tpu.dot_dimension_numbers<[1], [0], [0], [1], [0, 0, 1, 1], [], []>} : vector<2x21xf32>, vector<21x256xf32>, vector<2x256xf32> -> vector<2x256xf32>
    %144 = arith.addf %138, %143 : vector<2x256xf32>
    %145 = vector.extract_strided_slice %106 {offsets = [0, 4, 0], sizes = [2, 1, 21], strides = [1, 1, 1]} : vector<2x10x21xf32> to vector<2x1x21xf32>
    %146 = vector.shape_cast %145 : vector<2x1x21xf32> to vector<2x21xf32>
    %c4_51 = arith.constant 4 : index
    %c0_52 = arith.constant 0 : index
    %c0_53 = arith.constant 0 : index
    %147 = vector.load %arg8[%c4_51, %c0_52, %c0_53] : memref<10x21x256xf32, #tpu.memory_space<vmem>>, vector<1x21x256xf32>
    %148 = vector.shape_cast %147 : vector<1x21x256xf32> to vector<21x256xf32>
    %cst_54 = arith.constant dense<0.000000e+00> : vector<2x256xf32>
    %149 = tpu.matmul %146, %148, %cst_54 {dimension_numbers = #tpu.dot_dimension_numbers<[1], [0], [0], [1], [0, 0, 1, 1], [], []>} : vector<2x21xf32>, vector<21x256xf32>, vector<2x256xf32> -> vector<2x256xf32>
    %150 = arith.addf %144, %149 : vector<2x256xf32>
    %151 = vector.extract_strided_slice %106 {offsets = [0, 5, 0], sizes = [2, 1, 21], strides = [1, 1, 1]} : vector<2x10x21xf32> to vector<2x1x21xf32>
    %152 = vector.shape_cast %151 : vector<2x1x21xf32> to vector<2x21xf32>
    %c5_55 = arith.constant 5 : index
    %c0_56 = arith.constant 0 : index
    %c0_57 = arith.constant 0 : index
    %153 = vector.load %arg8[%c5_55, %c0_56, %c0_57] : memref<10x21x256xf32, #tpu.memory_space<vmem>>, vector<1x21x256xf32>
    %154 = vector.shape_cast %153 : vector<1x21x256xf32> to vector<21x256xf32>
    %cst_58 = arith.constant dense<0.000000e+00> : vector<2x256xf32>
    %155 = tpu.matmul %152, %154, %cst_58 {dimension_numbers = #tpu.dot_dimension_numbers<[1], [0], [0], [1], [0, 0, 1, 1], [], []>} : vector<2x21xf32>, vector<21x256xf32>, vector<2x256xf32> -> vector<2x256xf32>
    %156 = arith.addf %150, %155 : vector<2x256xf32>
    %157 = vector.extract_strided_slice %106 {offsets = [0, 6, 0], sizes = [2, 1, 21], strides = [1, 1, 1]} : vector<2x10x21xf32> to vector<2x1x21xf32>
    %158 = vector.shape_cast %157 : vector<2x1x21xf32> to vector<2x21xf32>
    %c6_59 = arith.constant 6 : index
    %c0_60 = arith.constant 0 : index
    %c0_61 = arith.constant 0 : index
    %159 = vector.load %arg8[%c6_59, %c0_60, %c0_61] : memref<10x21x256xf32, #tpu.memory_space<vmem>>, vector<1x21x256xf32>
    %160 = vector.shape_cast %159 : vector<1x21x256xf32> to vector<21x256xf32>
    %cst_62 = arith.constant dense<0.000000e+00> : vector<2x256xf32>
    %161 = tpu.matmul %158, %160, %cst_62 {dimension_numbers = #tpu.dot_dimension_numbers<[1], [0], [0], [1], [0, 0, 1, 1], [], []>} : vector<2x21xf32>, vector<21x256xf32>, vector<2x256xf32> -> vector<2x256xf32>
    %162 = arith.addf %156, %161 : vector<2x256xf32>
    %163 = vector.extract_strided_slice %106 {offsets = [0, 7, 0], sizes = [2, 1, 21], strides = [1, 1, 1]} : vector<2x10x21xf32> to vector<2x1x21xf32>
    %164 = vector.shape_cast %163 : vector<2x1x21xf32> to vector<2x21xf32>
    %c7_63 = arith.constant 7 : index
    %c0_64 = arith.constant 0 : index
    %c0_65 = arith.constant 0 : index
    %165 = vector.load %arg8[%c7_63, %c0_64, %c0_65] : memref<10x21x256xf32, #tpu.memory_space<vmem>>, vector<1x21x256xf32>
    %166 = vector.shape_cast %165 : vector<1x21x256xf32> to vector<21x256xf32>
    %cst_66 = arith.constant dense<0.000000e+00> : vector<2x256xf32>
    %167 = tpu.matmul %164, %166, %cst_66 {dimension_numbers = #tpu.dot_dimension_numbers<[1], [0], [0], [1], [0, 0, 1, 1], [], []>} : vector<2x21xf32>, vector<21x256xf32>, vector<2x256xf32> -> vector<2x256xf32>
    %168 = arith.addf %162, %167 : vector<2x256xf32>
    %169 = vector.extract_strided_slice %106 {offsets = [0, 8, 0], sizes = [2, 1, 21], strides = [1, 1, 1]} : vector<2x10x21xf32> to vector<2x1x21xf32>
    %170 = vector.shape_cast %169 : vector<2x1x21xf32> to vector<2x21xf32>
    %c8_67 = arith.constant 8 : index
    %c0_68 = arith.constant 0 : index
    %c0_69 = arith.constant 0 : index
    %171 = vector.load %arg8[%c8_67, %c0_68, %c0_69] : memref<10x21x256xf32, #tpu.memory_space<vmem>>, vector<1x21x256xf32>
    %172 = vector.shape_cast %171 : vector<1x21x256xf32> to vector<21x256xf32>
    %cst_70 = arith.constant dense<0.000000e+00> : vector<2x256xf32>
    %173 = tpu.matmul %170, %172, %cst_70 {dimension_numbers = #tpu.dot_dimension_numbers<[1], [0], [0], [1], [0, 0, 1, 1], [], []>} : vector<2x21xf32>, vector<21x256xf32>, vector<2x256xf32> -> vector<2x256xf32>
    %174 = arith.addf %168, %173 : vector<2x256xf32>
    %175 = vector.extract_strided_slice %106 {offsets = [0, 9, 0], sizes = [2, 1, 21], strides = [1, 1, 1]} : vector<2x10x21xf32> to vector<2x1x21xf32>
    %176 = vector.shape_cast %175 : vector<2x1x21xf32> to vector<2x21xf32>
    %c9_71 = arith.constant 9 : index
    %c0_72 = arith.constant 0 : index
    %c0_73 = arith.constant 0 : index
    %177 = vector.load %arg8[%c9_71, %c0_72, %c0_73] : memref<10x21x256xf32, #tpu.memory_space<vmem>>, vector<1x21x256xf32>
    %178 = vector.shape_cast %177 : vector<1x21x256xf32> to vector<21x256xf32>
    %cst_74 = arith.constant dense<0.000000e+00> : vector<2x256xf32>
    %179 = tpu.matmul %176, %178, %cst_74 {dimension_numbers = #tpu.dot_dimension_numbers<[1], [0], [0], [1], [0, 0, 1, 1], [], []>} : vector<2x21xf32>, vector<21x256xf32>, vector<2x256xf32> -> vector<2x256xf32>
    %180 = arith.addf %174, %179 : vector<2x256xf32>
    %cst_75 = arith.constant 0.000000e+00 : f32
    %181 = vector.broadcast %cst_75 : f32 to vector<2x256xf32>
    %182 = arith.maximumf %180, %181 : vector<2x256xf32>
    %c0_76 = arith.constant 0 : index
    %c0_77 = arith.constant 0 : index
    %183 = vector.load %arg11[%c0_76, %c0_77] : memref<256x128xf32, #tpu.memory_space<vmem>>, vector<256x128xf32>
    %cst_78 = arith.constant dense<0.000000e+00> : vector<2x128xf32>
    %184 = tpu.matmul %182, %183, %cst_78 {dimension_numbers = #tpu.dot_dimension_numbers<[1], [0], [0], [1], [0, 0, 1, 1], [], []>} : vector<2x256xf32>, vector<256x128xf32>, vector<2x128xf32> -> vector<2x128xf32>
    %c0_79 = arith.constant 0 : index
    %c0_80 = arith.constant 0 : index
    %185 = vector.load %arg12[%c0_79, %c0_80] : memref<1x128xf32, #tpu.memory_space<vmem>>, vector<1x128xf32>
    %186 = vector.broadcast %185 : vector<1x128xf32> to vector<2x128xf32>
    %187 = arith.addf %184, %186 : vector<2x128xf32>
    %cst_81 = arith.constant 0.000000e+00 : f32
    %188 = vector.broadcast %cst_81 : f32 to vector<2x128xf32>
    %189 = arith.maximumf %187, %188 : vector<2x128xf32>
    %c0_82 = arith.constant 0 : index
    %c0_83 = arith.constant 0 : index
    %190 = vector.load %arg13[%c0_82, %c0_83] : memref<1x128xf32, #tpu.memory_space<vmem>>, vector<1x128xf32>
    %191 = vector.broadcast %190 : vector<1x128xf32> to vector<2x128xf32>
    %192 = arith.mulf %189, %191 : vector<2x128xf32>
    %cst_84 = arith.constant dense<0.000000e+00> : vector<2xf32>
    %193 = vector.multi_reduction <add>, %192, %cst_84 [1] : vector<2x128xf32> to vector<2xf32>
    %194 = vector.shape_cast %193 : vector<2xf32> to vector<2x1xf32>
    %c0_85 = arith.constant 0 : index
    %c0_86 = arith.constant 0 : index
    %195 = vector.load %arg14[%c0_85, %c0_86] : memref<1x1xf32, #tpu.memory_space<vmem>>, vector<1x1xf32>
    %196 = vector.broadcast %195 : vector<1x1xf32> to vector<2x1xf32>
    %197 = arith.addf %194, %196 : vector<2x1xf32>
    %c0_87 = arith.constant 0 : index
    %c0_88 = arith.constant 0 : index
    %198 = vector.load %arg15[%c0_87, %c0_88] : memref<2x1xf32, #tpu.memory_space<vmem>>, vector<2x1xf32>
    tpu.vector_store %arg15[%c0_87, %c0_88], %197 {strides = array<i32>} : memref<2x1xf32, #tpu.memory_space<vmem>>, vector<2x1xf32>,
    return
  }
  func.func @transform_0(%arg0: i32) -> (i32, i32, i32) {
    %c0_i32 = arith.constant 0 : i32
    %c0_i32_0 = arith.constant 0 : i32
    %c0_i32_1 = arith.constant 0 : i32
    return %arg0, %c0_i32, %c0_i32_0 : i32, i32, i32
  }
  func.func @transform_1(%arg0: i32) -> (i32, i32) {
    %c0_i32 = arith.constant 0 : i32
    %c0_i32_0 = arith.constant 0 : i32
    return %arg0, %c0_i32 : i32, i32
  }
  func.func @transform_2(%arg0: i32) -> (i32, i32, i32) {
    %c0_i32 = arith.constant 0 : i32
    %c0_i32_0 = arith.constant 0 : i32
    %c0_i32_1 = arith.constant 0 : i32
    %c0_i32_2 = arith.constant 0 : i32
    return %c0_i32, %c0_i32_0, %c0_i32_1 : i32, i32, i32
  }
  func.func @transform_3(%arg0: i32) -> i32 {
    %c0_i32 = arith.constant 0 : i32
    %c0_i32_0 = arith.constant 0 : i32
    return %c0_i32 : i32
  }
  func.func @transform_4(%arg0: i32) -> (i32, i32) {
    %c0_i32 = arith.constant 0 : i32
    %c0_i32_0 = arith.constant 0 : i32
    %c0_i32_1 = arith.constant 0 : i32
    return %c0_i32, %c0_i32_0 : i32, i32
  }
  func.func @transform_5(%arg0: i32) -> (i32, i32) {
    %c0_i32 = arith.constant 0 : i32
    %c0_i32_0 = arith.constant 0 : i32
    %c0_i32_1 = arith.constant 0 : i32
    return %c0_i32, %c0_i32_0 : i32, i32
  }
  func.func @transform_6(%arg0: i32) -> (i32, i32, i32) {
    %c0_i32 = arith.constant 0 : i32
    %c0_i32_0 = arith.constant 0 : i32
    %c0_i32_1 = arith.constant 0 : i32
    %c0_i32_2 = arith.constant 0 : i32
    return %c0_i32, %c0_i32_0, %c0_i32_1 : i32, i32, i32
  }
  func.func @transform_7(%arg0: i32) -> (i32, i32, i32) {
    %c0_i32 = arith.constant 0 : i32
    %c0_i32_0 = arith.constant 0 : i32
    %c0_i32_1 = arith.constant 0 : i32
    %c0_i32_2 = arith.constant 0 : i32
    return %c0_i32, %c0_i32_0, %c0_i32_1 : i32, i32, i32
  }
  func.func @transform_8(%arg0: i32) -> (i32, i32) {
    %c0_i32 = arith.constant 0 : i32
    %c0_i32_0 = arith.constant 0 : i32
    %c0_i32_1 = arith.constant 0 : i32
    return %c0_i32, %c0_i32_0 : i32, i32
  }
  func.func @transform_9(%arg0: i32) -> (i32, i32) {
    %c0_i32 = arith.constant 0 : i32
    %c0_i32_0 = arith.constant 0 : i32
    %c0_i32_1 = arith.constant 0 : i32
    return %c0_i32, %c0_i32_0 : i32, i32
  }
  func.func @transform_10(%arg0: i32) -> (i32, i32) {
    %c0_i32 = arith.constant 0 : i32
    %c0_i32_0 = arith.constant 0 : i32
    %c0_i32_1 = arith.constant 0 : i32
    return %c0_i32, %c0_i32_0 : i32, i32
  }
  func.func @transform_11(%arg0: i32) -> (i32, i32) {
    %c0_i32 = arith.constant 0 : i32
    %c0_i32_0 = arith.constant 0 : i32
    %c0_i32_1 = arith.constant 0 : i32
    return %c0_i32, %c0_i32_0 : i32, i32
  }
  func.func @transform_12(%arg0: i32) -> (i32, i32) {
    %c0_i32 = arith.constant 0 : i32
    %c0_i32_0 = arith.constant 0 : i32
    %c0_i32_1 = arith.constant 0 : i32
    return %c0_i32, %c0_i32_0 : i32, i32
  }
  func.func @transform_13(%arg0: i32) -> (i32, i32) {
    %c0_i32 = arith.constant 0 : i32
    %c0_i32_0 = arith.constant 0 : i32
    %c0_i32_1 = arith.constant 0 : i32
    return %c0_i32, %c0_i32_0 : i32, i32
  }
  func.func @transform_14(%arg0: i32) -> (i32, i32) {
    %c0_i32 = arith.constant 0 : i32
    %c0_i32_0 = arith.constant 0 : i32
    return %arg0, %c0_i32 : i32, i32
  }
}

</mosaic_0001>

<llo_original>
// kernel: qmodel_forward.1
$region0: #{qmodel_forward.1}
  #allocation0 [shape = 'u32[]', space=smem, size = 0x4, offset = 0x4, fixed_abs, tag = 'smem constant byte address 0x4 - core index']
  #allocation1 [shape = 'u32[72,128]{1,0:T(1,128)}', space=vmem, size = 0x9000, scoped, tag = 'internal scratch']
  #allocation2 [shape = 'f32[1,1]{1,0:T(1,128)S(1)}', space=vmem, size = 0x200, scoped, tag = 'scoped memory for qmodel_forward.1']
  %s0 = inlined_call_operand.vmem [shape: f32[2,10,10], index: 0, kind: input, shape index: {}]
  %s1 = inlined_call_operand.vmem [shape: f32[2,2], index: 1, kind: input, shape index: {}]
  %s2 = inlined_call_operand.vmem [shape: f32[1,1,10], index: 2, kind: input, shape index: {}]
  %s3 = inlined_call_operand.vmem [shape: f32[12], index: 3, kind: input, shape index: {}]
  %s4 = inlined_call_operand.vmem [shape: f32[10,63], index: 4, kind: input, shape index: {}]
  %s5 = inlined_call_operand.vmem [shape: f32[10,63], index: 5, kind: input, shape index: {}]
  %s6 = inlined_call_operand.vmem [shape: f32[1,10,63], index: 6, kind: input, shape index: {}]
  %s7 = inlined_call_operand.vmem [shape: f32[10,21,256], index: 7, kind: input, shape index: {}]
  %s8 = inlined_call_operand.vmem [shape: f32[2,256], index: 8, kind: input, shape index: {}]
  %s9 = inlined_call_operand.vmem [shape: f32[1,256], index: 9, kind: input, shape index: {}]
  %s10 = inlined_call_operand.vmem [shape: f32[256,128], index: 10, kind: input, shape index: {}]
  %s11 = inlined_call_operand.vmem [shape: f32[1,128], index: 11, kind: input, shape index: {}]
  %s12 = inlined_call_operand.vmem [shape: f32[1,128], index: 12, kind: input, shape index: {}]
  %s13 = inlined_call_operand.<no memory space> [shape: f32[1,1], index: 13, kind: input, shape index: {}]
  %s14 = inlined_call_operand.vmem [shape: f32[2,1], index: 14, kind: output, shape index: {}]
  %s15 = sld [smem:[#allocation0]]
  $region70: #{qmodel_forward.1} parent=0
    _
  %s17 = ssub.s32 1, %s15
  %s18 = scalar_select 0, %s17, %s15
  %v19 = vstv %s13
  %20 = vst [vmem:[#allocation2] sm:$0x1] %v19
  $region1: #{qmodel_forward.1} parent=0
    #allocation3 [shape = 'u8[512]{0}', space=smem, size = 0x200, scoped, tag = 'input window, operand 3, single buffered']
    #allocation4 [shape = 's32[1]{0}', space=sflag, size = 0x4, scoped, tag = 'scoped memory for qmodel_forward.1']
    %21 = vsyncpa [#allocation4], 0
    // Predicated region
    $region2: #{qmodel_forward.1} parent=1 // pred_check
      _
    $region3: #{qmodel_forward.1} parent=1 // pred_check_branch
      %23 = sbr.rel (0) target = $region5
    $region4: #{qmodel_forward.1} parent=1 // pred_region
      _
    $region5: #{qmodel_forward.1} parent=1 // pred_fallthru
      _
    // Predicated region
    $region6: #{qmodel_forward.1} parent=1 // pred_check
      _
    $region7: #{qmodel_forward.1} parent=1 // pred_check_branch
      %25 = sbr.rel (0) target = $region9
    $region8: #{qmodel_forward.1} parent=1 // pred_region
      _
    $region9: #{qmodel_forward.1} parent=1 // pred_fallthru
      _
    // Predicated region
    $region10: #{qmodel_forward.1} parent=1 // pred_check
      _
    $region11: #{qmodel_forward.1} parent=1 // pred_check_branch
      %27 = sbr.rel (0) target = $region13
    $region12: #{qmodel_forward.1} parent=1 // pred_region
      _
    $region13: #{qmodel_forward.1} parent=1 // pred_fallthru
      _
    // Predicated region
    $region14: #{qmodel_forward.1} parent=1 // pred_check
      _
    $region15: #{qmodel_forward.1} parent=1 // pred_check_branch
      %29 = sbr.rel (0) target = $region17
    $region16: #{qmodel_forward.1} parent=1 // pred_region
      %31 = vsyncadd [#allocation4], 0
      %s33 = sshll.u32 %s3, 4
      %s34 = int_to_ptr.vmem [resolvable:$true] %s33
      %36 = dma.vmem_to_smem %s34, 16, [#allocation3], [#allocation4]
    $region17: #{qmodel_forward.1} parent=1 // pred_fallthru
      _
    // Predicated region
    $region18: #{qmodel_forward.1} parent=1 // pred_check
      _
    $region19: #{qmodel_forward.1} parent=1 // pred_check_branch
      %38 = sbr.rel (0) target = $region21
    $region20: #{qmodel_forward.1} parent=1 // pred_region
      _
    $region21: #{qmodel_forward.1} parent=1 // pred_fallthru
      _
    // Predicated region
    $region22: #{qmodel_forward.1} parent=1 // pred_check
      _
    $region23: #{qmodel_forward.1} parent=1 // pred_check_branch
      %40 = sbr.rel (0) target = $region25
    $region24: #{qmodel_forward.1} parent=1 // pred_region
      _
    $region25: #{qmodel_forward.1} parent=1 // pred_fallthru
      _
    // Predicated region
    $region26: #{qmodel_forward.1} parent=1 // pred_check
      _
    $region27: #{qmodel_forward.1} parent=1 // pred_check_branch
      %42 = sbr.rel (0) target = $region29
    $region28: #{qmodel_forward.1} parent=1 // pred_region
      _
    $region29: #{qmodel_forward.1} parent=1 // pred_fallthru
      _
    // Predicated region
    $region30: #{qmodel_forward.1} parent=1 // pred_check
      _
    $region31: #{qmodel_forward.1} parent=1 // pred_check_branch
      %44 = sbr.rel (0) target = $region33
    $region32: #{qmodel_forward.1} parent=1 // pred_region
      _
    $region33: #{qmodel_forward.1} parent=1 // pred_fallthru
      _
    // Predicated region
    $region34: #{qmodel_forward.1} parent=1 // pred_check
      _
    $region35: #{qmodel_forward.1} parent=1 // pred_check_branch
      %46 = sbr.rel (0) target = $region37
    $region36: #{qmodel_forward.1} parent=1 // pred_region
      _
    $region37: #{qmodel_forward.1} parent=1 // pred_fallthru
      _
    // Predicated region
    $region38: #{qmodel_forward.1} parent=1 // pred_check
      _
    $region39: #{qmodel_forward.1} parent=1 // pred_check_branch
      %48 = sbr.rel (0) target = $region41
    $region40: #{qmodel_forward.1} parent=1 // pred_region
      _
    $region41: #{qmodel_forward.1} parent=1 // pred_fallthru
      _
    // Predicated region
    $region42: #{qmodel_forward.1} parent=1 // pred_check
      _
    $region43: #{qmodel_forward.1} parent=1 // pred_check_branch
      %50 = sbr.rel (0) target = $region45
    $region44: #{qmodel_forward.1} parent=1 // pred_region
      _
    $region45: #{qmodel_forward.1} parent=1 // pred_fallthru
      _
    // Predicated region
    $region46: #{qmodel_forward.1} parent=1 // pred_check
      _
    $region47: #{qmodel_forward.1} parent=1 // pred_check_branch
      %52 = sbr.rel (0) target = $region49
    $region48: #{qmodel_forward.1} parent=1 // pred_region
      _
    $region49: #{qmodel_forward.1} parent=1 // pred_fallthru
      _
    // Predicated region
    $region50: #{qmodel_forward.1} parent=1 // pred_check
      _
    $region51: #{qmodel_forward.1} parent=1 // pred_check_branch
      %54 = sbr.rel (0) target = $region53
    $region52: #{qmodel_forward.1} parent=1 // pred_region
      _
    $region53: #{qmodel_forward.1} parent=1 // pred_fallthru
      _
    // Predicated region
    $region54: #{qmodel_forward.1} parent=1 // pred_check
      _
    $region55: #{qmodel_forward.1} parent=1 // pred_check_branch
      %56 = sbr.rel (0) target = $region57
    $region56: #{qmodel_forward.1} parent=1 // pred_region
      _
    $region57: #{qmodel_forward.1} parent=1 // pred_fallthru
      _
    // Predicated region
    $region58: #{qmodel_forward.1} parent=1 // pred_check
      _
    $region59: #{qmodel_forward.1} parent=1 // pred_check_branch
      %58 = sbr.rel (0) target = $region61
    $region60: #{qmodel_forward.1} parent=1 // pred_region
      %60 = dma.done [#allocation4], 16
    $region61: #{qmodel_forward.1} parent=1 // pred_fallthru
      _
    %61 = sfence
    %v62 = vld [vmem:[%s0] sm:$0xff]
    %v63 = vld [vmem:[%s0 + $0x8] sm:$0x3]
    %v64 = vld [vmem:[%s0 + $0x10] sm:$0xff]
    %v65 = vld [vmem:[%s0 + $0x18] sm:$0x3]
    %v66 = vld [vmem:[%s2] sm:$0x1]
    %v68 = vperm.slane %v66, 0
    %v70 = vadd.f32 %v62, %v68
    %v71 = vadd.f32 %v63, %v68
    %v72 = vadd.f32 %v64, %v68
    %v73 = vadd.f32 %v65, %v68
    %s74 = sld [smem:[#allocation3]]
    %s75 = sld [smem:[#allocation3 + $0x2]]
    %s76 = sld [smem:[#allocation3 + $0x4]]
    %s77 = sld [smem:[#allocation3 + $0x6]]
    %s78 = sld [smem:[#allocation3 + $0x8]]
    %s79 = sld [smem:[#allocation3 + $0xa]]
    %v80 = vstv %s74
    %v81 = vmul.f32 %v70, %v80
    %v82 = vmul.f32 %v71, %v80
    %v83 = vmul.f32 %v72, %v80
    %v84 = vmul.f32 %v73, %v80
    %v85 = vstv %s75
    %v86 = vadd.f32 %v81, %v85
    %v87 = vadd.f32 %v82, %v85
    %v88 = vadd.f32 %v83, %v85
    %v89 = vadd.f32 %v84, %v85
    %v90 = vstv %s76
    %v91 = vmul.f32 %v70, %v90
    %v92 = vmul.f32 %v71, %v90
    %v93 = vmul.f32 %v72, %v90
    %v94 = vmul.f32 %v73, %v90
    %v95 = vstv %s77
    %v96 = vadd.f32 %v91, %v95
    %v97 = vadd.f32 %v92, %v95
    %v98 = vadd.f32 %v93, %v95
    %v99 = vadd.f32 %v94, %v95
    %v100 = vstv %s78
    %v101 = vmul.f32 %v70, %v100
    %v102 = vmul.f32 %v71, %v100
    %v103 = vmul.f32 %v72, %v100
    %v104 = vmul.f32 %v73, %v100
    %v105 = vstv %s79
    %v106 = vadd.f32 %v101, %v105
    %v107 = vadd.f32 %v102, %v105
    %v108 = vadd.f32 %v103, %v105
    %v109 = vadd.f32 %v104, %v105
    %v110 = vperm.slane %v86, 0
    %v111 = vlaneseq
    %v112 = vshrl.u32 %v111, 7
    %114 = vset.pattern.permute.xlu0 %v112
    %115 = vperm.xlu0 %114, %v110
    %v116 = vpop.permute.xlu0 %115
    %v117 = vlaneseq
    %v118 = vshrl.u32 %v117, 7
    %v119 = vadd.s32 %v118, 8
    %120 = vset.pattern.permute.xlu0 %v119
    %121 = vperm.xlu0 %120, %v110
    %v122 = vpop.permute.xlu0 %121
    %v123 = vperm.slane %v86, 1
    %v124 = vlaneseq
    %v125 = vshrl.u32 %v124, 7
    %127 = vset.pattern.permute.xlu0 %v125
    %128 = vperm.xlu0 %127, %v123
    %v129 = vpop.permute.xlu0 %128
    %v130 = vlaneseq
    %v131 = vshrl.u32 %v130, 7
    %v132 = vadd.s32 %v131, 8
    %133 = vset.pattern.permute.xlu0 %v132
    %134 = vperm.xlu0 %133, %v123
    %v135 = vpop.permute.xlu0 %134
    %v136 = vperm.slane %v86, 2
    %v137 = vlaneseq
    %v138 = vshrl.u32 %v137, 7
    %140 = vset.pattern.permute.xlu0 %v138
    %141 = vperm.xlu0 %140, %v136
    %v142 = vpop.permute.xlu0 %141
    %v143 = vlaneseq
    %v144 = vshrl.u32 %v143, 7
    %v145 = vadd.s32 %v144, 8
    %146 = vset.pattern.permute.xlu0 %v145
    %147 = vperm.xlu0 %146, %v136
    %v148 = vpop.permute.xlu0 %147
    %v149 = vperm.slane %v86, 3
    %v150 = vlaneseq
    %v151 = vshrl.u32 %v150, 7
    %153 = vset.pattern.permute.xlu0 %v151
    %154 = vperm.xlu0 %153, %v149
    %v155 = vpop.permute.xlu0 %154
    %v156 = vlaneseq
    %v157 = vshrl.u32 %v156, 7
    %v158 = vadd.s32 %v157, 8
    %159 = vset.pattern.permute.xlu0 %v158
    %160 = vperm.xlu0 %159, %v149
    %v161 = vpop.permute.xlu0 %160
    %v162 = vperm.slane %v86, 4
    %v163 = vlaneseq
    %v164 = vshrl.u32 %v163, 7
    %166 = vset.pattern.permute.xlu0 %v164
    %167 = vperm.xlu0 %166, %v162
    %v168 = vpop.permute.xlu0 %167
    %v169 = vlaneseq
    %v170 = vshrl.u32 %v169, 7
    %v171 = vadd.s32 %v170, 8
    %172 = vset.pattern.permute.xlu0 %v171
    %173 = vperm.xlu0 %172, %v162
    %v174 = vpop.permute.xlu0 %173
    %v175 = vperm.slane %v86, 5
    %v176 = vlaneseq
    %v177 = vshrl.u32 %v176, 7
    %179 = vset.pattern.permute.xlu0 %v177
    %180 = vperm.xlu0 %179, %v175
    %v181 = vpop.permute.xlu0 %180
    %v182 = vlaneseq
    %v183 = vshrl.u32 %v182, 7
    %v184 = vadd.s32 %v183, 8
    %185 = vset.pattern.permute.xlu0 %v184
    %186 = vperm.xlu0 %185, %v175
    %v187 = vpop.permute.xlu0 %186
    %v188 = vperm.slane %v86, 6
    %v189 = vlaneseq
    %v190 = vshrl.u32 %v189, 7
    %192 = vset.pattern.permute.xlu0 %v190
    %193 = vperm.xlu0 %192, %v188
    %v194 = vpop.permute.xlu0 %193
    %v195 = vlaneseq
    %v196 = vshrl.u32 %v195, 7
    %v197 = vadd.s32 %v196, 8
    %198 = vset.pattern.permute.xlu0 %v197
    %199 = vperm.xlu0 %198, %v188
    %v200 = vpop.permute.xlu0 %199
    %v201 = vperm.slane %v86, 7
    %v202 = vlaneseq
    %v203 = vshrl.u32 %v202, 7
    %205 = vset.pattern.permute.xlu0 %v203
    %206 = vperm.xlu0 %205, %v201
    %v207 = vpop.permute.xlu0 %206
    %v208 = vlaneseq
    %v209 = vshrl.u32 %v208, 7
    %v210 = vadd.s32 %v209, 8
    %211 = vset.pattern.permute.xlu0 %v210
    %212 = vperm.xlu0 %211, %v201
    %v213 = vpop.permute.xlu0 %212
    %v214 = vperm.slane %v87, 0
    %v215 = vlaneseq
    %v216 = vshrl.u32 %v215, 7
    %218 = vset.pattern.permute.xlu0 %v216
    %219 = vperm.xlu0 %218, %v214
    %v220 = vpop.permute.xlu0 %219
    %v221 = vlaneseq
    %v222 = vshrl.u32 %v221, 7
    %v223 = vadd.s32 %v222, 8
    %224 = vset.pattern.permute.xlu0 %v223
    %225 = vperm.xlu0 %224, %v214
    %v226 = vpop.permute.xlu0 %225
    %v227 = vperm.slane %v87, 1
    %v228 = vlaneseq
    %v229 = vshrl.u32 %v228, 7
    %231 = vset.pattern.permute.xlu0 %v229
    %232 = vperm.xlu0 %231, %v227
    %v233 = vpop.permute.xlu0 %232
    %v234 = vlaneseq
    %v235 = vshrl.u32 %v234, 7
    %v236 = vadd.s32 %v235, 8
    %237 = vset.pattern.permute.xlu0 %v236
    %238 = vperm.xlu0 %237, %v227
    %v239 = vpop.permute.xlu0 %238
    %v240 = vperm.slane %v88, 0
    %v241 = vlaneseq
    %v242 = vshrl.u32 %v241, 7
    %244 = vset.pattern.permute.xlu0 %v242
    %245 = vperm.xlu0 %244, %v240
    %v246 = vpop.permute.xlu0 %245
    %v247 = vlaneseq
    %v248 = vshrl.u32 %v247, 7
    %v249 = vadd.s32 %v248, 8
    %250 = vset.pattern.permute.xlu0 %v249
    %251 = vperm.xlu0 %250, %v240
    %v252 = vpop.permute.xlu0 %251
    %v253 = vperm.slane %v88, 1
    %v254 = vlaneseq
    %v255 = vshrl.u32 %v254, 7
    %257 = vset.pattern.permute.xlu0 %v255
    %258 = vperm.xlu0 %257, %v253
    %v259 = vpop.permute.xlu0 %258
    %v260 = vlaneseq
    %v261 = vshrl.u32 %v260, 7
    %v262 = vadd.s32 %v261, 8
    %263 = vset.pattern.permute.xlu0 %v262
    %264 = vperm.xlu0 %263, %v253
    %v265 = vpop.permute.xlu0 %264
    %v266 = vperm.slane %v88, 2
    %v267 = vlaneseq
    %v268 = vshrl.u32 %v267, 7
    %270 = vset.pattern.permute.xlu0 %v268
    %271 = vperm.xlu0 %270, %v266
    %v272 = vpop.permute.xlu0 %271
    %v273 = vlaneseq
    %v274 = vshrl.u32 %v273, 7
    %v275 = vadd.s32 %v274, 8
    %276 = vset.pattern.permute.xlu0 %v275
    %277 = vperm.xlu0 %276, %v266
    %v278 = vpop.permute.xlu0 %277
    %v279 = vperm.slane %v88, 3
    %v280 = vlaneseq
    %v281 = vshrl.u32 %v280, 7
    %283 = vset.pattern.permute.xlu0 %v281
    %284 = vperm.xlu0 %283, %v279
    %v285 = vpop.permute.xlu0 %284
    %v286 = vlaneseq
    %v287 = vshrl.u32 %v286, 7
    %v288 = vadd.s32 %v287, 8
    %289 = vset.pattern.permute.xlu0 %v288
    %290 = vperm.xlu0 %289, %v279
    %v291 = vpop.permute.xlu0 %290
    %v292 = vperm.slane %v88, 4
    %v293 = vlaneseq
    %v294 = vshrl.u32 %v293, 7
    %296 = vset.pattern.permute.xlu0 %v294
    %297 = vperm.xlu0 %296, %v292
    %v298 = vpop.permute.xlu0 %297
    %v299 = vlaneseq
    %v300 = vshrl.u32 %v299, 7
    %v301 = vadd.s32 %v300, 8
    %302 = vset.pattern.permute.xlu0 %v301
    %303 = vperm.xlu0 %302, %v292
    %v304 = vpop.permute.xlu0 %303
    %v305 = vperm.slane %v88, 5
    %v306 = vlaneseq
    %v307 = vshrl.u32 %v306, 7
    %309 = vset.pattern.permute.xlu0 %v307
    %310 = vperm.xlu0 %309, %v305
    %v311 = vpop.permute.xlu0 %310
    %v312 = vlaneseq
    %v313 = vshrl.u32 %v312, 7
    %v314 = vadd.s32 %v313, 8
    %315 = vset.pattern.permute.xlu0 %v314
    %316 = vperm.xlu0 %315, %v305
    %v317 = vpop.permute.xlu0 %316
    %v318 = vperm.slane %v88, 6
    %v319 = vlaneseq
    %v320 = vshrl.u32 %v319, 7
    %322 = vset.pattern.permute.xlu0 %v320
    %323 = vperm.xlu0 %322, %v318
    %v324 = vpop.permute.xlu0 %323
    %v325 = vlaneseq
    %v326 = vshrl.u32 %v325, 7
    %v327 = vadd.s32 %v326, 8
    %328 = vset.pattern.permute.xlu0 %v327
    %329 = vperm.xlu0 %328, %v318
    %v330 = vpop.permute.xlu0 %329
    %v331 = vperm.slane %v88, 7
    %v332 = vlaneseq
    %v333 = vshrl.u32 %v332, 7
    %335 = vset.pattern.permute.xlu0 %v333
    %336 = vperm.xlu0 %335, %v331
    %v337 = vpop.permute.xlu0 %336
    %v338 = vlaneseq
    %v339 = vshrl.u32 %v338, 7
    %v340 = vadd.s32 %v339, 8
    %341 = vset.pattern.permute.xlu0 %v340
    %342 = vperm.xlu0 %341, %v331
    %v343 = vpop.permute.xlu0 %342
    %v344 = vperm.slane %v89, 0
    %v345 = vlaneseq
    %v346 = vshrl.u32 %v345, 7
    %348 = vset.pattern.permute.xlu0 %v346
    %349 = vperm.xlu0 %348, %v344
    %v350 = vpop.permute.xlu0 %349
    %v351 = vlaneseq
    %v352 = vshrl.u32 %v351, 7
    %v353 = vadd.s32 %v352, 8
    %354 = vset.pattern.permute.xlu0 %v353
    %355 = vperm.xlu0 %354, %v344
    %v356 = vpop.permute.xlu0 %355
    %v357 = vperm.slane %v89, 1
    %v358 = vlaneseq
    %v359 = vshrl.u32 %v358, 7
    %361 = vset.pattern.permute.xlu0 %v359
    %362 = vperm.xlu0 %361, %v357
    %v363 = vpop.permute.xlu0 %362
    %v364 = vlaneseq
    %v365 = vshrl.u32 %v364, 7
    %v366 = vadd.s32 %v365, 8
    %367 = vset.pattern.permute.xlu0 %v366
    %368 = vperm.xlu0 %367, %v357
    %v369 = vpop.permute.xlu0 %368
    %v374 = vrot.slane %v96, 1
    %v375 = vrot.slane %v96, 2
    %v376 = vrot.slane %v96, 3
    %v377 = vrot.slane %v96, 4
    %v378 = vrot.slane %v96, 5
    %v379 = vrot.slane %v96, 6
    %v380 = vrot.slane %v96, 7
    %v381 = vrot.slane %v97, 1
    %v382 = vrot.slane %v98, 1
    %v383 = vrot.slane %v98, 2
    %v384 = vrot.slane %v98, 3
    %v385 = vrot.slane %v98, 4
    %v386 = vrot.slane %v98, 5
    %v387 = vrot.slane %v98, 6
    %v388 = vrot.slane %v98, 7
    %v389 = vrot.slane %v99, 1
    %v390 = vperm.slane %v96, 0
    %v391 = vperm.slane %v374, 0
    %v392 = vperm.slane %v375, 0
    %v393 = vperm.slane %v376, 0
    %v394 = vperm.slane %v377, 0
    %v395 = vperm.slane %v378, 0
    %v396 = vperm.slane %v379, 0
    %v397 = vperm.slane %v380, 0
    %v398 = vperm.slane %v97, 0
    %v399 = vperm.slane %v381, 0
    %v400 = vperm.slane %v98, 0
    %v401 = vperm.slane %v382, 0
    %v402 = vperm.slane %v383, 0
    %v403 = vperm.slane %v384, 0
    %v404 = vperm.slane %v385, 0
    %v405 = vperm.slane %v386, 0
    %v406 = vperm.slane %v387, 0
    %v407 = vperm.slane %v388, 0
    %v408 = vperm.slane %v99, 0
    %v409 = vperm.slane %v389, 0
    %v430 = vmul.f32 %v116, %v390
    %v431 = vmul.f32 %v122, %v390
    %v432 = vmul.f32 %v129, %v391
    %v433 = vmul.f32 %v135, %v391
    %v434 = vmul.f32 %v142, %v392
    %v435 = vmul.f32 %v148, %v392
    %v436 = vmul.f32 %v155, %v393
    %v437 = vmul.f32 %v161, %v393
    %v438 = vmul.f32 %v168, %v394
    %v439 = vmul.f32 %v174, %v394
    %v440 = vmul.f32 %v181, %v395
    %v441 = vmul.f32 %v187, %v395
    %v442 = vmul.f32 %v194, %v396
    %v443 = vmul.f32 %v200, %v396
    %v444 = vmul.f32 %v207, %v397
    %v445 = vmul.f32 %v213, %v397
    %v446 = vmul.f32 %v220, %v398
    %v447 = vmul.f32 %v226, %v398
    %v448 = vmul.f32 %v233, %v399
    %v449 = vmul.f32 %v239, %v399
    %v450 = vmul.f32 %v246, %v400
    %v451 = vmul.f32 %v252, %v400
    %v452 = vmul.f32 %v259, %v401
    %v453 = vmul.f32 %v265, %v401
    %v454 = vmul.f32 %v272, %v402
    %v455 = vmul.f32 %v278, %v402
    %v456 = vmul.f32 %v285, %v403
    %v457 = vmul.f32 %v291, %v403
    %v458 = vmul.f32 %v298, %v404
    %v459 = vmul.f32 %v304, %v404
    %v460 = vmul.f32 %v311, %v405
    %v461 = vmul.f32 %v317, %v405
    %v462 = vmul.f32 %v324, %v406
    %v463 = vmul.f32 %v330, %v406
    %v464 = vmul.f32 %v337, %v407
    %v465 = vmul.f32 %v343, %v407
    %v466 = vmul.f32 %v350, %v408
    %v467 = vmul.f32 %v356, %v408
    %v468 = vmul.f32 %v363, %v409
    %v469 = vmul.f32 %v369, %v409
    %vm470 = vcmask 80896
    %v471 = vsel %vm470, %v430, -inf
    %472 = vmax.xlane.f32.xlu0 %v471
    %v473 = vpop.xlane.xlu0 %472
    %vm474 = vcmask 74752
    %v475 = vsel %vm474, %v431, -inf
    %476 = vmax.xlane.f32.xlu0 %v475
    %v477 = vpop.xlane.xlu0 %476
    %v478 = vsel %vm470, %v432, -inf
    %479 = vmax.xlane.f32.xlu0 %v478
    %v480 = vpop.xlane.xlu0 %479
    %v481 = vsel %vm474, %v433, -inf
    %482 = vmax.xlane.f32.xlu0 %v481
    %v483 = vpop.xlane.xlu0 %482
    %v484 = vsel %vm470, %v434, -inf
    %485 = vmax.xlane.f32.xlu0 %v484
    %v486 = vpop.xlane.xlu0 %485
    %v487 = vsel %vm474, %v435, -inf
    %488 = vmax.xlane.f32.xlu0 %v487
    %v489 = vpop.xlane.xlu0 %488
    %v490 = vsel %vm470, %v436, -inf
    %491 = vmax.xlane.f32.xlu0 %v490
    %v492 = vpop.xlane.xlu0 %491
    %v493 = vsel %vm474, %v437, -inf
    %494 = vmax.xlane.f32.xlu0 %v493
    %v495 = vpop.xlane.xlu0 %494
    %v496 = vsel %vm470, %v438, -inf
    %497 = vmax.xlane.f32.xlu0 %v496
    %v498 = vpop.xlane.xlu0 %497
    %v499 = vsel %vm474, %v439, -inf
    %500 = vmax.xlane.f32.xlu0 %v499
    %v501 = vpop.xlane.xlu0 %500
    %v502 = vsel %vm470, %v440, -inf
    %503 = vmax.xlane.f32.xlu0 %v502
    %v504 = vpop.xlane.xlu0 %503
    %v505 = vsel %vm474, %v441, -inf
    %506 = vmax.xlane.f32.xlu0 %v505
    %v507 = vpop.xlane.xlu0 %506
    %v508 = vsel %vm470, %v442, -inf
    %509 = vmax.xlane.f32.xlu0 %v508
    %v510 = vpop.xlane.xlu0 %509
    %v511 = vsel %vm474, %v443, -inf
    %512 = vmax.xlane.f32.xlu0 %v511
    %v513 = vpop.xlane.xlu0 %512
    %v514 = vsel %vm470, %v444, -inf
    %515 = vmax.xlane.f32.xlu0 %v514
    %v516 = vpop.xlane.xlu0 %515
    %v517 = vsel %vm474, %v445, -inf
    %518 = vmax.xlane.f32.xlu0 %v517
    %v519 = vpop.xlane.xlu0 %518
    %v520 = vsel %vm470, %v446, -inf
    %521 = vmax.xlane.f32.xlu0 %v520
    %v522 = vpop.xlane.xlu0 %521
    %v523 = vsel %vm474, %v447, -inf
    %524 = vmax.xlane.f32.xlu0 %v523
    %v525 = vpop.xlane.xlu0 %524
    %v526 = vsel %vm470, %v448, -inf
    %527 = vmax.xlane.f32.xlu0 %v526
    %v528 = vpop.xlane.xlu0 %527
    %v529 = vsel %vm474, %v449, -inf
    %530 = vmax.xlane.f32.xlu0 %v529
    %v531 = vpop.xlane.xlu0 %530
    %v532 = vsel %vm470, %v450, -inf
    %533 = vmax.xlane.f32.xlu0 %v532
    %v534 = vpop.xlane.xlu0 %533
    %v535 = vsel %vm474, %v451, -inf
    %536 = vmax.xlane.f32.xlu0 %v535
    %v537 = vpop.xlane.xlu0 %536
    %v538 = vsel %vm470, %v452, -inf
    %539 = vmax.xlane.f32.xlu0 %v538
    %v540 = vpop.xlane.xlu0 %539
    %v541 = vsel %vm474, %v453, -inf
    %542 = vmax.xlane.f32.xlu0 %v541
    %v543 = vpop.xlane.xlu0 %542
    %v544 = vsel %vm470, %v454, -inf
    %545 = vmax.xlane.f32.xlu0 %v544
    %v546 = vpop.xlane.xlu0 %545
    %v547 = vsel %vm474, %v455, -inf
    %548 = vmax.xlane.f32.xlu0 %v547
    %v549 = vpop.xlane.xlu0 %548
    %v550 = vsel %vm470, %v456, -inf
    %551 = vmax.xlane.f32.xlu0 %v550
    %v552 = vpop.xlane.xlu0 %551
    %v553 = vsel %vm474, %v457, -inf
    %554 = vmax.xlane.f32.xlu0 %v553
    %v555 = vpop.xlane.xlu0 %554
    %v556 = vsel %vm470, %v458, -inf
    %557 = vmax.xlane.f32.xlu0 %v556
    %v558 = vpop.xlane.xlu0 %557
    %v559 = vsel %vm474, %v459, -inf
    %560 = vmax.xlane.f32.xlu0 %v559
    %v561 = vpop.xlane.xlu0 %560
    %v562 = vsel %vm470, %v460, -inf
    %563 = vmax.xlane.f32.xlu0 %v562
    %v564 = vpop.xlane.xlu0 %563
    %v565 = vsel %vm474, %v461, -inf
    %566 = vmax.xlane.f32.xlu0 %v565
    %v567 = vpop.xlane.xlu0 %566
    %v568 = vsel %vm470, %v462, -inf
    %569 = vmax.xlane.f32.xlu0 %v568
    %v570 = vpop.xlane.xlu0 %569
    %v571 = vsel %vm474, %v463, -inf
    %572 = vmax.xlane.f32.xlu0 %v571
    %v573 = vpop.xlane.xlu0 %572
    %v574 = vsel %vm470, %v464, -inf
    %575 = vmax.xlane.f32.xlu0 %v574
    %v576 = vpop.xlane.xlu0 %575
    %v577 = vsel %vm474, %v465, -inf
    %578 = vmax.xlane.f32.xlu0 %v577
    %v579 = vpop.xlane.xlu0 %578
    %v580 = vsel %vm470, %v466, -inf
    %581 = vmax.xlane.f32.xlu0 %v580
    %v582 = vpop.xlane.xlu0 %581
    %v583 = vsel %vm474, %v467, -inf
    %584 = vmax.xlane.f32.xlu0 %v583
    %v585 = vpop.xlane.xlu0 %584
    %v586 = vsel %vm470, %v468, -inf
    %587 = vmax.xlane.f32.xlu0 %v586
    %v588 = vpop.xlane.xlu0 %587
    %v589 = vsel %vm474, %v469, -inf
    %590 = vmax.xlane.f32.xlu0 %v589
    %v591 = vpop.xlane.xlu0 %590
    %v592 = vsub.f32 %v430, %v473
    %v593 = vsub.f32 %v431, %v477
    %v594 = vsub.f32 %v432, %v480
    %v595 = vsub.f32 %v433, %v483
    %v596 = vsub.f32 %v434, %v486
    %v597 = vsub.f32 %v435, %v489
    %v598 = vsub.f32 %v436, %v492
    %v599 = vsub.f32 %v437, %v495
    %v600 = vsub.f32 %v438, %v498
    %v601 = vsub.f32 %v439, %v501
    %v602 = vsub.f32 %v440, %v504
    %v603 = vsub.f32 %v441, %v507
    %v604 = vsub.f32 %v442, %v510
    %v605 = vsub.f32 %v443, %v513
    %v606 = vsub.f32 %v444, %v516
    %v607 = vsub.f32 %v445, %v519
    %v608 = vsub.f32 %v446, %v522
    %v609 = vsub.f32 %v447, %v525
    %v610 = vsub.f32 %v448, %v528
    %v611 = vsub.f32 %v449, %v531
    %v612 = vsub.f32 %v450, %v534
    %v613 = vsub.f32 %v451, %v537
    %v614 = vsub.f32 %v452, %v540
    %v615 = vsub.f32 %v453, %v543
    %v616 = vsub.f32 %v454, %v546
    %v617 = vsub.f32 %v455, %v549
    %v618 = vsub.f32 %v456, %v552
    %v619 = vsub.f32 %v457, %v555
    %v620 = vsub.f32 %v458, %v558
    %v621 = vsub.f32 %v459, %v561
    %v622 = vsub.f32 %v460, %v564
    %v623 = vsub.f32 %v461, %v567
    %v624 = vsub.f32 %v462, %v570
    %v625 = vsub.f32 %v463, %v573
    %v626 = vsub.f32 %v464, %v576
    %v627 = vsub.f32 %v465, %v579
    %v628 = vsub.f32 %v466, %v582
    %v629 = vsub.f32 %v467, %v585
    %v630 = vsub.f32 %v468, %v588
    %v631 = vsub.f32 %v469, %v591
    %v632 = vmul.f32 %v592, 1.442695
    %v633 = vpow.pop %v632
    %v634 = vmul.f32 %v593, 1.442695
    %v635 = vpow.pop %v634
    %v636 = vmul.f32 %v594, 1.442695
    %v637 = vpow.pop %v636
    %v638 = vmul.f32 %v595, 1.442695
    %v639 = vpow.pop %v638
    %v640 = vmul.f32 %v596, 1.442695
    %v641 = vpow.pop %v640
    %v642 = vmul.f32 %v597, 1.442695
    %v643 = vpow.pop %v642
    %v644 = vmul.f32 %v598, 1.442695
    %v645 = vpow.pop %v644
    %v646 = vmul.f32 %v599, 1.442695
    %v647 = vpow.pop %v646
    %v648 = vmul.f32 %v600, 1.442695
    %v649 = vpow.pop %v648
    %v650 = vmul.f32 %v601, 1.442695
    %v651 = vpow.pop %v650
    %v652 = vmul.f32 %v602, 1.442695
    %v653 = vpow.pop %v652
    %v654 = vmul.f32 %v603, 1.442695
    %v655 = vpow.pop %v654
    %v656 = vmul.f32 %v604, 1.442695
    %v657 = vpow.pop %v656
    %v658 = vmul.f32 %v605, 1.442695
    %v659 = vpow.pop %v658
    %v660 = vmul.f32 %v606, 1.442695
    %v661 = vpow.pop %v660
    %v662 = vmul.f32 %v607, 1.442695
    %v663 = vpow.pop %v662
    %v664 = vmul.f32 %v608, 1.442695
    %v665 = vpow.pop %v664
    %v666 = vmul.f32 %v609, 1.442695
    %v667 = vpow.pop %v666
    %v668 = vmul.f32 %v610, 1.442695
    %v669 = vpow.pop %v668
    %v670 = vmul.f32 %v611, 1.442695
    %v671 = vpow.pop %v670
    %v672 = vmul.f32 %v612, 1.442695
    %v673 = vpow.pop %v672
    %v674 = vmul.f32 %v613, 1.442695
    %v675 = vpow.pop %v674
    %v676 = vmul.f32 %v614, 1.442695
    %v677 = vpow.pop %v676
    %v678 = vmul.f32 %v615, 1.442695
    %v679 = vpow.pop %v678
    %v680 = vmul.f32 %v616, 1.442695
    %v681 = vpow.pop %v680
    %v682 = vmul.f32 %v617, 1.442695
    %v683 = vpow.pop %v682
    %v684 = vmul.f32 %v618, 1.442695
    %v685 = vpow.pop %v684
    %v686 = vmul.f32 %v619, 1.442695
    %v687 = vpow.pop %v686
    %v688 = vmul.f32 %v620, 1.442695
    %v689 = vpow.pop %v688
    %v690 = vmul.f32 %v621, 1.442695
    %v691 = vpow.pop %v690
    %v692 = vmul.f32 %v622, 1.442695
    %v693 = vpow.pop %v692
    %v694 = vmul.f32 %v623, 1.442695
    %v695 = vpow.pop %v694
    %v696 = vmul.f32 %v624, 1.442695
    %v697 = vpow.pop %v696
    %v698 = vmul.f32 %v625, 1.442695
    %v699 = vpow.pop %v698
    %v700 = vmul.f32 %v626, 1.442695
    %v701 = vpow.pop %v700
    %v702 = vmul.f32 %v627, 1.442695
    %v703 = vpow.pop %v702
    %v704 = vmul.f32 %v628, 1.442695
    %v705 = vpow.pop %v704
    %v706 = vmul.f32 %v629, 1.442695
    %v707 = vpow.pop %v706
    %v708 = vmul.f32 %v630, 1.442695
    %v709 = vpow.pop %v708
    %v710 = vmul.f32 %v631, 1.442695
    %v711 = vpow.pop %v710
    %v712 = vsel %vm470, %v633, 0.0
    %713 = vadd.xlane.f32.xlu0 %v712
    %v714 = vpop.xlane.xlu0 %713
    %v715 = vsel %vm474, %v635, 0.0
    %716 = vadd.xlane.f32.xlu0 %v715
    %v717 = vpop.xlane.xlu0 %716
    %v718 = vsel %vm470, %v637, 0.0
    %719 = vadd.xlane.f32.xlu0 %v718
    %v720 = vpop.xlane.xlu0 %719
    %v721 = vsel %vm474, %v639, 0.0
    %722 = vadd.xlane.f32.xlu0 %v721
    %v723 = vpop.xlane.xlu0 %722
    %v724 = vsel %vm470, %v641, 0.0
    %725 = vadd.xlane.f32.xlu0 %v724
    %v726 = vpop.xlane.xlu0 %725
    %v727 = vsel %vm474, %v643, 0.0
    %728 = vadd.xlane.f32.xlu0 %v727
    %v729 = vpop.xlane.xlu0 %728
    %v730 = vsel %vm470, %v645, 0.0
    %731 = vadd.xlane.f32.xlu0 %v730
    %v732 = vpop.xlane.xlu0 %731
    %v733 = vsel %vm474, %v647, 0.0
    %734 = vadd.xlane.f32.xlu0 %v733
    %v735 = vpop.xlane.xlu0 %734
    %v736 = vsel %vm470, %v649, 0.0
    %737 = vadd.xlane.f32.xlu0 %v736
    %v738 = vpop.xlane.xlu0 %737
    %v739 = vsel %vm474, %v651, 0.0
    %740 = vadd.xlane.f32.xlu0 %v739
    %v741 = vpop.xlane.xlu0 %740
    %v742 = vsel %vm470, %v653, 0.0
    %743 = vadd.xlane.f32.xlu0 %v742
    %v744 = vpop.xlane.xlu0 %743
    %v745 = vsel %vm474, %v655, 0.0
    %746 = vadd.xlane.f32.xlu0 %v745
    %v747 = vpop.xlane.xlu0 %746
    %v748 = vsel %vm470, %v657, 0.0
    %749 = vadd.xlane.f32.xlu0 %v748
    %v750 = vpop.xlane.xlu0 %749
    %v751 = vsel %vm474, %v659, 0.0
    %752 = vadd.xlane.f32.xlu0 %v751
    %v753 = vpop.xlane.xlu0 %752
    %v754 = vsel %vm470, %v661, 0.0
    %755 = vadd.xlane.f32.xlu0 %v754
    %v756 = vpop.xlane.xlu0 %755
    %v757 = vsel %vm474, %v663, 0.0
    %758 = vadd.xlane.f32.xlu0 %v757
    %v759 = vpop.xlane.xlu0 %758
    %v760 = vsel %vm470, %v665, 0.0
    %761 = vadd.xlane.f32.xlu0 %v760
    %v762 = vpop.xlane.xlu0 %761
    %v763 = vsel %vm474, %v667, 0.0
    %764 = vadd.xlane.f32.xlu0 %v763
    %v765 = vpop.xlane.xlu0 %764
    %v766 = vsel %vm470, %v669, 0.0
    %767 = vadd.xlane.f32.xlu0 %v766
    %v768 = vpop.xlane.xlu0 %767
    %v769 = vsel %vm474, %v671, 0.0
    %770 = vadd.xlane.f32.xlu0 %v769
    %v771 = vpop.xlane.xlu0 %770
    %v772 = vsel %vm470, %v673, 0.0
    %773 = vadd.xlane.f32.xlu0 %v772
    %v774 = vpop.xlane.xlu0 %773
    %v775 = vsel %vm474, %v675, 0.0
    %776 = vadd.xlane.f32.xlu0 %v775
    %v777 = vpop.xlane.xlu0 %776
    %v778 = vsel %vm470, %v677, 0.0
    %779 = vadd.xlane.f32.xlu0 %v778
    %v780 = vpop.xlane.xlu0 %779
    %v781 = vsel %vm474, %v679, 0.0
    %782 = vadd.xlane.f32.xlu0 %v781
    %v783 = vpop.xlane.xlu0 %782
    %v784 = vsel %vm470, %v681, 0.0
    %785 = vadd.xlane.f32.xlu0 %v784
    %v786 = vpop.xlane.xlu0 %785
    %v787 = vsel %vm474, %v683, 0.0
    %788 = vadd.xlane.f32.xlu0 %v787
    %v789 = vpop.xlane.xlu0 %788
    %v790 = vsel %vm470, %v685, 0.0
    %791 = vadd.xlane.f32.xlu0 %v790
    %v792 = vpop.xlane.xlu0 %791
    %v793 = vsel %vm474, %v687, 0.0
    %794 = vadd.xlane.f32.xlu0 %v793
    %v795 = vpop.xlane.xlu0 %794
    %v796 = vsel %vm470, %v689, 0.0
    %797 = vadd.xlane.f32.xlu0 %v796
    %v798 = vpop.xlane.xlu0 %797
    %v799 = vsel %vm474, %v691, 0.0
    %800 = vadd.xlane.f32.xlu0 %v799
    %v801 = vpop.xlane.xlu0 %800
    %v802 = vsel %vm470, %v693, 0.0
    %803 = vadd.xlane.f32.xlu0 %v802
    %v804 = vpop.xlane.xlu0 %803
    %v805 = vsel %vm474, %v695, 0.0
    %806 = vadd.xlane.f32.xlu0 %v805
    %v807 = vpop.xlane.xlu0 %806
    %v808 = vsel %vm470, %v697, 0.0
    %809 = vadd.xlane.f32.xlu0 %v808
    %v810 = vpop.xlane.xlu0 %809
    %v811 = vsel %vm474, %v699, 0.0
    %812 = vadd.xlane.f32.xlu0 %v811
    %v813 = vpop.xlane.xlu0 %812
    %v814 = vsel %vm470, %v701, 0.0
    %815 = vadd.xlane.f32.xlu0 %v814
    %v816 = vpop.xlane.xlu0 %815
    %v817 = vsel %vm474, %v703, 0.0
    %818 = vadd.xlane.f32.xlu0 %v817
    %v819 = vpop.xlane.xlu0 %818
    %v820 = vsel %vm470, %v705, 0.0
    %821 = vadd.xlane.f32.xlu0 %v820
    %v822 = vpop.xlane.xlu0 %821
    %v823 = vsel %vm474, %v707, 0.0
    %824 = vadd.xlane.f32.xlu0 %v823
    %v825 = vpop.xlane.xlu0 %824
    %v826 = vsel %vm470, %v709, 0.0
    %827 = vadd.xlane.f32.xlu0 %v826
    %v828 = vpop.xlane.xlu0 %827
    %v829 = vsel %vm474, %v711, 0.0
    %830 = vadd.xlane.f32.xlu0 %v829
    %v831 = vpop.xlane.xlu0 %830
    %v832 = vrcp.pop %v714
    %v833 = vrcp.pop %v717
    %v834 = vrcp.pop %v720
    %v835 = vrcp.pop %v723
    %v836 = vrcp.pop %v726
    %v837 = vrcp.pop %v729
    %v838 = vrcp.pop %v732
    %v839 = vrcp.pop %v735
    %v840 = vrcp.pop %v738
    %v841 = vrcp.pop %v741
    %v842 = vrcp.pop %v744
    %v843 = vrcp.pop %v747
    %v844 = vrcp.pop %v750
    %v845 = vrcp.pop %v753
    %v846 = vrcp.pop %v756
    %v847 = vrcp.pop %v759
    %v848 = vrcp.pop %v762
    %v849 = vrcp.pop %v765
    %v850 = vrcp.pop %v768
    %v851 = vrcp.pop %v771
    %v852 = vrcp.pop %v774
    %v853 = vrcp.pop %v777
    %v854 = vrcp.pop %v780
    %v855 = vrcp.pop %v783
    %v856 = vrcp.pop %v786
    %v857 = vrcp.pop %v789
    %v858 = vrcp.pop %v792
    %v859 = vrcp.pop %v795
    %v860 = vrcp.pop %v798
    %v861 = vrcp.pop %v801
    %v862 = vrcp.pop %v804
    %v863 = vrcp.pop %v807
    %v864 = vrcp.pop %v810
    %v865 = vrcp.pop %v813
    %v866 = vrcp.pop %v816
    %v867 = vrcp.pop %v819
    %v868 = vrcp.pop %v822
    %v869 = vrcp.pop %v825
    %v870 = vrcp.pop %v828
    %v871 = vrcp.pop %v831
    %v872 = vmul.f32 %v633, %v832
    %v873 = vmul.f32 %v635, %v833
    %v874 = vmul.f32 %v637, %v834
    %v875 = vmul.f32 %v639, %v835
    %v876 = vmul.f32 %v641, %v836
    %v877 = vmul.f32 %v643, %v837
    %v878 = vmul.f32 %v645, %v838
    %v879 = vmul.f32 %v647, %v839
    %v880 = vmul.f32 %v649, %v840
    %v881 = vmul.f32 %v651, %v841
    %v882 = vmul.f32 %v653, %v842
    %v883 = vmul.f32 %v655, %v843
    %v884 = vmul.f32 %v657, %v844
    %v885 = vmul.f32 %v659, %v845
    %v886 = vmul.f32 %v661, %v846
    %v887 = vmul.f32 %v663, %v847
    %v888 = vmul.f32 %v665, %v848
    %v889 = vmul.f32 %v667, %v849
    %v890 = vmul.f32 %v669, %v850
    %v891 = vmul.f32 %v671, %v851
    %v892 = vmul.f32 %v673, %v852
    %v893 = vmul.f32 %v675, %v853
    %v894 = vmul.f32 %v677, %v854
    %v895 = vmul.f32 %v679, %v855
    %v896 = vmul.f32 %v681, %v856
    %v897 = vmul.f32 %v683, %v857
    %v898 = vmul.f32 %v685, %v858
    %v899 = vmul.f32 %v687, %v859
    %v900 = vmul.f32 %v689, %v860
    %v901 = vmul.f32 %v691, %v861
    %v902 = vmul.f32 %v693, %v862
    %v903 = vmul.f32 %v695, %v863
    %v904 = vmul.f32 %v697, %v864
    %v905 = vmul.f32 %v699, %v865
    %v906 = vmul.f32 %v701, %v866
    %v907 = vmul.f32 %v703, %v867
    %v908 = vmul.f32 %v705, %v868
    %v909 = vmul.f32 %v707, %v869
    %v910 = vmul.f32 %v709, %v870
    %v911 = vmul.f32 %v711, %v871
    %v916 = vrot.slane %v106, 1
    %v917 = vrot.slane %v106, 2
    %v918 = vrot.slane %v106, 3
    %v919 = vrot.slane %v106, 4
    %v920 = vrot.slane %v106, 5
    %v921 = vrot.slane %v106, 6
    %v922 = vrot.slane %v106, 7
    %v923 = vrot.slane %v107, 1
    %v924 = vrot.slane %v108, 1
    %v925 = vrot.slane %v108, 2
    %v926 = vrot.slane %v108, 3
    %v927 = vrot.slane %v108, 4
    %v928 = vrot.slane %v108, 5
    %v929 = vrot.slane %v108, 6
    %v930 = vrot.slane %v108, 7
    %v931 = vrot.slane %v109, 1
    %v932 = vperm.slane %v106, 0
    %v933 = vperm.slane %v916, 0
    %v934 = vperm.slane %v917, 0
    %v935 = vperm.slane %v918, 0
    %v936 = vperm.slane %v919, 0
    %v937 = vperm.slane %v920, 0
    %v938 = vperm.slane %v921, 0
    %v939 = vperm.slane %v922, 0
    %v940 = vperm.slane %v107, 0
    %v941 = vperm.slane %v923, 0
    %v942 = vperm.slane %v108, 0
    %v943 = vperm.slane %v924, 0
    %v944 = vperm.slane %v925, 0
    %v945 = vperm.slane %v926, 0
    %v946 = vperm.slane %v927, 0
    %v947 = vperm.slane %v928, 0
    %v948 = vperm.slane %v929, 0
    %v949 = vperm.slane %v930, 0
    %v950 = vperm.slane %v109, 0
    %v951 = vperm.slane %v931, 0
    %v972 = vmul.f32 %v872, %v932
    %v973 = vmul.f32 %v873, %v932
    %v974 = vmul.f32 %v874, %v933
    %v975 = vmul.f32 %v875, %v933
    %v976 = vmul.f32 %v876, %v934
    %v977 = vmul.f32 %v877, %v934
    %v978 = vmul.f32 %v878, %v935
    %v979 = vmul.f32 %v879, %v935
    %v980 = vmul.f32 %v880, %v936
    %v981 = vmul.f32 %v881, %v936
    %v982 = vmul.f32 %v882, %v937
    %v983 = vmul.f32 %v883, %v937
    %v984 = vmul.f32 %v884, %v938
    %v985 = vmul.f32 %v885, %v938
    %v986 = vmul.f32 %v886, %v939
    %v987 = vmul.f32 %v887, %v939
    %v988 = vmul.f32 %v888, %v940
    %v989 = vmul.f32 %v889, %v940
    %v990 = vmul.f32 %v890, %v941
    %v991 = vmul.f32 %v891, %v941
    %v992 = vmul.f32 %v892, %v942
    %v993 = vmul.f32 %v893, %v942
    %v994 = vmul.f32 %v894, %v943
    %v995 = vmul.f32 %v895, %v943
    %v996 = vmul.f32 %v896, %v944
    %v997 = vmul.f32 %v897, %v944
    %v998 = vmul.f32 %v898, %v945
    %v999 = vmul.f32 %v899, %v945
    %v1000 = vmul.f32 %v900, %v946
    %v1001 = vmul.f32 %v901, %v946
    %v1002 = vmul.f32 %v902, %v947
    %v1003 = vmul.f32 %v903, %v947
    %v1004 = vmul.f32 %v904, %v948
    %v1005 = vmul.f32 %v905, %v948
    %v1006 = vmul.f32 %v906, %v949
    %v1007 = vmul.f32 %v907, %v949
    %v1008 = vmul.f32 %v908, %v950
    %v1009 = vmul.f32 %v909, %v950
    %v1010 = vmul.f32 %v910, %v951
    %v1011 = vmul.f32 %v911, %v951
    %v1012 = vsel %vm470, %v972, 0.0
    %1013 = vadd.xlane.f32.xlu0 %v1012
    %v1014 = vpop.xlane.xlu0 %1013
    %v1015 = vsel %vm474, %v973, 0.0
    %1016 = vadd.xlane.f32.xlu0 %v1015
    %v1017 = vpop.xlane.xlu0 %1016
    %v1018 = vsel %vm470, %v974, 0.0
    %1019 = vadd.xlane.f32.xlu0 %v1018
    %v1020 = vpop.xlane.xlu0 %1019
    %v1021 = vsel %vm474, %v975, 0.0
    %1022 = vadd.xlane.f32.xlu0 %v1021
    %v1023 = vpop.xlane.xlu0 %1022
    %v1024 = vsel %vm470, %v976, 0.0
    %1025 = vadd.xlane.f32.xlu0 %v1024
    %v1026 = vpop.xlane.xlu0 %1025
    %v1027 = vsel %vm474, %v977, 0.0
    %1028 = vadd.xlane.f32.xlu0 %v1027
    %v1029 = vpop.xlane.xlu0 %1028
    %v1030 = vsel %vm470, %v978, 0.0
    %1031 = vadd.xlane.f32.xlu0 %v1030
    %v1032 = vpop.xlane.xlu0 %1031
    %v1033 = vsel %vm474, %v979, 0.0
    %1034 = vadd.xlane.f32.xlu0 %v1033
    %v1035 = vpop.xlane.xlu0 %1034
    %v1036 = vsel %vm470, %v980, 0.0
    %1037 = vadd.xlane.f32.xlu0 %v1036
    %v1038 = vpop.xlane.xlu0 %1037
    %v1039 = vsel %vm474, %v981, 0.0
    %1040 = vadd.xlane.f32.xlu0 %v1039
    %v1041 = vpop.xlane.xlu0 %1040
    %v1042 = vsel %vm470, %v982, 0.0
    %1043 = vadd.xlane.f32.xlu0 %v1042
    %v1044 = vpop.xlane.xlu0 %1043
    %v1045 = vsel %vm474, %v983, 0.0
    %1046 = vadd.xlane.f32.xlu0 %v1045
    %v1047 = vpop.xlane.xlu0 %1046
    %v1048 = vsel %vm470, %v984, 0.0
    %1049 = vadd.xlane.f32.xlu0 %v1048
    %v1050 = vpop.xlane.xlu0 %1049
    %v1051 = vsel %vm474, %v985, 0.0
    %1052 = vadd.xlane.f32.xlu0 %v1051
    %v1053 = vpop.xlane.xlu0 %1052
    %v1054 = vsel %vm470, %v986, 0.0
    %1055 = vadd.xlane.f32.xlu0 %v1054
    %v1056 = vpop.xlane.xlu0 %1055
    %v1057 = vsel %vm474, %v987, 0.0
    %1058 = vadd.xlane.f32.xlu0 %v1057
    %v1059 = vpop.xlane.xlu0 %1058
    %v1060 = vsel %vm470, %v988, 0.0
    %1061 = vadd.xlane.f32.xlu0 %v1060
    %v1062 = vpop.xlane.xlu0 %1061
    %v1063 = vsel %vm474, %v989, 0.0
    %1064 = vadd.xlane.f32.xlu0 %v1063
    %v1065 = vpop.xlane.xlu0 %1064
    %v1066 = vsel %vm470, %v990, 0.0
    %1067 = vadd.xlane.f32.xlu0 %v1066
    %v1068 = vpop.xlane.xlu0 %1067
    %v1069 = vsel %vm474, %v991, 0.0
    %1070 = vadd.xlane.f32.xlu0 %v1069
    %v1071 = vpop.xlane.xlu0 %1070
    %v1072 = vsel %vm470, %v992, 0.0
    %1073 = vadd.xlane.f32.xlu0 %v1072
    %v1074 = vpop.xlane.xlu0 %1073
    %v1075 = vsel %vm474, %v993, 0.0
    %1076 = vadd.xlane.f32.xlu0 %v1075
    %v1077 = vpop.xlane.xlu0 %1076
    %v1078 = vsel %vm470, %v994, 0.0
    %1079 = vadd.xlane.f32.xlu0 %v1078
    %v1080 = vpop.xlane.xlu0 %1079
    %v1081 = vsel %vm474, %v995, 0.0
    %1082 = vadd.xlane.f32.xlu0 %v1081
    %v1083 = vpop.xlane.xlu0 %1082
    %v1084 = vsel %vm470, %v996, 0.0
    %1085 = vadd.xlane.f32.xlu0 %v1084
    %v1086 = vpop.xlane.xlu0 %1085
    %v1087 = vsel %vm474, %v997, 0.0
    %1088 = vadd.xlane.f32.xlu0 %v1087
    %v1089 = vpop.xlane.xlu0 %1088
    %v1090 = vsel %vm470, %v998, 0.0
    %1091 = vadd.xlane.f32.xlu0 %v1090
    %v1092 = vpop.xlane.xlu0 %1091
    %v1093 = vsel %vm474, %v999, 0.0
    %1094 = vadd.xlane.f32.xlu0 %v1093
    %v1095 = vpop.xlane.xlu0 %1094
    %v1096 = vsel %vm470, %v1000, 0.0
    %1097 = vadd.xlane.f32.xlu0 %v1096
    %v1098 = vpop.xlane.xlu0 %1097
    %v1099 = vsel %vm474, %v1001, 0.0
    %1100 = vadd.xlane.f32.xlu0 %v1099
    %v1101 = vpop.xlane.xlu0 %1100
    %v1102 = vsel %vm470, %v1002, 0.0
    %1103 = vadd.xlane.f32.xlu0 %v1102
    %v1104 = vpop.xlane.xlu0 %1103
    %v1105 = vsel %vm474, %v1003, 0.0
    %1106 = vadd.xlane.f32.xlu0 %v1105
    %v1107 = vpop.xlane.xlu0 %1106
    %v1108 = vsel %vm470, %v1004, 0.0
    %1109 = vadd.xlane.f32.xlu0 %v1108
    %v1110 = vpop.xlane.xlu0 %1109
    %v1111 = vsel %vm474, %v1005, 0.0
    %1112 = vadd.xlane.f32.xlu0 %v1111
    %v1113 = vpop.xlane.xlu0 %1112
    %v1114 = vsel %vm470, %v1006, 0.0
    %1115 = vadd.xlane.f32.xlu0 %v1114
    %v1116 = vpop.xlane.xlu0 %1115
    %v1117 = vsel %vm474, %v1007, 0.0
    %1118 = vadd.xlane.f32.xlu0 %v1117
    %v1119 = vpop.xlane.xlu0 %1118
    %v1120 = vsel %vm470, %v1008, 0.0
    %1121 = vadd.xlane.f32.xlu0 %v1120
    %v1122 = vpop.xlane.xlu0 %1121
    %v1123 = vsel %vm474, %v1009, 0.0
    %1124 = vadd.xlane.f32.xlu0 %v1123
    %v1125 = vpop.xlane.xlu0 %1124
    %v1126 = vsel %vm470, %v1010, 0.0
    %1127 = vadd.xlane.f32.xlu0 %v1126
    %v1128 = vpop.xlane.xlu0 %1127
    %v1129 = vsel %vm474, %v1011, 0.0
    %1130 = vadd.xlane.f32.xlu0 %v1129
    %v1131 = vpop.xlane.xlu0 %1130
    %s1132 = sld [smem:[#allocation3 + $0x1]]
    %s1133 = sld [smem:[#allocation3 + $0x3]]
    %s1134 = sld [smem:[#allocation3 + $0x5]]
    %s1135 = sld [smem:[#allocation3 + $0x7]]
    %s1136 = sld [smem:[#allocation3 + $0x9]]
    %s1137 = sld [smem:[#allocation3 + $0xb]]
    %v1138 = vstv %s1132
    %v1139 = vmul.f32 %v70, %v1138
    %v1140 = vmul.f32 %v71, %v1138
    %v1141 = vmul.f32 %v72, %v1138
    %v1142 = vmul.f32 %v73, %v1138
    %v1143 = vstv %s1133
    %v1144 = vadd.f32 %v1139, %v1143
    %v1145 = vadd.f32 %v1140, %v1143
    %v1146 = vadd.f32 %v1141, %v1143
    %v1147 = vadd.f32 %v1142, %v1143
    %v1148 = vstv %s1134
    %v1149 = vmul.f32 %v70, %v1148
    %v1150 = vmul.f32 %v71, %v1148
    %v1151 = vmul.f32 %v72, %v1148
    %v1152 = vmul.f32 %v73, %v1148
    %v1153 = vstv %s1135
    %v1154 = vadd.f32 %v1149, %v1153
    %v1155 = vadd.f32 %v1150, %v1153
    %v1156 = vadd.f32 %v1151, %v1153
    %v1157 = vadd.f32 %v1152, %v1153
    %v1158 = vstv %s1136
    %v1159 = vmul.f32 %v70, %v1158
    %v1160 = vmul.f32 %v71, %v1158
    %v1161 = vmul.f32 %v72, %v1158
    %v1162 = vmul.f32 %v73, %v1158
    %v1163 = vstv %s1137
    %v1164 = vadd.f32 %v1159, %v1163
    %v1165 = vadd.f32 %v1160, %v1163
    %v1166 = vadd.f32 %v1161, %v1163
    %v1167 = vadd.f32 %v1162, %v1163
    %v1168 = vperm.slane %v1144, 0
    %v1169 = vlaneseq
    %v1170 = vshrl.u32 %v1169, 7
    %1172 = vset.pattern.permute.xlu0 %v1170
    %1173 = vperm.xlu0 %1172, %v1168
    %v1174 = vpop.permute.xlu0 %1173
    %v1175 = vlaneseq
    %v1176 = vshrl.u32 %v1175, 7
    %v1177 = vadd.s32 %v1176, 8
    %1178 = vset.pattern.permute.xlu0 %v1177
    %1179 = vperm.xlu0 %1178, %v1168
    %v1180 = vpop.permute.xlu0 %1179
    %v1181 = vperm.slane %v1144, 1
    %v1182 = vlaneseq
    %v1183 = vshrl.u32 %v1182, 7
    %1185 = vset.pattern.permute.xlu0 %v1183
    %1186 = vperm.xlu0 %1185, %v1181
    %v1187 = vpop.permute.xlu0 %1186
    %v1188 = vlaneseq
    %v1189 = vshrl.u32 %v1188, 7
    %v1190 = vadd.s32 %v1189, 8
    %1191 = vset.pattern.permute.xlu0 %v1190
    %1192 = vperm.xlu0 %1191, %v1181
    %v1193 = vpop.permute.xlu0 %1192
    %v1194 = vperm.slane %v1144, 2
    %v1195 = vlaneseq
    %v1196 = vshrl.u32 %v1195, 7
    %1198 = vset.pattern.permute.xlu0 %v1196
    %1199 = vperm.xlu0 %1198, %v1194
    %v1200 = vpop.permute.xlu0 %1199
    %v1201 = vlaneseq
    %v1202 = vshrl.u32 %v1201, 7
    %v1203 = vadd.s32 %v1202, 8
    %1204 = vset.pattern.permute.xlu0 %v1203
    %1205 = vperm.xlu0 %1204, %v1194
    %v1206 = vpop.permute.xlu0 %1205
    %v1207 = vperm.slane %v1144, 3
    %v1208 = vlaneseq
    %v1209 = vshrl.u32 %v1208, 7
    %1211 = vset.pattern.permute.xlu0 %v1209
    %1212 = vperm.xlu0 %1211, %v1207
    %v1213 = vpop.permute.xlu0 %1212
    %v1214 = vlaneseq
    %v1215 = vshrl.u32 %v1214, 7
    %v1216 = vadd.s32 %v1215, 8
    %1217 = vset.pattern.permute.xlu0 %v1216
    %1218 = vperm.xlu0 %1217, %v1207
    %v1219 = vpop.permute.xlu0 %1218
    %v1220 = vperm.slane %v1144, 4
    %v1221 = vlaneseq
    %v1222 = vshrl.u32 %v1221, 7
    %1224 = vset.pattern.permute.xlu0 %v1222
    %1225 = vperm.xlu0 %1224, %v1220
    %v1226 = vpop.permute.xlu0 %1225
    %v1227 = vlaneseq
    %v1228 = vshrl.u32 %v1227, 7
    %v1229 = vadd.s32 %v1228, 8
    %1230 = vset.pattern.permute.xlu0 %v1229
    %1231 = vperm.xlu0 %1230, %v1220
    %v1232 = vpop.permute.xlu0 %1231
    %v1233 = vperm.slane %v1144, 5
    %v1234 = vlaneseq
    %v1235 = vshrl.u32 %v1234, 7
    %1237 = vset.pattern.permute.xlu0 %v1235
    %1238 = vperm.xlu0 %1237, %v1233
    %v1239 = vpop.permute.xlu0 %1238
    %v1240 = vlaneseq
    %v1241 = vshrl.u32 %v1240, 7
    %v1242 = vadd.s32 %v1241, 8
    %1243 = vset.pattern.permute.xlu0 %v1242
    %1244 = vperm.xlu0 %1243, %v1233
    %v1245 = vpop.permute.xlu0 %1244
    %v1246 = vperm.slane %v1144, 6
    %v1247 = vlaneseq
    %v1248 = vshrl.u32 %v1247, 7
    %1250 = vset.pattern.permute.xlu0 %v1248
    %1251 = vperm.xlu0 %1250, %v1246
    %v1252 = vpop.permute.xlu0 %1251
    %v1253 = vlaneseq
    %v1254 = vshrl.u32 %v1253, 7
    %v1255 = vadd.s32 %v1254, 8
    %1256 = vset.pattern.permute.xlu0 %v1255
    %1257 = vperm.xlu0 %1256, %v1246
    %v1258 = vpop.permute.xlu0 %1257
    %v1259 = vperm.slane %v1144, 7
    %v1260 = vlaneseq
    %v1261 = vshrl.u32 %v1260, 7
    %1263 = vset.pattern.permute.xlu0 %v1261
    %1264 = vperm.xlu0 %1263, %v1259
    %v1265 = vpop.permute.xlu0 %1264
    %v1266 = vlaneseq
    %v1267 = vshrl.u32 %v1266, 7
    %v1268 = vadd.s32 %v1267, 8
    %1269 = vset.pattern.permute.xlu0 %v1268
    %1270 = vperm.xlu0 %1269, %v1259
    %v1271 = vpop.permute.xlu0 %1270
    %v1272 = vperm.slane %v1145, 0
    %v1273 = vlaneseq
    %v1274 = vshrl.u32 %v1273, 7
    %1276 = vset.pattern.permute.xlu0 %v1274
    %1277 = vperm.xlu0 %1276, %v1272
    %v1278 = vpop.permute.xlu0 %1277
    %v1279 = vlaneseq
    %v1280 = vshrl.u32 %v1279, 7
    %v1281 = vadd.s32 %v1280, 8
    %1282 = vset.pattern.permute.xlu0 %v1281
    %1283 = vperm.xlu0 %1282, %v1272
    %v1284 = vpop.permute.xlu0 %1283
    %v1285 = vperm.slane %v1145, 1
    %v1286 = vlaneseq
    %v1287 = vshrl.u32 %v1286, 7
    %1289 = vset.pattern.permute.xlu0 %v1287
    %1290 = vperm.xlu0 %1289, %v1285
    %v1291 = vpop.permute.xlu0 %1290
    %v1292 = vlaneseq
    %v1293 = vshrl.u32 %v1292, 7
    %v1294 = vadd.s32 %v1293, 8
    %1295 = vset.pattern.permute.xlu0 %v1294
    %1296 = vperm.xlu0 %1295, %v1285
    %v1297 = vpop.permute.xlu0 %1296
    %v1298 = vperm.slane %v1146, 0
    %v1299 = vlaneseq
    %v1300 = vshrl.u32 %v1299, 7
    %1302 = vset.pattern.permute.xlu0 %v1300
    %1303 = vperm.xlu0 %1302, %v1298
    %v1304 = vpop.permute.xlu0 %1303
    %v1305 = vlaneseq
    %v1306 = vshrl.u32 %v1305, 7
    %v1307 = vadd.s32 %v1306, 8
    %1308 = vset.pattern.permute.xlu0 %v1307
    %1309 = vperm.xlu0 %1308, %v1298
    %v1310 = vpop.permute.xlu0 %1309
    %v1311 = vperm.slane %v1146, 1
    %v1312 = vlaneseq
    %v1313 = vshrl.u32 %v1312, 7
    %1315 = vset.pattern.permute.xlu0 %v1313
    %1316 = vperm.xlu0 %1315, %v1311
    %v1317 = vpop.permute.xlu0 %1316
    %v1318 = vlaneseq
    %v1319 = vshrl.u32 %v1318, 7
    %v1320 = vadd.s32 %v1319, 8
    %1321 = vset.pattern.permute.xlu0 %v1320
    %1322 = vperm.xlu0 %1321, %v1311
    %v1323 = vpop.permute.xlu0 %1322
    %v1324 = vperm.slane %v1146, 2
    %v1325 = vlaneseq
    %v1326 = vshrl.u32 %v1325, 7
    %1328 = vset.pattern.permute.xlu0 %v1326
    %1329 = vperm.xlu0 %1328, %v1324
    %v1330 = vpop.permute.xlu0 %1329
    %v1331 = vlaneseq
    %v1332 = vshrl.u32 %v1331, 7
    %v1333 = vadd.s32 %v1332, 8
    %1334 = vset.pattern.permute.xlu0 %v1333
    %1335 = vperm.xlu0 %1334, %v1324
    %v1336 = vpop.permute.xlu0 %1335
    %v1337 = vperm.slane %v1146, 3
    %v1338 = vlaneseq
    %v1339 = vshrl.u32 %v1338, 7
    %1341 = vset.pattern.permute.xlu0 %v1339
    %1342 = vperm.xlu0 %1341, %v1337
    %v1343 = vpop.permute.xlu0 %1342
    %v1344 = vlaneseq
    %v1345 = vshrl.u32 %v1344, 7
    %v1346 = vadd.s32 %v1345, 8
    %1347 = vset.pattern.permute.xlu0 %v1346
    %1348 = vperm.xlu0 %1347, %v1337
    %v1349 = vpop.permute.xlu0 %1348
    %v1350 = vperm.slane %v1146, 4
    %v1351 = vlaneseq
    %v1352 = vshrl.u32 %v1351, 7
    %1354 = vset.pattern.permute.xlu0 %v1352
    %1355 = vperm.xlu0 %1354, %v1350
    %v1356 = vpop.permute.xlu0 %1355
    %v1357 = vlaneseq
    %v1358 = vshrl.u32 %v1357, 7
    %v1359 = vadd.s32 %v1358, 8
    %1360 = vset.pattern.permute.xlu0 %v1359
    %1361 = vperm.xlu0 %1360, %v1350
    %v1362 = vpop.permute.xlu0 %1361
    %v1363 = vperm.slane %v1146, 5
    %v1364 = vlaneseq
    %v1365 = vshrl.u32 %v1364, 7
    %1367 = vset.pattern.permute.xlu0 %v1365
    %1368 = vperm.xlu0 %1367, %v1363
    %v1369 = vpop.permute.xlu0 %1368
    %v1370 = vlaneseq
    %v1371 = vshrl.u32 %v1370, 7
    %v1372 = vadd.s32 %v1371, 8
    %1373 = vset.pattern.permute.xlu0 %v1372
    %1374 = vperm.xlu0 %1373, %v1363
    %v1375 = vpop.permute.xlu0 %1374
    %v1376 = vperm.slane %v1146, 6
    %v1377 = vlaneseq
    %v1378 = vshrl.u32 %v1377, 7
    %1380 = vset.pattern.permute.xlu0 %v1378
    %1381 = vperm.xlu0 %1380, %v1376
    %v1382 = vpop.permute.xlu0 %1381
    %v1383 = vlaneseq
    %v1384 = vshrl.u32 %v1383, 7
    %v1385 = vadd.s32 %v1384, 8
    %1386 = vset.pattern.permute.xlu0 %v1385
    %1387 = vperm.xlu0 %1386, %v1376
    %v1388 = vpop.permute.xlu0 %1387
    %v1389 = vperm.slane %v1146, 7
    %v1390 = vlaneseq
    %v1391 = vshrl.u32 %v1390, 7
    %1393 = vset.pattern.permute.xlu0 %v1391
    %1394 = vperm.xlu0 %1393, %v1389
    %v1395 = vpop.permute.xlu0 %1394
    %v1396 = vlaneseq
    %v1397 = vshrl.u32 %v1396, 7
    %v1398 = vadd.s32 %v1397, 8
    %1399 = vset.pattern.permute.xlu0 %v1398
    %1400 = vperm.xlu0 %1399, %v1389
    %v1401 = vpop.permute.xlu0 %1400
    %v1402 = vperm.slane %v1147, 0
    %v1403 = vlaneseq
    %v1404 = vshrl.u32 %v1403, 7
    %1406 = vset.pattern.permute.xlu0 %v1404
    %1407 = vperm.xlu0 %1406, %v1402
    %v1408 = vpop.permute.xlu0 %1407
    %v1409 = vlaneseq
    %v1410 = vshrl.u32 %v1409, 7
    %v1411 = vadd.s32 %v1410, 8
    %1412 = vset.pattern.permute.xlu0 %v1411
    %1413 = vperm.xlu0 %1412, %v1402
    %v1414 = vpop.permute.xlu0 %1413
    %v1415 = vperm.slane %v1147, 1
    %v1416 = vlaneseq
    %v1417 = vshrl.u32 %v1416, 7
    %1419 = vset.pattern.permute.xlu0 %v1417
    %1420 = vperm.xlu0 %1419, %v1415
    %v1421 = vpop.permute.xlu0 %1420
    %v1422 = vlaneseq
    %v1423 = vshrl.u32 %v1422, 7
    %v1424 = vadd.s32 %v1423, 8
    %1425 = vset.pattern.permute.xlu0 %v1424
    %1426 = vperm.xlu0 %1425, %v1415
    %v1427 = vpop.permute.xlu0 %1426
    %v1432 = vrot.slane %v1154, 1
    %v1433 = vrot.slane %v1154, 2
    %v1434 = vrot.slane %v1154, 3
    %v1435 = vrot.slane %v1154, 4
    %v1436 = vrot.slane %v1154, 5
    %v1437 = vrot.slane %v1154, 6
    %v1438 = vrot.slane %v1154, 7
    %v1439 = vrot.slane %v1155, 1
    %v1440 = vrot.slane %v1156, 1
    %v1441 = vrot.slane %v1156, 2
    %v1442 = vrot.slane %v1156, 3
    %v1443 = vrot.slane %v1156, 4
    %v1444 = vrot.slane %v1156, 5
    %v1445 = vrot.slane %v1156, 6
    %v1446 = vrot.slane %v1156, 7
    %v1447 = vrot.slane %v1157, 1
    %v1448 = vperm.slane %v1154, 0
    %v1449 = vperm.slane %v1432, 0
    %v1450 = vperm.slane %v1433, 0
    %v1451 = vperm.slane %v1434, 0
    %v1452 = vperm.slane %v1435, 0
    %v1453 = vperm.slane %v1436, 0
    %v1454 = vperm.slane %v1437, 0
    %v1455 = vperm.slane %v1438, 0
    %v1456 = vperm.slane %v1155, 0
    %v1457 = vperm.slane %v1439, 0
    %v1458 = vperm.slane %v1156, 0
    %v1459 = vperm.slane %v1440, 0
    %v1460 = vperm.slane %v1441, 0
    %v1461 = vperm.slane %v1442, 0
    %v1462 = vperm.slane %v1443, 0
    %v1463 = vperm.slane %v1444, 0
    %v1464 = vperm.slane %v1445, 0
    %v1465 = vperm.slane %v1446, 0
    %v1466 = vperm.slane %v1157, 0
    %v1467 = vperm.slane %v1447, 0
    %v1488 = vmul.f32 %v1174, %v1448
    %v1489 = vmul.f32 %v1180, %v1448
    %v1490 = vmul.f32 %v1187, %v1449
    %v1491 = vmul.f32 %v1193, %v1449
    %v1492 = vmul.f32 %v1200, %v1450
    %v1493 = vmul.f32 %v1206, %v1450
    %v1494 = vmul.f32 %v1213, %v1451
    %v1495 = vmul.f32 %v1219, %v1451
    %v1496 = vmul.f32 %v1226, %v1452
    %v1497 = vmul.f32 %v1232, %v1452
    %v1498 = vmul.f32 %v1239, %v1453
    %v1499 = vmul.f32 %v1245, %v1453
    %v1500 = vmul.f32 %v1252, %v1454
    %v1501 = vmul.f32 %v1258, %v1454
    %v1502 = vmul.f32 %v1265, %v1455
    %v1503 = vmul.f32 %v1271, %v1455
    %v1504 = vmul.f32 %v1278, %v1456
    %v1505 = vmul.f32 %v1284, %v1456
    %v1506 = vmul.f32 %v1291, %v1457
    %v1507 = vmul.f32 %v1297, %v1457
    %v1508 = vmul.f32 %v1304, %v1458
    %v1509 = vmul.f32 %v1310, %v1458
    %v1510 = vmul.f32 %v1317, %v1459
    %v1511 = vmul.f32 %v1323, %v1459
    %v1512 = vmul.f32 %v1330, %v1460
    %v1513 = vmul.f32 %v1336, %v1460
    %v1514 = vmul.f32 %v1343, %v1461
    %v1515 = vmul.f32 %v1349, %v1461
    %v1516 = vmul.f32 %v1356, %v1462
    %v1517 = vmul.f32 %v1362, %v1462
    %v1518 = vmul.f32 %v1369, %v1463
    %v1519 = vmul.f32 %v1375, %v1463
    %v1520 = vmul.f32 %v1382, %v1464
    %v1521 = vmul.f32 %v1388, %v1464
    %v1522 = vmul.f32 %v1395, %v1465
    %v1523 = vmul.f32 %v1401, %v1465
    %v1524 = vmul.f32 %v1408, %v1466
    %v1525 = vmul.f32 %v1414, %v1466
    %v1526 = vmul.f32 %v1421, %v1467
    %v1527 = vmul.f32 %v1427, %v1467
    %v1528 = vsel %vm470, %v1488, -inf
    %1529 = vmax.xlane.f32.xlu0 %v1528
    %v1530 = vpop.xlane.xlu0 %1529
    %v1531 = vsel %vm474, %v1489, -inf
    %1532 = vmax.xlane.f32.xlu0 %v1531
    %v1533 = vpop.xlane.xlu0 %1532
    %v1534 = vsel %vm470, %v1490, -inf
    %1535 = vmax.xlane.f32.xlu0 %v1534
    %v1536 = vpop.xlane.xlu0 %1535
    %v1537 = vsel %vm474, %v1491, -inf
    %1538 = vmax.xlane.f32.xlu0 %v1537
    %v1539 = vpop.xlane.xlu0 %1538
    %v1540 = vsel %vm470, %v1492, -inf
    %1541 = vmax.xlane.f32.xlu0 %v1540
    %v1542 = vpop.xlane.xlu0 %1541
    %v1543 = vsel %vm474, %v1493, -inf
    %1544 = vmax.xlane.f32.xlu0 %v1543
    %v1545 = vpop.xlane.xlu0 %1544
    %v1546 = vsel %vm470, %v1494, -inf
    %1547 = vmax.xlane.f32.xlu0 %v1546
    %v1548 = vpop.xlane.xlu0 %1547
    %v1549 = vsel %vm474, %v1495, -inf
    %1550 = vmax.xlane.f32.xlu0 %v1549
    %v1551 = vpop.xlane.xlu0 %1550
    %v1552 = vsel %vm470, %v1496, -inf
    %1553 = vmax.xlane.f32.xlu0 %v1552
    %v1554 = vpop.xlane.xlu0 %1553
    %v1555 = vsel %vm474, %v1497, -inf
    %1556 = vmax.xlane.f32.xlu0 %v1555
    %v1557 = vpop.xlane.xlu0 %1556
    %v1558 = vsel %vm470, %v1498, -inf
    %1559 = vmax.xlane.f32.xlu0 %v1558
    %v1560 = vpop.xlane.xlu0 %1559
    %v1561 = vsel %vm474, %v1499, -inf
    %1562 = vmax.xlane.f32.xlu0 %v1561
    %v1563 = vpop.xlane.xlu0 %1562
    %v1564 = vsel %vm470, %v1500, -inf
    %1565 = vmax.xlane.f32.xlu0 %v1564
    %v1566 = vpop.xlane.xlu0 %1565
    %v1567 = vsel %vm474, %v1501, -inf
    %1568 = vmax.xlane.f32.xlu0 %v1567
    %v1569 = vpop.xlane.xlu0 %1568
    %v1570 = vsel %vm470, %v1502, -inf
    %1571 = vmax.xlane.f32.xlu0 %v1570
    %v1572 = vpop.xlane.xlu0 %1571
    %v1573 = vsel %vm474, %v1503, -inf
    %1574 = vmax.xlane.f32.xlu0 %v1573
    %v1575 = vpop.xlane.xlu0 %1574
    %v1576 = vsel %vm470, %v1504, -inf
    %1577 = vmax.xlane.f32.xlu0 %v1576
    %v1578 = vpop.xlane.xlu0 %1577
    %v1579 = vsel %vm474, %v1505, -inf
    %1580 = vmax.xlane.f32.xlu0 %v1579
    %v1581 = vpop.xlane.xlu0 %1580
    %v1582 = vsel %vm470, %v1506, -inf
    %1583 = vmax.xlane.f32.xlu0 %v1582
    %v1584 = vpop.xlane.xlu0 %1583
    %v1585 = vsel %vm474, %v1507, -inf
    %1586 = vmax.xlane.f32.xlu0 %v1585
    %v1587 = vpop.xlane.xlu0 %1586
    %v1588 = vsel %vm470, %v1508, -inf
    %1589 = vmax.xlane.f32.xlu0 %v1588
    %v1590 = vpop.xlane.xlu0 %1589
    %v1591 = vsel %vm474, %v1509, -inf
    %1592 = vmax.xlane.f32.xlu0 %v1591
    %v1593 = vpop.xlane.xlu0 %1592
    %v1594 = vsel %vm470, %v1510, -inf
    %1595 = vmax.xlane.f32.xlu0 %v1594
    %v1596 = vpop.xlane.xlu0 %1595
    %v1597 = vsel %vm474, %v1511, -inf
    %1598 = vmax.xlane.f32.xlu0 %v1597
    %v1599 = vpop.xlane.xlu0 %1598
    %v1600 = vsel %vm470, %v1512, -inf
    %1601 = vmax.xlane.f32.xlu0 %v1600
    %v1602 = vpop.xlane.xlu0 %1601
    %v1603 = vsel %vm474, %v1513, -inf
    %1604 = vmax.xlane.f32.xlu0 %v1603
    %v1605 = vpop.xlane.xlu0 %1604
    %v1606 = vsel %vm470, %v1514, -inf
    %1607 = vmax.xlane.f32.xlu0 %v1606
    %v1608 = vpop.xlane.xlu0 %1607
    %v1609 = vsel %vm474, %v1515, -inf
    %1610 = vmax.xlane.f32.xlu0 %v1609
    %v1611 = vpop.xlane.xlu0 %1610
    %v1612 = vsel %vm470, %v1516, -inf
    %1613 = vmax.xlane.f32.xlu0 %v1612
    %v1614 = vpop.xlane.xlu0 %1613
    %v1615 = vsel %vm474, %v1517, -inf
    %1616 = vmax.xlane.f32.xlu0 %v1615
    %v1617 = vpop.xlane.xlu0 %1616
    %v1618 = vsel %vm470, %v1518, -inf
    %1619 = vmax.xlane.f32.xlu0 %v1618
    %v1620 = vpop.xlane.xlu0 %1619
    %v1621 = vsel %vm474, %v1519, -inf
    %1622 = vmax.xlane.f32.xlu0 %v1621
    %v1623 = vpop.xlane.xlu0 %1622
    %v1624 = vsel %vm470, %v1520, -inf
    %1625 = vmax.xlane.f32.xlu0 %v1624
    %v1626 = vpop.xlane.xlu0 %1625
    %v1627 = vsel %vm474, %v1521, -inf
    %1628 = vmax.xlane.f32.xlu0 %v1627
    %v1629 = vpop.xlane.xlu0 %1628
    %v1630 = vsel %vm470, %v1522, -inf
    %1631 = vmax.xlane.f32.xlu0 %v1630
    %v1632 = vpop.xlane.xlu0 %1631
    %v1633 = vsel %vm474, %v1523, -inf
    %1634 = vmax.xlane.f32.xlu0 %v1633
    %v1635 = vpop.xlane.xlu0 %1634
    %v1636 = vsel %vm470, %v1524, -inf
    %1637 = vmax.xlane.f32.xlu0 %v1636
    %v1638 = vpop.xlane.xlu0 %1637
    %v1639 = vsel %vm474, %v1525, -inf
    %1640 = vmax.xlane.f32.xlu0 %v1639
    %v1641 = vpop.xlane.xlu0 %1640
    %v1642 = vsel %vm470, %v1526, -inf
    %1643 = vmax.xlane.f32.xlu0 %v1642
    %v1644 = vpop.xlane.xlu0 %1643
    %v1645 = vsel %vm474, %v1527, -inf
    %1646 = vmax.xlane.f32.xlu0 %v1645
    %v1647 = vpop.xlane.xlu0 %1646
    %v1648 = vsub.f32 %v1488, %v1530
    %v1649 = vsub.f32 %v1489, %v1533
    %v1650 = vsub.f32 %v1490, %v1536
    %v1651 = vsub.f32 %v1491, %v1539
    %v1652 = vsub.f32 %v1492, %v1542
    %v1653 = vsub.f32 %v1493, %v1545
    %v1654 = vsub.f32 %v1494, %v1548
    %v1655 = vsub.f32 %v1495, %v1551
    %v1656 = vsub.f32 %v1496, %v1554
    %v1657 = vsub.f32 %v1497, %v1557
    %v1658 = vsub.f32 %v1498, %v1560
    %v1659 = vsub.f32 %v1499, %v1563
    %v1660 = vsub.f32 %v1500, %v1566
    %v1661 = vsub.f32 %v1501, %v1569
    %v1662 = vsub.f32 %v1502, %v1572
    %v1663 = vsub.f32 %v1503, %v1575
    %v1664 = vsub.f32 %v1504, %v1578
    %v1665 = vsub.f32 %v1505, %v1581
    %v1666 = vsub.f32 %v1506, %v1584
    %v1667 = vsub.f32 %v1507, %v1587
    %v1668 = vsub.f32 %v1508, %v1590
    %v1669 = vsub.f32 %v1509, %v1593
    %v1670 = vsub.f32 %v1510, %v1596
    %v1671 = vsub.f32 %v1511, %v1599
    %v1672 = vsub.f32 %v1512, %v1602
    %v1673 = vsub.f32 %v1513, %v1605
    %v1674 = vsub.f32 %v1514, %v1608
    %v1675 = vsub.f32 %v1515, %v1611
    %v1676 = vsub.f32 %v1516, %v1614
    %v1677 = vsub.f32 %v1517, %v1617
    %v1678 = vsub.f32 %v1518, %v1620
    %v1679 = vsub.f32 %v1519, %v1623
    %v1680 = vsub.f32 %v1520, %v1626
    %v1681 = vsub.f32 %v1521, %v1629
    %v1682 = vsub.f32 %v1522, %v1632
    %v1683 = vsub.f32 %v1523, %v1635
    %v1684 = vsub.f32 %v1524, %v1638
    %v1685 = vsub.f32 %v1525, %v1641
    %v1686 = vsub.f32 %v1526, %v1644
    %v1687 = vsub.f32 %v1527, %v1647
    %v1688 = vmul.f32 %v1648, 1.442695
    %v1689 = vpow.pop %v1688
    %v1690 = vmul.f32 %v1649, 1.442695
    %v1691 = vpow.pop %v1690
    %v1692 = vmul.f32 %v1650, 1.442695
    %v1693 = vpow.pop %v1692
    %v1694 = vmul.f32 %v1651, 1.442695
    %v1695 = vpow.pop %v1694
    %v1696 = vmul.f32 %v1652, 1.442695
    %v1697 = vpow.pop %v1696
    %v1698 = vmul.f32 %v1653, 1.442695
    %v1699 = vpow.pop %v1698
    %v1700 = vmul.f32 %v1654, 1.442695
    %v1701 = vpow.pop %v1700
    %v1702 = vmul.f32 %v1655, 1.442695
    %v1703 = vpow.pop %v1702
    %v1704 = vmul.f32 %v1656, 1.442695
    %v1705 = vpow.pop %v1704
    %v1706 = vmul.f32 %v1657, 1.442695
    %v1707 = vpow.pop %v1706
    %v1708 = vmul.f32 %v1658, 1.442695
    %v1709 = vpow.pop %v1708
    %v1710 = vmul.f32 %v1659, 1.442695
    %v1711 = vpow.pop %v1710
    %v1712 = vmul.f32 %v1660, 1.442695
    %v1713 = vpow.pop %v1712
    %v1714 = vmul.f32 %v1661, 1.442695
    %v1715 = vpow.pop %v1714
    %v1716 = vmul.f32 %v1662, 1.442695
    %v1717 = vpow.pop %v1716
    %v1718 = vmul.f32 %v1663, 1.442695
    %v1719 = vpow.pop %v1718
    %v1720 = vmul.f32 %v1664, 1.442695
    %v1721 = vpow.pop %v1720
    %v1722 = vmul.f32 %v1665, 1.442695
    %v1723 = vpow.pop %v1722
    %v1724 = vmul.f32 %v1666, 1.442695
    %v1725 = vpow.pop %v1724
    %v1726 = vmul.f32 %v1667, 1.442695
    %v1727 = vpow.pop %v1726
    %v1728 = vmul.f32 %v1668, 1.442695
    %v1729 = vpow.pop %v1728
    %v1730 = vmul.f32 %v1669, 1.442695
    %v1731 = vpow.pop %v1730
    %v1732 = vmul.f32 %v1670, 1.442695
    %v1733 = vpow.pop %v1732
    %v1734 = vmul.f32 %v1671, 1.442695
    %v1735 = vpow.pop %v1734
    %v1736 = vmul.f32 %v1672, 1.442695
    %v1737 = vpow.pop %v1736
    %v1738 = vmul.f32 %v1673, 1.442695
    %v1739 = vpow.pop %v1738
    %v1740 = vmul.f32 %v1674, 1.442695
    %v1741 = vpow.pop %v1740
    %v1742 = vmul.f32 %v1675, 1.442695
    %v1743 = vpow.pop %v1742
    %v1744 = vmul.f32 %v1676, 1.442695
    %v1745 = vpow.pop %v1744
    %v1746 = vmul.f32 %v1677, 1.442695
    %v1747 = vpow.pop %v1746
    %v1748 = vmul.f32 %v1678, 1.442695
    %v1749 = vpow.pop %v1748
    %v1750 = vmul.f32 %v1679, 1.442695
    %v1751 = vpow.pop %v1750
    %v1752 = vmul.f32 %v1680, 1.442695
    %v1753 = vpow.pop %v1752
    %v1754 = vmul.f32 %v1681, 1.442695
    %v1755 = vpow.pop %v1754
    %v1756 = vmul.f32 %v1682, 1.442695
    %v1757 = vpow.pop %v1756
    %v1758 = vmul.f32 %v1683, 1.442695
    %v1759 = vpow.pop %v1758
    %v1760 = vmul.f32 %v1684, 1.442695
    %v1761 = vpow.pop %v1760
    %v1762 = vmul.f32 %v1685, 1.442695
    %v1763 = vpow.pop %v1762
    %v1764 = vmul.f32 %v1686, 1.442695
    %v1765 = vpow.pop %v1764
    %v1766 = vmul.f32 %v1687, 1.442695
    %v1767 = vpow.pop %v1766
    %v1768 = vsel %vm470, %v1689, 0.0
    %1769 = vadd.xlane.f32.xlu0 %v1768
    %v1770 = vpop.xlane.xlu0 %1769
    %v1771 = vsel %vm474, %v1691, 0.0
    %1772 = vadd.xlane.f32.xlu0 %v1771
    %v1773 = vpop.xlane.xlu0 %1772
    %v1774 = vsel %vm470, %v1693, 0.0
    %1775 = vadd.xlane.f32.xlu0 %v1774
    %v1776 = vpop.xlane.xlu0 %1775
    %v1777 = vsel %vm474, %v1695, 0.0
    %1778 = vadd.xlane.f32.xlu0 %v1777
    %v1779 = vpop.xlane.xlu0 %1778
    %v1780 = vsel %vm470, %v1697, 0.0
    %1781 = vadd.xlane.f32.xlu0 %v1780
    %v1782 = vpop.xlane.xlu0 %1781
    %v1783 = vsel %vm474, %v1699, 0.0
    %1784 = vadd.xlane.f32.xlu0 %v1783
    %v1785 = vpop.xlane.xlu0 %1784
    %v1786 = vsel %vm470, %v1701, 0.0
    %1787 = vadd.xlane.f32.xlu0 %v1786
    %v1788 = vpop.xlane.xlu0 %1787
    %v1789 = vsel %vm474, %v1703, 0.0
    %1790 = vadd.xlane.f32.xlu0 %v1789
    %v1791 = vpop.xlane.xlu0 %1790
    %v1792 = vsel %vm470, %v1705, 0.0
    %1793 = vadd.xlane.f32.xlu0 %v1792
    %v1794 = vpop.xlane.xlu0 %1793
    %v1795 = vsel %vm474, %v1707, 0.0
    %1796 = vadd.xlane.f32.xlu0 %v1795
    %v1797 = vpop.xlane.xlu0 %1796
    %v1798 = vsel %vm470, %v1709, 0.0
    %1799 = vadd.xlane.f32.xlu0 %v1798
    %v1800 = vpop.xlane.xlu0 %1799
    %v1801 = vsel %vm474, %v1711, 0.0
    %1802 = vadd.xlane.f32.xlu0 %v1801
    %v1803 = vpop.xlane.xlu0 %1802
    %v1804 = vsel %vm470, %v1713, 0.0
    %1805 = vadd.xlane.f32.xlu0 %v1804
    %v1806 = vpop.xlane.xlu0 %1805
    %v1807 = vsel %vm474, %v1715, 0.0
    %1808 = vadd.xlane.f32.xlu0 %v1807
    %v1809 = vpop.xlane.xlu0 %1808
    %v1810 = vsel %vm470, %v1717, 0.0
    %1811 = vadd.xlane.f32.xlu0 %v1810
    %v1812 = vpop.xlane.xlu0 %1811
    %v1813 = vsel %vm474, %v1719, 0.0
    %1814 = vadd.xlane.f32.xlu0 %v1813
    %v1815 = vpop.xlane.xlu0 %1814
    %v1816 = vsel %vm470, %v1721, 0.0
    %1817 = vadd.xlane.f32.xlu0 %v1816
    %v1818 = vpop.xlane.xlu0 %1817
    %v1819 = vsel %vm474, %v1723, 0.0
    %1820 = vadd.xlane.f32.xlu0 %v1819
    %v1821 = vpop.xlane.xlu0 %1820
    %v1822 = vsel %vm470, %v1725, 0.0
    %1823 = vadd.xlane.f32.xlu0 %v1822
    %v1824 = vpop.xlane.xlu0 %1823
    %v1825 = vsel %vm474, %v1727, 0.0
    %1826 = vadd.xlane.f32.xlu0 %v1825
    %v1827 = vpop.xlane.xlu0 %1826
    %v1828 = vsel %vm470, %v1729, 0.0
    %1829 = vadd.xlane.f32.xlu0 %v1828
    %v1830 = vpop.xlane.xlu0 %1829
    %v1831 = vsel %vm474, %v1731, 0.0
    %1832 = vadd.xlane.f32.xlu0 %v1831
    %v1833 = vpop.xlane.xlu0 %1832
    %v1834 = vsel %vm470, %v1733, 0.0
    %1835 = vadd.xlane.f32.xlu0 %v1834
    %v1836 = vpop.xlane.xlu0 %1835
    %v1837 = vsel %vm474, %v1735, 0.0
    %1838 = vadd.xlane.f32.xlu0 %v1837
    %v1839 = vpop.xlane.xlu0 %1838
    %v1840 = vsel %vm470, %v1737, 0.0
    %1841 = vadd.xlane.f32.xlu0 %v1840
    %v1842 = vpop.xlane.xlu0 %1841
    %v1843 = vsel %vm474, %v1739, 0.0
    %1844 = vadd.xlane.f32.xlu0 %v1843
    %v1845 = vpop.xlane.xlu0 %1844
    %v1846 = vsel %vm470, %v1741, 0.0
    %1847 = vadd.xlane.f32.xlu0 %v1846
    %v1848 = vpop.xlane.xlu0 %1847
    %v1849 = vsel %vm474, %v1743, 0.0
    %1850 = vadd.xlane.f32.xlu0 %v1849
    %v1851 = vpop.xlane.xlu0 %1850
    %v1852 = vsel %vm470, %v1745, 0.0
    %1853 = vadd.xlane.f32.xlu0 %v1852
    %v1854 = vpop.xlane.xlu0 %1853
    %v1855 = vsel %vm474, %v1747, 0.0
    %1856 = vadd.xlane.f32.xlu0 %v1855
    %v1857 = vpop.xlane.xlu0 %1856
    %v1858 = vsel %vm470, %v1749, 0.0
    %1859 = vadd.xlane.f32.xlu0 %v1858
    %v1860 = vpop.xlane.xlu0 %1859
    %v1861 = vsel %vm474, %v1751, 0.0
    %1862 = vadd.xlane.f32.xlu0 %v1861
    %v1863 = vpop.xlane.xlu0 %1862
    %v1864 = vsel %vm470, %v1753, 0.0
    %1865 = vadd.xlane.f32.xlu0 %v1864
    %v1866 = vpop.xlane.xlu0 %1865
    %v1867 = vsel %vm474, %v1755, 0.0
    %1868 = vadd.xlane.f32.xlu0 %v1867
    %v1869 = vpop.xlane.xlu0 %1868
    %v1870 = vsel %vm470, %v1757, 0.0
    %1871 = vadd.xlane.f32.xlu0 %v1870
    %v1872 = vpop.xlane.xlu0 %1871
    %v1873 = vsel %vm474, %v1759, 0.0
    %1874 = vadd.xlane.f32.xlu0 %v1873
    %v1875 = vpop.xlane.xlu0 %1874
    %v1876 = vsel %vm470, %v1761, 0.0
    %1877 = vadd.xlane.f32.xlu0 %v1876
    %v1878 = vpop.xlane.xlu0 %1877
    %v1879 = vsel %vm474, %v1763, 0.0
    %1880 = vadd.xlane.f32.xlu0 %v1879
    %v1881 = vpop.xlane.xlu0 %1880
    %v1882 = vsel %vm470, %v1765, 0.0
    %1883 = vadd.xlane.f32.xlu0 %v1882
    %v1884 = vpop.xlane.xlu0 %1883
    %v1885 = vsel %vm474, %v1767, 0.0
    %1886 = vadd.xlane.f32.xlu0 %v1885
    %v1887 = vpop.xlane.xlu0 %1886
    %v1888 = vrcp.pop %v1770
    %v1889 = vrcp.pop %v1773
    %v1890 = vrcp.pop %v1776
    %v1891 = vrcp.pop %v1779
    %v1892 = vrcp.pop %v1782
    %v1893 = vrcp.pop %v1785
    %v1894 = vrcp.pop %v1788
    %v1895 = vrcp.pop %v1791
    %v1896 = vrcp.pop %v1794
    %v1897 = vrcp.pop %v1797
    %v1898 = vrcp.pop %v1800
    %v1899 = vrcp.pop %v1803
    %v1900 = vrcp.pop %v1806
    %v1901 = vrcp.pop %v1809
    %v1902 = vrcp.pop %v1812
    %v1903 = vrcp.pop %v1815
    %v1904 = vrcp.pop %v1818
    %v1905 = vrcp.pop %v1821
    %v1906 = vrcp.pop %v1824
    %v1907 = vrcp.pop %v1827
    %v1908 = vrcp.pop %v1830
    %v1909 = vrcp.pop %v1833
    %v1910 = vrcp.pop %v1836
    %v1911 = vrcp.pop %v1839
    %v1912 = vrcp.pop %v1842
    %v1913 = vrcp.pop %v1845
    %v1914 = vrcp.pop %v1848
    %v1915 = vrcp.pop %v1851
    %v1916 = vrcp.pop %v1854
    %v1917 = vrcp.pop %v1857
    %v1918 = vrcp.pop %v1860
    %v1919 = vrcp.pop %v1863
    %v1920 = vrcp.pop %v1866
    %v1921 = vrcp.pop %v1869
    %v1922 = vrcp.pop %v1872
    %v1923 = vrcp.pop %v1875
    %v1924 = vrcp.pop %v1878
    %v1925 = vrcp.pop %v1881
    %v1926 = vrcp.pop %v1884
    %v1927 = vrcp.pop %v1887
    %v1928 = vmul.f32 %v1689, %v1888
    %v1929 = vmul.f32 %v1691, %v1889
    %v1930 = vmul.f32 %v1693, %v1890
    %v1931 = vmul.f32 %v1695, %v1891
    %v1932 = vmul.f32 %v1697, %v1892
    %v1933 = vmul.f32 %v1699, %v1893
    %v1934 = vmul.f32 %v1701, %v1894
    %v1935 = vmul.f32 %v1703, %v1895
    %v1936 = vmul.f32 %v1705, %v1896
    %v1937 = vmul.f32 %v1707, %v1897
    %v1938 = vmul.f32 %v1709, %v1898
    %v1939 = vmul.f32 %v1711, %v1899
    %v1940 = vmul.f32 %v1713, %v1900
    %v1941 = vmul.f32 %v1715, %v1901
    %v1942 = vmul.f32 %v1717, %v1902
    %v1943 = vmul.f32 %v1719, %v1903
    %v1944 = vmul.f32 %v1721, %v1904
    %v1945 = vmul.f32 %v1723, %v1905
    %v1946 = vmul.f32 %v1725, %v1906
    %v1947 = vmul.f32 %v1727, %v1907
    %v1948 = vmul.f32 %v1729, %v1908
    %v1949 = vmul.f32 %v1731, %v1909
    %v1950 = vmul.f32 %v1733, %v1910
    %v1951 = vmul.f32 %v1735, %v1911
    %v1952 = vmul.f32 %v1737, %v1912
    %v1953 = vmul.f32 %v1739, %v1913
    %v1954 = vmul.f32 %v1741, %v1914
    %v1955 = vmul.f32 %v1743, %v1915
    %v1956 = vmul.f32 %v1745, %v1916
    %v1957 = vmul.f32 %v1747, %v1917
    %v1958 = vmul.f32 %v1749, %v1918
    %v1959 = vmul.f32 %v1751, %v1919
    %v1960 = vmul.f32 %v1753, %v1920
    %v1961 = vmul.f32 %v1755, %v1921
    %v1962 = vmul.f32 %v1757, %v1922
    %v1963 = vmul.f32 %v1759, %v1923
    %v1964 = vmul.f32 %v1761, %v1924
    %v1965 = vmul.f32 %v1763, %v1925
    %v1966 = vmul.f32 %v1765, %v1926
    %v1967 = vmul.f32 %v1767, %v1927
    %v1972 = vrot.slane %v1164, 1
    %v1973 = vrot.slane %v1164, 2
    %v1974 = vrot.slane %v1164, 3
    %v1975 = vrot.slane %v1164, 4
    %v1976 = vrot.slane %v1164, 5
    %v1977 = vrot.slane %v1164, 6
    %v1978 = vrot.slane %v1164, 7
    %v1979 = vrot.slane %v1165, 1
    %v1980 = vrot.slane %v1166, 1
    %v1981 = vrot.slane %v1166, 2
    %v1982 = vrot.slane %v1166, 3
    %v1983 = vrot.slane %v1166, 4
    %v1984 = vrot.slane %v1166, 5
    %v1985 = vrot.slane %v1166, 6
    %v1986 = vrot.slane %v1166, 7
    %v1987 = vrot.slane %v1167, 1
    %v1988 = vperm.slane %v1164, 0
    %v1989 = vperm.slane %v1972, 0
    %v1990 = vperm.slane %v1973, 0
    %v1991 = vperm.slane %v1974, 0
    %v1992 = vperm.slane %v1975, 0
    %v1993 = vperm.slane %v1976, 0
    %v1994 = vperm.slane %v1977, 0
    %v1995 = vperm.slane %v1978, 0
    %v1996 = vperm.slane %v1165, 0
    %v1997 = vperm.slane %v1979, 0
    %v1998 = vperm.slane %v1166, 0
    %v1999 = vperm.slane %v1980, 0
    %v2000 = vperm.slane %v1981, 0
    %v2001 = vperm.slane %v1982, 0
    %v2002 = vperm.slane %v1983, 0
    %v2003 = vperm.slane %v1984, 0
    %v2004 = vperm.slane %v1985, 0
    %v2005 = vperm.slane %v1986, 0
    %v2006 = vperm.slane %v1167, 0
    %v2007 = vperm.slane %v1987, 0
    %v2028 = vmul.f32 %v1928, %v1988
    %v2029 = vmul.f32 %v1929, %v1988
    %v2030 = vmul.f32 %v1930, %v1989
    %v2031 = vmul.f32 %v1931, %v1989
    %v2032 = vmul.f32 %v1932, %v1990
    %v2033 = vmul.f32 %v1933, %v1990
    %v2034 = vmul.f32 %v1934, %v1991
    %v2035 = vmul.f32 %v1935, %v1991
    %v2036 = vmul.f32 %v1936, %v1992
    %v2037 = vmul.f32 %v1937, %v1992
    %v2038 = vmul.f32 %v1938, %v1993
    %v2039 = vmul.f32 %v1939, %v1993
    %v2040 = vmul.f32 %v1940, %v1994
    %v2041 = vmul.f32 %v1941, %v1994
    %v2042 = vmul.f32 %v1942, %v1995
    %v2043 = vmul.f32 %v1943, %v1995
    %v2044 = vmul.f32 %v1944, %v1996
    %v2045 = vmul.f32 %v1945, %v1996
    %v2046 = vmul.f32 %v1946, %v1997
    %v2047 = vmul.f32 %v1947, %v1997
    %v2048 = vmul.f32 %v1948, %v1998
    %v2049 = vmul.f32 %v1949, %v1998
    %v2050 = vmul.f32 %v1950, %v1999
    %v2051 = vmul.f32 %v1951, %v1999
    %v2052 = vmul.f32 %v1952, %v2000
    %v2053 = vmul.f32 %v1953, %v2000
    %v2054 = vmul.f32 %v1954, %v2001
    %v2055 = vmul.f32 %v1955, %v2001
    %v2056 = vmul.f32 %v1956, %v2002
    %v2057 = vmul.f32 %v1957, %v2002
    %v2058 = vmul.f32 %v1958, %v2003
    %v2059 = vmul.f32 %v1959, %v2003
    %v2060 = vmul.f32 %v1960, %v2004
    %v2061 = vmul.f32 %v1961, %v2004
    %v2062 = vmul.f32 %v1962, %v2005
    %v2063 = vmul.f32 %v1963, %v2005
    %v2064 = vmul.f32 %v1964, %v2006
    %v2065 = vmul.f32 %v1965, %v2006
    %v2066 = vmul.f32 %v1966, %v2007
    %v2067 = vmul.f32 %v1967, %v2007
    %v2068 = vsel %vm470, %v2028, 0.0
    %2069 = vadd.xlane.f32.xlu0 %v2068
    %v2070 = vpop.xlane.xlu0 %2069
    %v2071 = vsel %vm474, %v2029, 0.0
    %2072 = vadd.xlane.f32.xlu0 %v2071
    %v2073 = vpop.xlane.xlu0 %2072
    %v2074 = vsel %vm470, %v2030, 0.0
    %2075 = vadd.xlane.f32.xlu0 %v2074
    %v2076 = vpop.xlane.xlu0 %2075
    %v2077 = vsel %vm474, %v2031, 0.0
    %2078 = vadd.xlane.f32.xlu0 %v2077
    %v2079 = vpop.xlane.xlu0 %2078
    %v2080 = vsel %vm470, %v2032, 0.0
    %2081 = vadd.xlane.f32.xlu0 %v2080
    %v2082 = vpop.xlane.xlu0 %2081
    %v2083 = vsel %vm474, %v2033, 0.0
    %2084 = vadd.xlane.f32.xlu0 %v2083
    %v2085 = vpop.xlane.xlu0 %2084
    %v2086 = vsel %vm470, %v2034, 0.0
    %2087 = vadd.xlane.f32.xlu0 %v2086
    %v2088 = vpop.xlane.xlu0 %2087
    %v2089 = vsel %vm474, %v2035, 0.0
    %2090 = vadd.xlane.f32.xlu0 %v2089
    %v2091 = vpop.xlane.xlu0 %2090
    %v2092 = vsel %vm470, %v2036, 0.0
    %2093 = vadd.xlane.f32.xlu0 %v2092
    %v2094 = vpop.xlane.xlu0 %2093
    %v2095 = vsel %vm474, %v2037, 0.0
    %2096 = vadd.xlane.f32.xlu0 %v2095
    %v2097 = vpop.xlane.xlu0 %2096
    %v2098 = vsel %vm470, %v2038, 0.0
    %2099 = vadd.xlane.f32.xlu0 %v2098
    %v2100 = vpop.xlane.xlu0 %2099
    %v2101 = vsel %vm474, %v2039, 0.0
    %2102 = vadd.xlane.f32.xlu0 %v2101
    %v2103 = vpop.xlane.xlu0 %2102
    %v2104 = vsel %vm470, %v2040, 0.0
    %2105 = vadd.xlane.f32.xlu0 %v2104
    %v2106 = vpop.xlane.xlu0 %2105
    %v2107 = vsel %vm474, %v2041, 0.0
    %2108 = vadd.xlane.f32.xlu0 %v2107
    %v2109 = vpop.xlane.xlu0 %2108
    %v2110 = vsel %vm470, %v2042, 0.0
    %2111 = vadd.xlane.f32.xlu0 %v2110
    %v2112 = vpop.xlane.xlu0 %2111
    %v2113 = vsel %vm474, %v2043, 0.0
    %2114 = vadd.xlane.f32.xlu0 %v2113
    %v2115 = vpop.xlane.xlu0 %2114
    %v2116 = vsel %vm470, %v2044, 0.0
    %2117 = vadd.xlane.f32.xlu0 %v2116
    %v2118 = vpop.xlane.xlu0 %2117
    %v2119 = vsel %vm474, %v2045, 0.0
    %2120 = vadd.xlane.f32.xlu0 %v2119
    %v2121 = vpop.xlane.xlu0 %2120
    %v2122 = vsel %vm470, %v2046, 0.0
    %2123 = vadd.xlane.f32.xlu0 %v2122
    %v2124 = vpop.xlane.xlu0 %2123
    %v2125 = vsel %vm474, %v2047, 0.0
    %2126 = vadd.xlane.f32.xlu0 %v2125
    %v2127 = vpop.xlane.xlu0 %2126
    %v2128 = vsel %vm470, %v2048, 0.0
    %2129 = vadd.xlane.f32.xlu0 %v2128
    %v2130 = vpop.xlane.xlu0 %2129
    %v2131 = vsel %vm474, %v2049, 0.0
    %2132 = vadd.xlane.f32.xlu0 %v2131
    %v2133 = vpop.xlane.xlu0 %2132
    %v2134 = vsel %vm470, %v2050, 0.0
    %2135 = vadd.xlane.f32.xlu0 %v2134
    %v2136 = vpop.xlane.xlu0 %2135
    %v2137 = vsel %vm474, %v2051, 0.0
    %2138 = vadd.xlane.f32.xlu0 %v2137
    %v2139 = vpop.xlane.xlu0 %2138
    %v2140 = vsel %vm470, %v2052, 0.0
    %2141 = vadd.xlane.f32.xlu0 %v2140
    %v2142 = vpop.xlane.xlu0 %2141
    %v2143 = vsel %vm474, %v2053, 0.0
    %2144 = vadd.xlane.f32.xlu0 %v2143
    %v2145 = vpop.xlane.xlu0 %2144
    %v2146 = vsel %vm470, %v2054, 0.0
    %2147 = vadd.xlane.f32.xlu0 %v2146
    %v2148 = vpop.xlane.xlu0 %2147
    %v2149 = vsel %vm474, %v2055, 0.0
    %2150 = vadd.xlane.f32.xlu0 %v2149
    %v2151 = vpop.xlane.xlu0 %2150
    %v2152 = vsel %vm470, %v2056, 0.0
    %2153 = vadd.xlane.f32.xlu0 %v2152
    %v2154 = vpop.xlane.xlu0 %2153
    %v2155 = vsel %vm474, %v2057, 0.0
    %2156 = vadd.xlane.f32.xlu0 %v2155
    %v2157 = vpop.xlane.xlu0 %2156
    %v2158 = vsel %vm470, %v2058, 0.0
    %2159 = vadd.xlane.f32.xlu0 %v2158
    %v2160 = vpop.xlane.xlu0 %2159
    %v2161 = vsel %vm474, %v2059, 0.0
    %2162 = vadd.xlane.f32.xlu0 %v2161
    %v2163 = vpop.xlane.xlu0 %2162
    %v2164 = vsel %vm470, %v2060, 0.0
    %2165 = vadd.xlane.f32.xlu0 %v2164
    %v2166 = vpop.xlane.xlu0 %2165
    %v2167 = vsel %vm474, %v2061, 0.0
    %2168 = vadd.xlane.f32.xlu0 %v2167
    %v2169 = vpop.xlane.xlu0 %2168
    %v2170 = vsel %vm470, %v2062, 0.0
    %2171 = vadd.xlane.f32.xlu0 %v2170
    %v2172 = vpop.xlane.xlu0 %2171
    %v2173 = vsel %vm474, %v2063, 0.0
    %2174 = vadd.xlane.f32.xlu0 %v2173
    %v2175 = vpop.xlane.xlu0 %2174
    %v2176 = vsel %vm470, %v2064, 0.0
    %2177 = vadd.xlane.f32.xlu0 %v2176
    %v2178 = vpop.xlane.xlu0 %2177
    %v2179 = vsel %vm474, %v2065, 0.0
    %2180 = vadd.xlane.f32.xlu0 %v2179
    %v2181 = vpop.xlane.xlu0 %2180
    %v2182 = vsel %vm470, %v2066, 0.0
    %2183 = vadd.xlane.f32.xlu0 %v2182
    %v2184 = vpop.xlane.xlu0 %2183
    %v2185 = vsel %vm474, %v2067, 0.0
    %2186 = vadd.xlane.f32.xlu0 %v2185
    %v2187 = vpop.xlane.xlu0 %2186
    %v2188 = vld [vmem:[%s4] sm:$0xff]
    %v2189 = vld [vmem:[%s4 + $0x8] sm:$0x3]
    %v2190 = vld [vmem:[%s5] sm:$0xff]
    %v2191 = vld [vmem:[%s5 + $0x8] sm:$0x3]
    %v2212 = vlaneseq
    %v2213 = vand.u32 %v2212, 127
    %v2214 = vperm.slane %v2070, %v2213
    %v2215 = vadd.s32 %v2213, 4294967288
    %v2216 = vperm.slane %v2073, %v2215
    %vm2217 = vcmask 130112
    %v2218 = vsel %vm2217, %v2216, %v2214
    %v2219 = vperm.slane %v2076, %v2213
    %v2220 = vperm.slane %v2079, %v2215
    %v2221 = vsel %vm2217, %v2220, %v2219
    %v2222 = vperm.slane %v2082, %v2213
    %v2223 = vperm.slane %v2085, %v2215
    %v2224 = vsel %vm2217, %v2223, %v2222
    %v2225 = vperm.slane %v2088, %v2213
    %v2226 = vperm.slane %v2091, %v2215
    %v2227 = vsel %vm2217, %v2226, %v2225
    %v2228 = vperm.slane %v2094, %v2213
    %v2229 = vperm.slane %v2097, %v2215
    %v2230 = vsel %vm2217, %v2229, %v2228
    %v2231 = vperm.slane %v2100, %v2213
    %v2232 = vperm.slane %v2103, %v2215
    %v2233 = vsel %vm2217, %v2232, %v2231
    %v2234 = vperm.slane %v2106, %v2213
    %v2235 = vperm.slane %v2109, %v2215
    %v2236 = vsel %vm2217, %v2235, %v2234
    %v2237 = vperm.slane %v2112, %v2213
    %v2238 = vperm.slane %v2115, %v2215
    %v2239 = vsel %vm2217, %v2238, %v2237
    %v2240 = vperm.slane %v2118, %v2213
    %v2241 = vperm.slane %v2121, %v2215
    %v2242 = vsel %vm2217, %v2241, %v2240
    %v2243 = vperm.slane %v2124, %v2213
    %v2244 = vperm.slane %v2127, %v2215
    %v2245 = vsel %vm2217, %v2244, %v2243
    %vm2246 = vcmask 1041409
    %v2247 = vsel %vm2246, %v2221, %v2218
    %vm2248 = vcmask 1042434
    %v2249 = vsel %vm2248, %v2224, %v2247
    %vm2250 = vcmask 1043459
    %v2251 = vsel %vm2250, %v2227, %v2249
    %vm2252 = vcmask 1044484
    %v2253 = vsel %vm2252, %v2230, %v2251
    %vm2254 = vcmask 1045509
    %v2255 = vsel %vm2254, %v2233, %v2253
    %vm2256 = vcmask 1046534
    %v2257 = vsel %vm2256, %v2236, %v2255
    %vm2258 = vcmask 1047559
    %v2259 = vsel %vm2258, %v2239, %v2257
    %v2260 = vsel %vm2246, %v2245, %v2242
    %v2261 = vsel %vm470, %v2259, 0
    %v2263 = vsel %vm470, %v2260, 0
    %vm2265 = vcmask 1041408
    %v2267 = vsel %vm2265, %v2191, 0
    %2269 = vmatpush.msra.mxu0 0.0
    %2270 = vmatpush.msra.mxu0 0.0
    %2271 = vmatpush.msra.mxu0 0.0
    %2272 = vmatpush.msra.mxu0 0.0
    %2273 = vmatpush.msra.mxu0 0.0
    %2274 = vmatpush.msra.mxu0 0.0
    %2275 = vmatpush.msra.mxu0 0.0
    %2276 = vmatpush.msra.mxu0 0.0
    %2277 = vmatpush.msra.mxu0 0.0
    %2278 = vmatpush.msra.mxu0 0.0
    %2279 = vmatpush.msra.mxu0 0.0
    %2280 = vmatpush.msra.mxu0 0.0
    %2281 = vmatpush.msra.mxu0 0.0
    %2282 = vmatpush.msra.mxu0 0.0
    %2283 = vmatpush.msra.mxu0 %v2267
    %2284 = vmatpush.msra.mxu0 %v2190
    %2285 = vmatmul.f32.gmra.mxu0 %v2261
    %v2286 = vpop.f32.mrf.mxu0
    %v2287 = vadd.f32 0.0, %v2286
    %2288 = vmatmul.f32.gmra.mxu0 %v2263
    %v2289 = vpop.f32.mrf.mxu0
    %v2290 = vadd.f32 0.0, %v2289
    %2291 = vdwg.mxu0
    %v2312 = vperm.slane %v2130, %v2213
    %v2313 = vperm.slane %v2133, %v2215
    %v2314 = vsel %vm2217, %v2313, %v2312
    %v2315 = vperm.slane %v2136, %v2213
    %v2316 = vperm.slane %v2139, %v2215
    %v2317 = vsel %vm2217, %v2316, %v2315
    %v2318 = vperm.slane %v2142, %v2213
    %v2319 = vperm.slane %v2145, %v2215
    %v2320 = vsel %vm2217, %v2319, %v2318
    %v2321 = vperm.slane %v2148, %v2213
    %v2322 = vperm.slane %v2151, %v2215
    %v2323 = vsel %vm2217, %v2322, %v2321
    %v2324 = vperm.slane %v2154, %v2213
    %v2325 = vperm.slane %v2157, %v2215
    %v2326 = vsel %vm2217, %v2325, %v2324
    %v2327 = vperm.slane %v2160, %v2213
    %v2328 = vperm.slane %v2163, %v2215
    %v2329 = vsel %vm2217, %v2328, %v2327
    %v2330 = vperm.slane %v2166, %v2213
    %v2331 = vperm.slane %v2169, %v2215
    %v2332 = vsel %vm2217, %v2331, %v2330
    %v2333 = vperm.slane %v2172, %v2213
    %v2334 = vperm.slane %v2175, %v2215
    %v2335 = vsel %vm2217, %v2334, %v2333
    %v2336 = vperm.slane %v2178, %v2213
    %v2337 = vperm.slane %v2181, %v2215
    %v2338 = vsel %vm2217, %v2337, %v2336
    %v2339 = vperm.slane %v2184, %v2213
    %v2340 = vperm.slane %v2187, %v2215
    %v2341 = vsel %vm2217, %v2340, %v2339
    %v2342 = vsel %vm2246, %v2317, %v2314
    %v2343 = vsel %vm2248, %v2320, %v2342
    %v2344 = vsel %vm2250, %v2323, %v2343
    %v2345 = vsel %vm2252, %v2326, %v2344
    %v2346 = vsel %vm2254, %v2329, %v2345
    %v2347 = vsel %vm2256, %v2332, %v2346
    %v2348 = vsel %vm2258, %v2335, %v2347
    %v2349 = vsel %vm2246, %v2341, %v2338
    %v2350 = vsel %vm470, %v2348, 0
    %v2352 = vsel %vm470, %v2349, 0
    %2354 = vmatpush.msra.mxu0 0.0
    %2355 = vmatpush.msra.mxu0 0.0
    %2356 = vmatpush.msra.mxu0 0.0
    %2357 = vmatpush.msra.mxu0 0.0
    %2358 = vmatpush.msra.mxu0 0.0
    %2359 = vmatpush.msra.mxu0 0.0
    %2360 = vmatpush.msra.mxu0 0.0
    %2361 = vmatpush.msra.mxu0 0.0
    %2362 = vmatpush.msra.mxu0 0.0
    %2363 = vmatpush.msra.mxu0 0.0
    %2364 = vmatpush.msra.mxu0 0.0
    %2365 = vmatpush.msra.mxu0 0.0
    %2366 = vmatpush.msra.mxu0 0.0
    %2367 = vmatpush.msra.mxu0 0.0
    %2368 = vmatpush.msra.mxu0 %v2267
    %2369 = vmatpush.msra.mxu0 %v2190
    %2370 = vmatmul.f32.gmra.mxu0 %v2350
    %v2371 = vpop.f32.mrf.mxu0
    %v2372 = vadd.f32 0.0, %v2371
    %2373 = vmatmul.f32.gmra.mxu0 %v2352
    %v2374 = vpop.f32.mrf.mxu0
    %v2375 = vadd.f32 0.0, %v2374
    %2376 = vdwg.mxu0
    %v2397 = vperm.slane %v1014, %v2213
    %v2398 = vperm.slane %v1017, %v2215
    %v2399 = vsel %vm2217, %v2398, %v2397
    %v2400 = vperm.slane %v1020, %v2213
    %v2401 = vperm.slane %v1023, %v2215
    %v2402 = vsel %vm2217, %v2401, %v2400
    %v2403 = vperm.slane %v1026, %v2213
    %v2404 = vperm.slane %v1029, %v2215
    %v2405 = vsel %vm2217, %v2404, %v2403
    %v2406 = vperm.slane %v1032, %v2213
    %v2407 = vperm.slane %v1035, %v2215
    %v2408 = vsel %vm2217, %v2407, %v2406
    %v2409 = vperm.slane %v1038, %v2213
    %v2410 = vperm.slane %v1041, %v2215
    %v2411 = vsel %vm2217, %v2410, %v2409
    %v2412 = vperm.slane %v1044, %v2213
    %v2413 = vperm.slane %v1047, %v2215
    %v2414 = vsel %vm2217, %v2413, %v2412
    %v2415 = vperm.slane %v1050, %v2213
    %v2416 = vperm.slane %v1053, %v2215
    %v2417 = vsel %vm2217, %v2416, %v2415
    %v2418 = vperm.slane %v1056, %v2213
    %v2419 = vperm.slane %v1059, %v2215
    %v2420 = vsel %vm2217, %v2419, %v2418
    %v2421 = vperm.slane %v1062, %v2213
    %v2422 = vperm.slane %v1065, %v2215
    %v2423 = vsel %vm2217, %v2422, %v2421
    %v2424 = vperm.slane %v1068, %v2213
    %v2425 = vperm.slane %v1071, %v2215
    %v2426 = vsel %vm2217, %v2425, %v2424
    %v2427 = vsel %vm2246, %v2402, %v2399
    %v2428 = vsel %vm2248, %v2405, %v2427
    %v2429 = vsel %vm2250, %v2408, %v2428
    %v2430 = vsel %vm2252, %v2411, %v2429
    %v2431 = vsel %vm2254, %v2414, %v2430
    %v2432 = vsel %vm2256, %v2417, %v2431
    %v2433 = vsel %vm2258, %v2420, %v2432
    %v2434 = vsel %vm2246, %v2426, %v2423
    %v2435 = vsel %vm470, %v2433, 0
    %v2437 = vsel %vm470, %v2434, 0
    %v2440 = vsel %vm2265, %v2189, 0
    %2442 = vmatpush.msra.mxu0 0.0
    %2443 = vmatpush.msra.mxu0 0.0
    %2444 = vmatpush.msra.mxu0 0.0
    %2445 = vmatpush.msra.mxu0 0.0
    %2446 = vmatpush.msra.mxu0 0.0
    %2447 = vmatpush.msra.mxu0 0.0
    %2448 = vmatpush.msra.mxu0 0.0
    %2449 = vmatpush.msra.mxu0 0.0
    %2450 = vmatpush.msra.mxu0 0.0
    %2451 = vmatpush.msra.mxu0 0.0
    %2452 = vmatpush.msra.mxu0 0.0
    %2453 = vmatpush.msra.mxu0 0.0
    %2454 = vmatpush.msra.mxu0 0.0
    %2455 = vmatpush.msra.mxu0 0.0
    %2456 = vmatpush.msra.mxu0 %v2440
    %2457 = vmatpush.msra.mxu0 %v2188
    %2458 = vmatmul.f32.gmra.mxu0 %v2435
    %v2459 = vpop.f32.mrf.mxu0
    %v2460 = vadd.f32 %v2287, %v2459
    %2461 = vmatmul.f32.gmra.mxu0 %v2437
    %v2462 = vpop.f32.mrf.mxu0
    %v2463 = vadd.f32 %v2290, %v2462
    %2464 = vdwg.mxu0
    %v2485 = vperm.slane %v1074, %v2213
    %v2486 = vperm.slane %v1077, %v2215
    %v2487 = vsel %vm2217, %v2486, %v2485
    %v2488 = vperm.slane %v1080, %v2213
    %v2489 = vperm.slane %v1083, %v2215
    %v2490 = vsel %vm2217, %v2489, %v2488
    %v2491 = vperm.slane %v1086, %v2213
    %v2492 = vperm.slane %v1089, %v2215
    %v2493 = vsel %vm2217, %v2492, %v2491
    %v2494 = vperm.slane %v1092, %v2213
    %v2495 = vperm.slane %v1095, %v2215
    %v2496 = vsel %vm2217, %v2495, %v2494
    %v2497 = vperm.slane %v1098, %v2213
    %v2498 = vperm.slane %v1101, %v2215
    %v2499 = vsel %vm2217, %v2498, %v2497
    %v2500 = vperm.slane %v1104, %v2213
    %v2501 = vperm.slane %v1107, %v2215
    %v2502 = vsel %vm2217, %v2501, %v2500
    %v2503 = vperm.slane %v1110, %v2213
    %v2504 = vperm.slane %v1113, %v2215
    %v2505 = vsel %vm2217, %v2504, %v2503
    %v2506 = vperm.slane %v1116, %v2213
    %v2507 = vperm.slane %v1119, %v2215
    %v2508 = vsel %vm2217, %v2507, %v2506
    %v2509 = vperm.slane %v1122, %v2213
    %v2510 = vperm.slane %v1125, %v2215
    %v2511 = vsel %vm2217, %v2510, %v2509
    %v2512 = vperm.slane %v1128, %v2213
    %v2513 = vperm.slane %v1131, %v2215
    %v2514 = vsel %vm2217, %v2513, %v2512
    %v2515 = vsel %vm2246, %v2490, %v2487
    %v2516 = vsel %vm2248, %v2493, %v2515
    %v2517 = vsel %vm2250, %v2496, %v2516
    %v2518 = vsel %vm2252, %v2499, %v2517
    %v2519 = vsel %vm2254, %v2502, %v2518
    %v2520 = vsel %vm2256, %v2505, %v2519
    %v2521 = vsel %vm2258, %v2508, %v2520
    %v2522 = vsel %vm2246, %v2514, %v2511
    %v2523 = vsel %vm470, %v2521, 0
    %v2525 = vsel %vm470, %v2522, 0
    %2527 = vmatpush.msra.mxu0 0.0
    %2528 = vmatpush.msra.mxu0 0.0
    %2529 = vmatpush.msra.mxu0 0.0
    %2530 = vmatpush.msra.mxu0 0.0
    %2531 = vmatpush.msra.mxu0 0.0
    %2532 = vmatpush.msra.mxu0 0.0
    %2533 = vmatpush.msra.mxu0 0.0
    %2534 = vmatpush.msra.mxu0 0.0
    %2535 = vmatpush.msra.mxu0 0.0
    %2536 = vmatpush.msra.mxu0 0.0
    %2537 = vmatpush.msra.mxu0 0.0
    %2538 = vmatpush.msra.mxu0 0.0
    %2539 = vmatpush.msra.mxu0 0.0
    %2540 = vmatpush.msra.mxu0 0.0
    %2541 = vmatpush.msra.mxu0 %v2440
    %2542 = vmatpush.msra.mxu0 %v2188
    %2543 = vmatmul.f32.gmra.mxu0 %v2523
    %v2544 = vpop.f32.mrf.mxu0
    %v2545 = vadd.f32 %v2372, %v2544
    %2546 = vmatmul.f32.gmra.mxu0 %v2525
    %v2547 = vpop.f32.mrf.mxu0
    %v2548 = vadd.f32 %v2375, %v2547
    %2549 = vdwg.mxu0
    %v2550 = vld [vmem:[%s6] sm:$0xff]
    %v2551 = vld [vmem:[%s6 + $0x8] sm:$0x3]
    %v2552 = vadd.f32 %v2460, %v2550
    %v2553 = vadd.f32 %v2463, %v2551
    %v2554 = vadd.f32 %v2545, %v2550
    %v2555 = vadd.f32 %v2548, %v2551
    %2558 = vrot.lane.b32.xlu0 %v2552, 107
    %v2559 = vpop.permute.xlu0 %2558
    %2560 = vrot.lane.b32.xlu0 %v2553, 107
    %v2561 = vpop.permute.xlu0 %2560
    %vm2562 = vcmask 171008
    %v2563 = vsel %vm2562, %v2552, 0
    %v2565 = vsel %vm2562, %v2553, 0
    %v2567 = vsel %vm2562, %v2559, 0
    %v2569 = vsel %vm2562, %v2561, 0
    %2571 = vmatpush.xpose.msra.mxu0 0.0
    %2572 = vmatpush.xpose.msra.mxu0 0.0
    %2573 = vmatpush.xpose.msra.mxu0 0.0
    %2574 = vmatpush.xpose.msra.mxu0 0.0
    %2575 = vmatpush.xpose.msra.mxu0 0.0
    %2576 = vmatpush.xpose.msra.mxu0 0.0
    %2577 = vmatpush.xpose.msra.mxu0 0.0
    %2578 = vmatpush.xpose.msra.mxu0 0.0
    %2579 = vmatpush.xpose.msra.mxu0 0.0
    %2580 = vmatpush.xpose.msra.mxu0 0.0
    %2581 = vmatpush.xpose.msra.mxu0 0.0
    %2582 = vmatpush.xpose.msra.mxu0 0.0
    %2583 = vmatpush.xpose.msra.mxu0 0.0
    %2584 = vmatpush.xpose.msra.mxu0 0.0
    %2585 = vmatpush.xpose.msra.mxu0 %v2569
    %2586 = vmatpush.xpose.msra.mxu0 %v2567
    %2587 = vmatmul.f32.gmra.mxu0 %v2563
    %v2588 = vpop.f32.mrf.mxu0
    %v2589 = vadd.f32 0.0, %v2588
    %2590 = vmatmul.f32.gmra.mxu0 %v2565
    %v2591 = vpop.f32.mrf.mxu0
    %v2592 = vadd.f32 0.0, %v2591
    %2593 = vdwg.mxu0
    %2596 = vrot.lane.b32.xlu0 %v2554, 107
    %v2597 = vpop.permute.xlu0 %2596
    %2598 = vrot.lane.b32.xlu0 %v2555, 107
    %v2599 = vpop.permute.xlu0 %2598
    %v2600 = vsel %vm2562, %v2554, 0
    %v2602 = vsel %vm2562, %v2555, 0
    %v2604 = vsel %vm2562, %v2597, 0
    %v2606 = vsel %vm2562, %v2599, 0
    %2608 = vmatpush.xpose.msra.mxu0 0.0
    %2609 = vmatpush.xpose.msra.mxu0 0.0
    %2610 = vmatpush.xpose.msra.mxu0 0.0
    %2611 = vmatpush.xpose.msra.mxu0 0.0
    %2612 = vmatpush.xpose.msra.mxu0 0.0
    %2613 = vmatpush.xpose.msra.mxu0 0.0
    %2614 = vmatpush.xpose.msra.mxu0 0.0
    %2615 = vmatpush.xpose.msra.mxu0 0.0
    %2616 = vmatpush.xpose.msra.mxu0 0.0
    %2617 = vmatpush.xpose.msra.mxu0 0.0
    %2618 = vmatpush.xpose.msra.mxu0 0.0
    %2619 = vmatpush.xpose.msra.mxu0 0.0
    %2620 = vmatpush.xpose.msra.mxu0 0.0
    %2621 = vmatpush.xpose.msra.mxu0 0.0
    %2622 = vmatpush.xpose.msra.mxu0 %v2606
    %2623 = vmatpush.xpose.msra.mxu0 %v2604
    %2624 = vmatmul.f32.gmra.mxu0 %v2600
    %v2625 = vpop.f32.mrf.mxu0
    %v2626 = vadd.f32 0.0, %v2625
    %2627 = vmatmul.f32.gmra.mxu0 %v2602
    %v2628 = vpop.f32.mrf.mxu0
    %v2629 = vadd.f32 0.0, %v2628
    %2630 = vdwg.mxu0
    %v2631 = vmul.f32 %v2589, 0.2182179
    %v2632 = vmul.f32 %v2592, 0.2182179
    %v2633 = vmul.f32 %v2626, 0.2182179
    %v2634 = vmul.f32 %v2629, 0.2182179
    %v2635 = vsel %vm470, %v2631, -inf
    %2636 = vmax.xlane.f32.xlu0 %v2635
    %v2637 = vpop.xlane.xlu0 %2636
    %v2638 = vsel %vm474, %v2632, -inf
    %2639 = vmax.xlane.f32.xlu0 %v2638
    %v2640 = vpop.xlane.xlu0 %2639
    %v2641 = vsel %vm470, %v2633, -inf
    %2642 = vmax.xlane.f32.xlu0 %v2641
    %v2643 = vpop.xlane.xlu0 %2642
    %v2644 = vsel %vm474, %v2634, -inf
    %2645 = vmax.xlane.f32.xlu0 %v2644
    %v2646 = vpop.xlane.xlu0 %2645
    %v2647 = vsub.f32 %v2631, %v2637
    %v2648 = vsub.f32 %v2632, %v2640
    %v2649 = vsub.f32 %v2633, %v2643
    %v2650 = vsub.f32 %v2634, %v2646
    %v2651 = vmul.f32 %v2647, 1.442695
    %v2652 = vpow.pop %v2651
    %v2653 = vmul.f32 %v2648, 1.442695
    %v2654 = vpow.pop %v2653
    %v2655 = vmul.f32 %v2649, 1.442695
    %v2656 = vpow.pop %v2655
    %v2657 = vmul.f32 %v2650, 1.442695
    %v2658 = vpow.pop %v2657
    %v2659 = vsel %vm470, %v2652, 0.0
    %2660 = vadd.xlane.f32.xlu0 %v2659
    %v2661 = vpop.xlane.xlu0 %2660
    %v2662 = vsel %vm474, %v2654, 0.0
    %2663 = vadd.xlane.f32.xlu0 %v2662
    %v2664 = vpop.xlane.xlu0 %2663
    %v2665 = vsel %vm470, %v2656, 0.0
    %2666 = vadd.xlane.f32.xlu0 %v2665
    %v2667 = vpop.xlane.xlu0 %2666
    %v2668 = vsel %vm474, %v2658, 0.0
    %2669 = vadd.xlane.f32.xlu0 %v2668
    %v2670 = vpop.xlane.xlu0 %2669
    %v2671 = vrcp.pop %v2661
    %v2672 = vrcp.pop %v2664
    %v2673 = vrcp.pop %v2667
    %v2674 = vrcp.pop %v2670
    %v2675 = vmul.f32 %v2652, %v2671
    %v2676 = vmul.f32 %v2654, %v2672
    %v2677 = vmul.f32 %v2656, %v2673
    %v2678 = vmul.f32 %v2658, %v2674
    %2679 = vrot.lane.b32.xlu0 %v2552, 86
    %v2680 = vpop.permute.xlu0 %2679
    %2681 = vrot.lane.b32.xlu0 %v2553, 86
    %v2682 = vpop.permute.xlu0 %2681
    %v2685 = vsel %vm470, %v2675, 0
    %v2688 = vsel %vm470, %v2676, 0
    %v2690 = vsel %vm2265, %v2682, 0
    %2692 = vmatpush.msra.mxu0 0.0
    %2693 = vmatpush.msra.mxu0 0.0
    %2694 = vmatpush.msra.mxu0 0.0
    %2695 = vmatpush.msra.mxu0 0.0
    %2696 = vmatpush.msra.mxu0 0.0
    %2697 = vmatpush.msra.mxu0 0.0
    %2698 = vmatpush.msra.mxu0 0.0
    %2699 = vmatpush.msra.mxu0 0.0
    %2700 = vmatpush.msra.mxu0 0.0
    %2701 = vmatpush.msra.mxu0 0.0
    %2702 = vmatpush.msra.mxu0 0.0
    %2703 = vmatpush.msra.mxu0 0.0
    %2704 = vmatpush.msra.mxu0 0.0
    %2705 = vmatpush.msra.mxu0 0.0
    %2706 = vmatpush.msra.mxu0 %v2690
    %2707 = vmatpush.msra.mxu0 %v2680
    %2708 = vmatmul.f32.gmra.mxu0 %v2685
    %v2709 = vpop.f32.mrf.mxu0
    %v2710 = vadd.f32 0.0, %v2709
    %2711 = vmatmul.f32.gmra.mxu0 %v2688
    %v2712 = vpop.f32.mrf.mxu0
    %v2713 = vadd.f32 0.0, %v2712
    %2714 = vdwg.mxu0
    %2715 = vrot.lane.b32.xlu0 %v2554, 86
    %v2716 = vpop.permute.xlu0 %2715
    %2717 = vrot.lane.b32.xlu0 %v2555, 86
    %v2718 = vpop.permute.xlu0 %2717
    %v2721 = vsel %vm470, %v2677, 0
    %v2724 = vsel %vm470, %v2678, 0
    %v2726 = vsel %vm2265, %v2718, 0
    %2728 = vmatpush.msra.mxu0 0.0
    %2729 = vmatpush.msra.mxu0 0.0
    %2730 = vmatpush.msra.mxu0 0.0
    %2731 = vmatpush.msra.mxu0 0.0
    %2732 = vmatpush.msra.mxu0 0.0
    %2733 = vmatpush.msra.mxu0 0.0
    %2734 = vmatpush.msra.mxu0 0.0
    %2735 = vmatpush.msra.mxu0 0.0
    %2736 = vmatpush.msra.mxu0 0.0
    %2737 = vmatpush.msra.mxu0 0.0
    %2738 = vmatpush.msra.mxu0 0.0
    %2739 = vmatpush.msra.mxu0 0.0
    %2740 = vmatpush.msra.mxu0 0.0
    %2741 = vmatpush.msra.mxu0 0.0
    %2742 = vmatpush.msra.mxu0 %v2726
    %2743 = vmatpush.msra.mxu0 %v2716
    %2744 = vmatmul.f32.gmra.mxu0 %v2721
    %v2745 = vpop.f32.mrf.mxu0
    %v2746 = vadd.f32 0.0, %v2745
    %2747 = vmatmul.f32.gmra.mxu0 %v2724
    %v2748 = vpop.f32.mrf.mxu0
    %v2749 = vadd.f32 0.0, %v2748
    %2750 = vdwg.mxu0
    %v2751 = vld [vmem:[%s9] sm:$0x3]
    %v2752 = vld [vmem:[%s1] sm:$0x3]
    %v2753 = vld [vmem:[%s8] ss:$2 sm:$0x3]
    %2755 = vset.pattern.permute.xlu0 0
    %2756 = vperm.xlu0 %2755, %v2752
    %v2757 = vpop.permute.xlu0 %2756
    %v2760 = vperm.slane %v2753, 0
    %v2761 = vperm.slane %v2753, 1
    %v2764 = vmul.f32 %v2757, %v2760
    %v2765 = vmul.f32 %v2757, %v2761
    %v2767 = vperm.slane %v2751, 0
    %v2768 = vperm.slane %v2751, 1
    %v2771 = vadd.f32 %v2767, %v2764
    %v2772 = vadd.f32 %v2768, %v2765
    %s2773 = scalar_lea.vmem %s8, 1
    %v2774 = vld [vmem:[%s2773] ss:$2 sm:$0x3]
    %2775 = vset.pattern.permute.xlu0 1
    %2776 = vperm.xlu0 %2775, %v2752
    %v2777 = vpop.permute.xlu0 %2776
    %v2780 = vperm.slane %v2774, 0
    %v2781 = vperm.slane %v2774, 1
    %v2784 = vmul.f32 %v2777, %v2780
    %v2785 = vmul.f32 %v2777, %v2781
    %v2786 = vadd.f32 %v2771, %v2784
    %v2787 = vadd.f32 %v2772, %v2785
    %v2788 = vld [vmem:[%s7] sm:$0xff]
    %v2789 = vld [vmem:[%s7 + $0x8] sm:$0xff]
    %v2790 = vld [vmem:[%s7 + $0x10] sm:$0xff]
    %v2791 = vld [vmem:[%s7 + $0x18] sm:$0xff]
    %v2792 = vld [vmem:[%s7 + $0x20] sm:$0x1f]
    %v2793 = vld [vmem:[%s7 + $0x28] sm:$0x1f]
    %v2796 = vrot.slane %v2746, 7
    %v2797 = vsel %vm2246, %v2796, %v2710
    %v2798 = vsel %vm2562, %v2797, 0
    %vm2800 = vcmask 1044480
    %v2802 = vsel %vm2800, %v2792, 0
    %v2805 = vsel %vm2800, %v2793, 0
    %2807 = vmatpush.msra.mxu0 0.0
    %2808 = vmatpush.msra.mxu0 0.0
    %2809 = vmatpush.msra.mxu0 0.0
    %2810 = vmatpush.msra.mxu0 0.0
    %2811 = vmatpush.msra.mxu0 0.0
    %2812 = vmatpush.msra.mxu0 0.0
    %2813 = vmatpush.msra.mxu0 0.0
    %2814 = vmatpush.msra.mxu0 0.0
    %2815 = vmatpush.msra.mxu0 0.0
    %2816 = vmatpush.msra.mxu0 0.0
    %2817 = vmatpush.msra.mxu0 0.0
    %2818 = vmatpush.msra.mxu0 0.0
    %2819 = vmatpush.msra.mxu0 0.0
    %2820 = vmatpush.msra.mxu0 %v2802
    %2821 = vmatpush.msra.mxu0 %v2790
    %2822 = vmatpush.msra.mxu0 %v2788
    %2823 = vmatmul.f32.gmra.mxu0 %v2798
    %v2824 = vpop.f32.mrf.mxu0
    %v2825 = vadd.f32 0.0, %v2824
    %2826 = vdwg.mxu0
    %2827 = vmatpush.msra.mxu0 0.0
    %2828 = vmatpush.msra.mxu0 0.0
    %2829 = vmatpush.msra.mxu0 0.0
    %2830 = vmatpush.msra.mxu0 0.0
    %2831 = vmatpush.msra.mxu0 0.0
    %2832 = vmatpush.msra.mxu0 0.0
    %2833 = vmatpush.msra.mxu0 0.0
    %2834 = vmatpush.msra.mxu0 0.0
    %2835 = vmatpush.msra.mxu0 0.0
    %2836 = vmatpush.msra.mxu0 0.0
    %2837 = vmatpush.msra.mxu0 0.0
    %2838 = vmatpush.msra.mxu0 0.0
    %2839 = vmatpush.msra.mxu0 0.0
    %2840 = vmatpush.msra.mxu0 %v2805
    %2841 = vmatpush.msra.mxu0 %v2791
    %2842 = vmatpush.msra.mxu0 %v2789
    %2843 = vmatmul.f32.gmra.mxu0 %v2798
    %v2844 = vpop.f32.mrf.mxu0
    %v2845 = vadd.f32 0.0, %v2844
    %2846 = vdwg.mxu0
    %v2847 = vadd.f32 %v2786, %v2825
    %v2848 = vadd.f32 %v2787, %v2845
    %s2849 = scalar_lea.vmem %s7, 48
    %v2850 = vld [vmem:[%s2849] sm:$0xff]
    %v2851 = vld [vmem:[%s2849 + $0x8] sm:$0xff]
    %v2852 = vld [vmem:[%s2849 + $0x10] sm:$0xff]
    %v2853 = vld [vmem:[%s2849 + $0x18] sm:$0xff]
    %v2854 = vld [vmem:[%s2849 + $0x20] sm:$0x1f]
    %v2855 = vld [vmem:[%s2849 + $0x28] sm:$0x1f]
    %v2856 = vrot.slane %v2710, 1
    %v2857 = vsel %vm2246, %v2746, %v2856
    %v2858 = vsel %vm2562, %v2857, 0
    %v2861 = vsel %vm2800, %v2854, 0
    %v2864 = vsel %vm2800, %v2855, 0
    %2866 = vmatpush.msra.mxu0 0.0
    %2867 = vmatpush.msra.mxu0 0.0
    %2868 = vmatpush.msra.mxu0 0.0
    %2869 = vmatpush.msra.mxu0 0.0
    %2870 = vmatpush.msra.mxu0 0.0
    %2871 = vmatpush.msra.mxu0 0.0
    %2872 = vmatpush.msra.mxu0 0.0
    %2873 = vmatpush.msra.mxu0 0.0
    %2874 = vmatpush.msra.mxu0 0.0
    %2875 = vmatpush.msra.mxu0 0.0
    %2876 = vmatpush.msra.mxu0 0.0
    %2877 = vmatpush.msra.mxu0 0.0
    %2878 = vmatpush.msra.mxu0 0.0
    %2879 = vmatpush.msra.mxu0 %v2861
    %2880 = vmatpush.msra.mxu0 %v2852
    %2881 = vmatpush.msra.mxu0 %v2850
    %2882 = vmatmul.f32.gmra.mxu0 %v2858
    %v2883 = vpop.f32.mrf.mxu0
    %v2884 = vadd.f32 0.0, %v2883
    %2885 = vdwg.mxu0
    %2886 = vmatpush.msra.mxu0 0.0
    %2887 = vmatpush.msra.mxu0 0.0
    %2888 = vmatpush.msra.mxu0 0.0
    %2889 = vmatpush.msra.mxu0 0.0
    %2890 = vmatpush.msra.mxu0 0.0
    %2891 = vmatpush.msra.mxu0 0.0
    %2892 = vmatpush.msra.mxu0 0.0
    %2893 = vmatpush.msra.mxu0 0.0
    %2894 = vmatpush.msra.mxu0 0.0
    %2895 = vmatpush.msra.mxu0 0.0
    %2896 = vmatpush.msra.mxu0 0.0
    %2897 = vmatpush.msra.mxu0 0.0
    %2898 = vmatpush.msra.mxu0 0.0
    %2899 = vmatpush.msra.mxu0 %v2864
    %2900 = vmatpush.msra.mxu0 %v2853
    %2901 = vmatpush.msra.mxu0 %v2851
    %2902 = vmatmul.f32.gmra.mxu0 %v2858
    %v2903 = vpop.f32.mrf.mxu0
    %v2904 = vadd.f32 0.0, %v2903
    %2905 = vdwg.mxu0
    %v2906 = vadd.f32 %v2847, %v2884
    %v2907 = vadd.f32 %v2848, %v2904
    %s2908 = scalar_lea.vmem %s7, 96
    %v2909 = vld [vmem:[%s2908] sm:$0xff]
    %v2910 = vld [vmem:[%s2908 + $0x8] sm:$0xff]
    %v2911 = vld [vmem:[%s2908 + $0x10] sm:$0xff]
    %v2912 = vld [vmem:[%s2908 + $0x18] sm:$0xff]
    %v2913 = vld [vmem:[%s2908 + $0x20] sm:$0x1f]
    %v2914 = vld [vmem:[%s2908 + $0x28] sm:$0x1f]
    %v2915 = vrot.slane %v2710, 2
    %v2916 = vrot.slane %v2746, 1
    %v2917 = vsel %vm2246, %v2916, %v2915
    %v2918 = vsel %vm2562, %v2917, 0
    %v2921 = vsel %vm2800, %v2913, 0
    %v2924 = vsel %vm2800, %v2914, 0
    %2926 = vmatpush.msra.mxu0 0.0
    %2927 = vmatpush.msra.mxu0 0.0
    %2928 = vmatpush.msra.mxu0 0.0
    %2929 = vmatpush.msra.mxu0 0.0
    %2930 = vmatpush.msra.mxu0 0.0
    %2931 = vmatpush.msra.mxu0 0.0
    %2932 = vmatpush.msra.mxu0 0.0
    %2933 = vmatpush.msra.mxu0 0.0
    %2934 = vmatpush.msra.mxu0 0.0
    %2935 = vmatpush.msra.mxu0 0.0
    %2936 = vmatpush.msra.mxu0 0.0
    %2937 = vmatpush.msra.mxu0 0.0
    %2938 = vmatpush.msra.mxu0 0.0
    %2939 = vmatpush.msra.mxu0 %v2921
    %2940 = vmatpush.msra.mxu0 %v2911
    %2941 = vmatpush.msra.mxu0 %v2909
    %2942 = vmatmul.f32.gmra.mxu0 %v2918
    %v2943 = vpop.f32.mrf.mxu0
    %v2944 = vadd.f32 0.0, %v2943
    %2945 = vdwg.mxu0
    %2946 = vmatpush.msra.mxu0 0.0
    %2947 = vmatpush.msra.mxu0 0.0
    %2948 = vmatpush.msra.mxu0 0.0
    %2949 = vmatpush.msra.mxu0 0.0
    %2950 = vmatpush.msra.mxu0 0.0
    %2951 = vmatpush.msra.mxu0 0.0
    %2952 = vmatpush.msra.mxu0 0.0
    %2953 = vmatpush.msra.mxu0 0.0
    %2954 = vmatpush.msra.mxu0 0.0
    %2955 = vmatpush.msra.mxu0 0.0
    %2956 = vmatpush.msra.mxu0 0.0
    %2957 = vmatpush.msra.mxu0 0.0
    %2958 = vmatpush.msra.mxu0 0.0
    %2959 = vmatpush.msra.mxu0 %v2924
    %2960 = vmatpush.msra.mxu0 %v2912
    %2961 = vmatpush.msra.mxu0 %v2910
    %2962 = vmatmul.f32.gmra.mxu0 %v2918
    %v2963 = vpop.f32.mrf.mxu0
    %v2964 = vadd.f32 0.0, %v2963
    %2965 = vdwg.mxu0
    %v2966 = vadd.f32 %v2906, %v2944
    %v2967 = vadd.f32 %v2907, %v2964
    %s2968 = scalar_lea.vmem %s7, 144
    %v2969 = vld [vmem:[%s2968] sm:$0xff]
    %v2970 = vld [vmem:[%s2968 + $0x8] sm:$0xff]
    %v2971 = vld [vmem:[%s2968 + $0x10] sm:$0xff]
    %v2972 = vld [vmem:[%s2968 + $0x18] sm:$0xff]
    %v2973 = vld [vmem:[%s2968 + $0x20] sm:$0x1f]
    %v2974 = vld [vmem:[%s2968 + $0x28] sm:$0x1f]
    %v2975 = vrot.slane %v2710, 3
    %v2976 = vrot.slane %v2746, 2
    %v2977 = vsel %vm2246, %v2976, %v2975
    %v2978 = vsel %vm2562, %v2977, 0
    %v2981 = vsel %vm2800, %v2973, 0
    %v2984 = vsel %vm2800, %v2974, 0
    %2986 = vmatpush.msra.mxu0 0.0
    %2987 = vmatpush.msra.mxu0 0.0
    %2988 = vmatpush.msra.mxu0 0.0
    %2989 = vmatpush.msra.mxu0 0.0
    %2990 = vmatpush.msra.mxu0 0.0
    %2991 = vmatpush.msra.mxu0 0.0
    %2992 = vmatpush.msra.mxu0 0.0
    %2993 = vmatpush.msra.mxu0 0.0
    %2994 = vmatpush.msra.mxu0 0.0
    %2995 = vmatpush.msra.mxu0 0.0
    %2996 = vmatpush.msra.mxu0 0.0
    %2997 = vmatpush.msra.mxu0 0.0
    %2998 = vmatpush.msra.mxu0 0.0
    %2999 = vmatpush.msra.mxu0 %v2981
    %3000 = vmatpush.msra.mxu0 %v2971
    %3001 = vmatpush.msra.mxu0 %v2969
    %3002 = vmatmul.f32.gmra.mxu0 %v2978
    %v3003 = vpop.f32.mrf.mxu0
    %v3004 = vadd.f32 0.0, %v3003
    %3005 = vdwg.mxu0
    %3006 = vmatpush.msra.mxu0 0.0
    %3007 = vmatpush.msra.mxu0 0.0
    %3008 = vmatpush.msra.mxu0 0.0
    %3009 = vmatpush.msra.mxu0 0.0
    %3010 = vmatpush.msra.mxu0 0.0
    %3011 = vmatpush.msra.mxu0 0.0
    %3012 = vmatpush.msra.mxu0 0.0
    %3013 = vmatpush.msra.mxu0 0.0
    %3014 = vmatpush.msra.mxu0 0.0
    %3015 = vmatpush.msra.mxu0 0.0
    %3016 = vmatpush.msra.mxu0 0.0
    %3017 = vmatpush.msra.mxu0 0.0
    %3018 = vmatpush.msra.mxu0 0.0
    %3019 = vmatpush.msra.mxu0 %v2984
    %3020 = vmatpush.msra.mxu0 %v2972
    %3021 = vmatpush.msra.mxu0 %v2970
    %3022 = vmatmul.f32.gmra.mxu0 %v2978
    %v3023 = vpop.f32.mrf.mxu0
    %v3024 = vadd.f32 0.0, %v3023
    %3025 = vdwg.mxu0
    %v3026 = vadd.f32 %v2966, %v3004
    %v3027 = vadd.f32 %v2967, %v3024
    %s3028 = scalar_lea.vmem %s7, 192
    %v3029 = vld [vmem:[%s3028] sm:$0xff]
    %v3030 = vld [vmem:[%s3028 + $0x8] sm:$0xff]
    %v3031 = vld [vmem:[%s3028 + $0x10] sm:$0xff]
    %v3032 = vld [vmem:[%s3028 + $0x18] sm:$0xff]
    %v3033 = vld [vmem:[%s3028 + $0x20] sm:$0x1f]
    %v3034 = vld [vmem:[%s3028 + $0x28] sm:$0x1f]
    %v3035 = vrot.slane %v2710, 4
    %v3036 = vrot.slane %v2746, 3
    %v3037 = vsel %vm2246, %v3036, %v3035
    %v3038 = vsel %vm2562, %v3037, 0
    %v3041 = vsel %vm2800, %v3033, 0
    %v3044 = vsel %vm2800, %v3034, 0
    %3046 = vmatpush.msra.mxu0 0.0
    %3047 = vmatpush.msra.mxu0 0.0
    %3048 = vmatpush.msra.mxu0 0.0
    %3049 = vmatpush.msra.mxu0 0.0
    %3050 = vmatpush.msra.mxu0 0.0
    %3051 = vmatpush.msra.mxu0 0.0
    %3052 = vmatpush.msra.mxu0 0.0
    %3053 = vmatpush.msra.mxu0 0.0
    %3054 = vmatpush.msra.mxu0 0.0
    %3055 = vmatpush.msra.mxu0 0.0
    %3056 = vmatpush.msra.mxu0 0.0
    %3057 = vmatpush.msra.mxu0 0.0
    %3058 = vmatpush.msra.mxu0 0.0
    %3059 = vmatpush.msra.mxu0 %v3041
    %3060 = vmatpush.msra.mxu0 %v3031
    %3061 = vmatpush.msra.mxu0 %v3029
    %3062 = vmatmul.f32.gmra.mxu0 %v3038
    %v3063 = vpop.f32.mrf.mxu0
    %v3064 = vadd.f32 0.0, %v3063
    %3065 = vdwg.mxu0
    %3066 = vmatpush.msra.mxu0 0.0
    %3067 = vmatpush.msra.mxu0 0.0
    %3068 = vmatpush.msra.mxu0 0.0
    %3069 = vmatpush.msra.mxu0 0.0
    %3070 = vmatpush.msra.mxu0 0.0
    %3071 = vmatpush.msra.mxu0 0.0
    %3072 = vmatpush.msra.mxu0 0.0
    %3073 = vmatpush.msra.mxu0 0.0
    %3074 = vmatpush.msra.mxu0 0.0
    %3075 = vmatpush.msra.mxu0 0.0
    %3076 = vmatpush.msra.mxu0 0.0
    %3077 = vmatpush.msra.mxu0 0.0
    %3078 = vmatpush.msra.mxu0 0.0
    %3079 = vmatpush.msra.mxu0 %v3044
    %3080 = vmatpush.msra.mxu0 %v3032
    %3081 = vmatpush.msra.mxu0 %v3030
    %3082 = vmatmul.f32.gmra.mxu0 %v3038
    %v3083 = vpop.f32.mrf.mxu0
    %v3084 = vadd.f32 0.0, %v3083
    %3085 = vdwg.mxu0
    %v3086 = vadd.f32 %v3026, %v3064
    %v3087 = vadd.f32 %v3027, %v3084
    %s3088 = scalar_lea.vmem %s7, 240
    %v3089 = vld [vmem:[%s3088] sm:$0xff]
    %v3090 = vld [vmem:[%s3088 + $0x8] sm:$0xff]
    %v3091 = vld [vmem:[%s3088 + $0x10] sm:$0xff]
    %v3092 = vld [vmem:[%s3088 + $0x18] sm:$0xff]
    %v3093 = vld [vmem:[%s3088 + $0x20] sm:$0x1f]
    %v3094 = vld [vmem:[%s3088 + $0x28] sm:$0x1f]
    %v3095 = vrot.slane %v2710, 5
    %v3096 = vrot.slane %v2746, 4
    %v3097 = vsel %vm2246, %v3096, %v3095
    %v3098 = vsel %vm2562, %v3097, 0
    %v3101 = vsel %vm2800, %v3093, 0
    %v3104 = vsel %vm2800, %v3094, 0
    %3106 = vmatpush.msra.mxu0 0.0
    %3107 = vmatpush.msra.mxu0 0.0
    %3108 = vmatpush.msra.mxu0 0.0
    %3109 = vmatpush.msra.mxu0 0.0
    %3110 = vmatpush.msra.mxu0 0.0
    %3111 = vmatpush.msra.mxu0 0.0
    %3112 = vmatpush.msra.mxu0 0.0
    %3113 = vmatpush.msra.mxu0 0.0
    %3114 = vmatpush.msra.mxu0 0.0
    %3115 = vmatpush.msra.mxu0 0.0
    %3116 = vmatpush.msra.mxu0 0.0
    %3117 = vmatpush.msra.mxu0 0.0
    %3118 = vmatpush.msra.mxu0 0.0
    %3119 = vmatpush.msra.mxu0 %v3101
    %3120 = vmatpush.msra.mxu0 %v3091
    %3121 = vmatpush.msra.mxu0 %v3089
    %3122 = vmatmul.f32.gmra.mxu0 %v3098
    %v3123 = vpop.f32.mrf.mxu0
    %v3124 = vadd.f32 0.0, %v3123
    %3125 = vdwg.mxu0
    %3126 = vmatpush.msra.mxu0 0.0
    %3127 = vmatpush.msra.mxu0 0.0
    %3128 = vmatpush.msra.mxu0 0.0
    %3129 = vmatpush.msra.mxu0 0.0
    %3130 = vmatpush.msra.mxu0 0.0
    %3131 = vmatpush.msra.mxu0 0.0
    %3132 = vmatpush.msra.mxu0 0.0
    %3133 = vmatpush.msra.mxu0 0.0
    %3134 = vmatpush.msra.mxu0 0.0
    %3135 = vmatpush.msra.mxu0 0.0
    %3136 = vmatpush.msra.mxu0 0.0
    %3137 = vmatpush.msra.mxu0 0.0
    %3138 = vmatpush.msra.mxu0 0.0
    %3139 = vmatpush.msra.mxu0 %v3104
    %3140 = vmatpush.msra.mxu0 %v3092
    %3141 = vmatpush.msra.mxu0 %v3090
    %3142 = vmatmul.f32.gmra.mxu0 %v3098
    %v3143 = vpop.f32.mrf.mxu0
    %v3144 = vadd.f32 0.0, %v3143
    %3145 = vdwg.mxu0
    %v3146 = vadd.f32 %v3086, %v3124
    %v3147 = vadd.f32 %v3087, %v3144
    %s3148 = scalar_lea.vmem %s7, 288
    %v3149 = vld [vmem:[%s3148] sm:$0xff]
    %v3150 = vld [vmem:[%s3148 + $0x8] sm:$0xff]
    %v3151 = vld [vmem:[%s3148 + $0x10] sm:$0xff]
    %v3152 = vld [vmem:[%s3148 + $0x18] sm:$0xff]
    %v3153 = vld [vmem:[%s3148 + $0x20] sm:$0x1f]
    %v3154 = vld [vmem:[%s3148 + $0x28] sm:$0x1f]
    %v3155 = vrot.slane %v2710, 6
    %v3156 = vrot.slane %v2746, 5
    %v3157 = vsel %vm2246, %v3156, %v3155
    %v3158 = vsel %vm2562, %v3157, 0
    %v3161 = vsel %vm2800, %v3153, 0
    %v3164 = vsel %vm2800, %v3154, 0
    %3166 = vmatpush.msra.mxu0 0.0
    %3167 = vmatpush.msra.mxu0 0.0
    %3168 = vmatpush.msra.mxu0 0.0
    %3169 = vmatpush.msra.mxu0 0.0
    %3170 = vmatpush.msra.mxu0 0.0
    %3171 = vmatpush.msra.mxu0 0.0
    %3172 = vmatpush.msra.mxu0 0.0
    %3173 = vmatpush.msra.mxu0 0.0
    %3174 = vmatpush.msra.mxu0 0.0
    %3175 = vmatpush.msra.mxu0 0.0
    %3176 = vmatpush.msra.mxu0 0.0
    %3177 = vmatpush.msra.mxu0 0.0
    %3178 = vmatpush.msra.mxu0 0.0
    %3179 = vmatpush.msra.mxu0 %v3161
    %3180 = vmatpush.msra.mxu0 %v3151
    %3181 = vmatpush.msra.mxu0 %v3149
    %3182 = vmatmul.f32.gmra.mxu0 %v3158
    %v3183 = vpop.f32.mrf.mxu0
    %v3184 = vadd.f32 0.0, %v3183
    %3185 = vdwg.mxu0
    %3186 = vmatpush.msra.mxu0 0.0
    %3187 = vmatpush.msra.mxu0 0.0
    %3188 = vmatpush.msra.mxu0 0.0
    %3189 = vmatpush.msra.mxu0 0.0
    %3190 = vmatpush.msra.mxu0 0.0
    %3191 = vmatpush.msra.mxu0 0.0
    %3192 = vmatpush.msra.mxu0 0.0
    %3193 = vmatpush.msra.mxu0 0.0
    %3194 = vmatpush.msra.mxu0 0.0
    %3195 = vmatpush.msra.mxu0 0.0
    %3196 = vmatpush.msra.mxu0 0.0
    %3197 = vmatpush.msra.mxu0 0.0
    %3198 = vmatpush.msra.mxu0 0.0
    %3199 = vmatpush.msra.mxu0 %v3164
    %3200 = vmatpush.msra.mxu0 %v3152
    %3201 = vmatpush.msra.mxu0 %v3150
    %3202 = vmatmul.f32.gmra.mxu0 %v3158
    %v3203 = vpop.f32.mrf.mxu0
    %v3204 = vadd.f32 0.0, %v3203
    %3205 = vdwg.mxu0
    %v3206 = vadd.f32 %v3146, %v3184
    %v3207 = vadd.f32 %v3147, %v3204
    %s3208 = scalar_lea.vmem %s7, 336
    %v3209 = vld [vmem:[%s3208] sm:$0xff]
    %v3210 = vld [vmem:[%s3208 + $0x8] sm:$0xff]
    %v3211 = vld [vmem:[%s3208 + $0x10] sm:$0xff]
    %v3212 = vld [vmem:[%s3208 + $0x18] sm:$0xff]
    %v3213 = vld [vmem:[%s3208 + $0x20] sm:$0x1f]
    %v3214 = vld [vmem:[%s3208 + $0x28] sm:$0x1f]
    %v3215 = vrot.slane %v2710, 7
    %v3216 = vrot.slane %v2746, 6
    %v3217 = vsel %vm2246, %v3216, %v3215
    %v3218 = vsel %vm2562, %v3217, 0
    %v3221 = vsel %vm2800, %v3213, 0
    %v3224 = vsel %vm2800, %v3214, 0
    %3226 = vmatpush.msra.mxu0 0.0
    %3227 = vmatpush.msra.mxu0 0.0
    %3228 = vmatpush.msra.mxu0 0.0
    %3229 = vmatpush.msra.mxu0 0.0
    %3230 = vmatpush.msra.mxu0 0.0
    %3231 = vmatpush.msra.mxu0 0.0
    %3232 = vmatpush.msra.mxu0 0.0
    %3233 = vmatpush.msra.mxu0 0.0
    %3234 = vmatpush.msra.mxu0 0.0
    %3235 = vmatpush.msra.mxu0 0.0
    %3236 = vmatpush.msra.mxu0 0.0
    %3237 = vmatpush.msra.mxu0 0.0
    %3238 = vmatpush.msra.mxu0 0.0
    %3239 = vmatpush.msra.mxu0 %v3221
    %3240 = vmatpush.msra.mxu0 %v3211
    %3241 = vmatpush.msra.mxu0 %v3209
    %3242 = vmatmul.f32.gmra.mxu0 %v3218
    %v3243 = vpop.f32.mrf.mxu0
    %v3244 = vadd.f32 0.0, %v3243
    %3245 = vdwg.mxu0
    %3246 = vmatpush.msra.mxu0 0.0
    %3247 = vmatpush.msra.mxu0 0.0
    %3248 = vmatpush.msra.mxu0 0.0
    %3249 = vmatpush.msra.mxu0 0.0
    %3250 = vmatpush.msra.mxu0 0.0
    %3251 = vmatpush.msra.mxu0 0.0
    %3252 = vmatpush.msra.mxu0 0.0
    %3253 = vmatpush.msra.mxu0 0.0
    %3254 = vmatpush.msra.mxu0 0.0
    %3255 = vmatpush.msra.mxu0 0.0
    %3256 = vmatpush.msra.mxu0 0.0
    %3257 = vmatpush.msra.mxu0 0.0
    %3258 = vmatpush.msra.mxu0 0.0
    %3259 = vmatpush.msra.mxu0 %v3224
    %3260 = vmatpush.msra.mxu0 %v3212
    %3261 = vmatpush.msra.mxu0 %v3210
    %3262 = vmatmul.f32.gmra.mxu0 %v3218
    %v3263 = vpop.f32.mrf.mxu0
    %v3264 = vadd.f32 0.0, %v3263
    %3265 = vdwg.mxu0
    %v3266 = vadd.f32 %v3206, %v3244
    %v3267 = vadd.f32 %v3207, %v3264
    %s3268 = scalar_lea.vmem %s7, 384
    %v3269 = vld [vmem:[%s3268] sm:$0xff]
    %v3270 = vld [vmem:[%s3268 + $0x8] sm:$0xff]
    %v3271 = vld [vmem:[%s3268 + $0x10] sm:$0xff]
    %v3272 = vld [vmem:[%s3268 + $0x18] sm:$0xff]
    %v3273 = vld [vmem:[%s3268 + $0x20] sm:$0x1f]
    %v3274 = vld [vmem:[%s3268 + $0x28] sm:$0x1f]
    %v3277 = vrot.slane %v2749, 7
    %v3278 = vsel %vm2246, %v3277, %v2713
    %v3279 = vsel %vm2562, %v3278, 0
    %v3282 = vsel %vm2800, %v3273, 0
    %v3285 = vsel %vm2800, %v3274, 0
    %3287 = vmatpush.msra.mxu0 0.0
    %3288 = vmatpush.msra.mxu0 0.0
    %3289 = vmatpush.msra.mxu0 0.0
    %3290 = vmatpush.msra.mxu0 0.0
    %3291 = vmatpush.msra.mxu0 0.0
    %3292 = vmatpush.msra.mxu0 0.0
    %3293 = vmatpush.msra.mxu0 0.0
    %3294 = vmatpush.msra.mxu0 0.0
    %3295 = vmatpush.msra.mxu0 0.0
    %3296 = vmatpush.msra.mxu0 0.0
    %3297 = vmatpush.msra.mxu0 0.0
    %3298 = vmatpush.msra.mxu0 0.0
    %3299 = vmatpush.msra.mxu0 0.0
    %3300 = vmatpush.msra.mxu0 %v3282
    %3301 = vmatpush.msra.mxu0 %v3271
    %3302 = vmatpush.msra.mxu0 %v3269
    %3303 = vmatmul.f32.gmra.mxu0 %v3279
    %v3304 = vpop.f32.mrf.mxu0
    %v3305 = vadd.f32 0.0, %v3304
    %3306 = vdwg.mxu0
    %3307 = vmatpush.msra.mxu0 0.0
    %3308 = vmatpush.msra.mxu0 0.0
    %3309 = vmatpush.msra.mxu0 0.0
    %3310 = vmatpush.msra.mxu0 0.0
    %3311 = vmatpush.msra.mxu0 0.0
    %3312 = vmatpush.msra.mxu0 0.0
    %3313 = vmatpush.msra.mxu0 0.0
    %3314 = vmatpush.msra.mxu0 0.0
    %3315 = vmatpush.msra.mxu0 0.0
    %3316 = vmatpush.msra.mxu0 0.0
    %3317 = vmatpush.msra.mxu0 0.0
    %3318 = vmatpush.msra.mxu0 0.0
    %3319 = vmatpush.msra.mxu0 0.0
    %3320 = vmatpush.msra.mxu0 %v3285
    %3321 = vmatpush.msra.mxu0 %v3272
    %3322 = vmatpush.msra.mxu0 %v3270
    %3323 = vmatmul.f32.gmra.mxu0 %v3279
    %v3324 = vpop.f32.mrf.mxu0
    %v3325 = vadd.f32 0.0, %v3324
    %3326 = vdwg.mxu0
    %v3327 = vadd.f32 %v3266, %v3305
    %v3328 = vadd.f32 %v3267, %v3325
    %s3329 = scalar_lea.vmem %s7, 432
    %v3330 = vld [vmem:[%s3329] sm:$0xff]
    %v3331 = vld [vmem:[%s3329 + $0x8] sm:$0xff]
    %v3332 = vld [vmem:[%s3329 + $0x10] sm:$0xff]
    %v3333 = vld [vmem:[%s3329 + $0x18] sm:$0xff]
    %v3334 = vld [vmem:[%s3329 + $0x20] sm:$0x1f]
    %v3335 = vld [vmem:[%s3329 + $0x28] sm:$0x1f]
    %v3336 = vrot.slane %v2713, 1
    %v3337 = vsel %vm2246, %v2749, %v3336
    %v3338 = vsel %vm2562, %v3337, 0
    %v3341 = vsel %vm2800, %v3334, 0
    %v3344 = vsel %vm2800, %v3335, 0
    %3346 = vmatpush.msra.mxu0 0.0
    %3347 = vmatpush.msra.mxu0 0.0
    %3348 = vmatpush.msra.mxu0 0.0
    %3349 = vmatpush.msra.mxu0 0.0
    %3350 = vmatpush.msra.mxu0 0.0
    %3351 = vmatpush.msra.mxu0 0.0
    %3352 = vmatpush.msra.mxu0 0.0
    %3353 = vmatpush.msra.mxu0 0.0
    %3354 = vmatpush.msra.mxu0 0.0
    %3355 = vmatpush.msra.mxu0 0.0
    %3356 = vmatpush.msra.mxu0 0.0
    %3357 = vmatpush.msra.mxu0 0.0
    %3358 = vmatpush.msra.mxu0 0.0
    %3359 = vmatpush.msra.mxu0 %v3341
    %3360 = vmatpush.msra.mxu0 %v3332
    %3361 = vmatpush.msra.mxu0 %v3330
    %3362 = vmatmul.f32.gmra.mxu0 %v3338
    %v3363 = vpop.f32.mrf.mxu0
    %v3364 = vadd.f32 0.0, %v3363
    %3365 = vdwg.mxu0
    %3366 = vmatpush.msra.mxu0 0.0
    %3367 = vmatpush.msra.mxu0 0.0
    %3368 = vmatpush.msra.mxu0 0.0
    %3369 = vmatpush.msra.mxu0 0.0
    %3370 = vmatpush.msra.mxu0 0.0
    %3371 = vmatpush.msra.mxu0 0.0
    %3372 = vmatpush.msra.mxu0 0.0
    %3373 = vmatpush.msra.mxu0 0.0
    %3374 = vmatpush.msra.mxu0 0.0
    %3375 = vmatpush.msra.mxu0 0.0
    %3376 = vmatpush.msra.mxu0 0.0
    %3377 = vmatpush.msra.mxu0 0.0
    %3378 = vmatpush.msra.mxu0 0.0
    %3379 = vmatpush.msra.mxu0 %v3344
    %3380 = vmatpush.msra.mxu0 %v3333
    %3381 = vmatpush.msra.mxu0 %v3331
    %3382 = vmatmul.f32.gmra.mxu0 %v3338
    %v3383 = vpop.f32.mrf.mxu0
    %v3384 = vadd.f32 0.0, %v3383
    %3385 = vdwg.mxu0
    %v3386 = vadd.f32 %v3327, %v3364
    %v3387 = vadd.f32 %v3328, %v3384
    %v3388 = vmax.f32 %v3386, 0.0
    %v3389 = vmax.f32 %v3387, 0.0
    %v3390 = vld [vmem:[%s10] sm:$0xff]
    %v3391 = vld [vmem:[%s10 + $0x8] sm:$0xff]
    %v3392 = vld [vmem:[%s10 + $0x10] sm:$0xff]
    %v3393 = vld [vmem:[%s10 + $0x18] sm:$0xff]
    %v3394 = vld [vmem:[%s10 + $0x20] sm:$0xff]
    %v3395 = vld [vmem:[%s10 + $0x28] sm:$0xff]
    %v3396 = vld [vmem:[%s10 + $0x30] sm:$0xff]
    %v3397 = vld [vmem:[%s10 + $0x38] sm:$0xff]
    %v3398 = vld [vmem:[%s10 + $0x40] sm:$0xff]
    %v3399 = vld [vmem:[%s10 + $0x48] sm:$0xff]
    %v3400 = vld [vmem:[%s10 + $0x50] sm:$0xff]
    %v3401 = vld [vmem:[%s10 + $0x58] sm:$0xff]
    %v3402 = vld [vmem:[%s10 + $0x60] sm:$0xff]
    %v3403 = vld [vmem:[%s10 + $0x68] sm:$0xff]
    %v3404 = vld [vmem:[%s10 + $0x70] sm:$0xff]
    %v3405 = vld [vmem:[%s10 + $0x78] sm:$0xff]
    %v3406 = vld [vmem:[%s10 + $0x80] sm:$0xff]
    %v3407 = vld [vmem:[%s10 + $0x88] sm:$0xff]
    %v3408 = vld [vmem:[%s10 + $0x90] sm:$0xff]
    %v3409 = vld [vmem:[%s10 + $0x98] sm:$0xff]
    %v3410 = vld [vmem:[%s10 + $0xa0] sm:$0xff]
    %v3411 = vld [vmem:[%s10 + $0xa8] sm:$0xff]
    %v3412 = vld [vmem:[%s10 + $0xb0] sm:$0xff]
    %v3413 = vld [vmem:[%s10 + $0xb8] sm:$0xff]
    %v3414 = vld [vmem:[%s10 + $0xc0] sm:$0xff]
    %v3415 = vld [vmem:[%s10 + $0xc8] sm:$0xff]
    %v3416 = vld [vmem:[%s10 + $0xd0] sm:$0xff]
    %v3417 = vld [vmem:[%s10 + $0xd8] sm:$0xff]
    %v3418 = vld [vmem:[%s10 + $0xe0] sm:$0xff]
    %v3419 = vld [vmem:[%s10 + $0xe8] sm:$0xff]
    %v3420 = vld [vmem:[%s10 + $0xf0] sm:$0xff]
    %v3421 = vld [vmem:[%s10 + $0xf8] sm:$0xff]
    %v3422 = vld [vmem:[%s11] sm:$0x1]
    %v3424 = vperm.slane %v3422, 0
    %3426 = vmatpush.msra.mxu0 %v3405
    %3427 = vmatpush.msra.mxu0 %v3404
    %3428 = vmatpush.msra.mxu0 %v3403
    %3429 = vmatpush.msra.mxu0 %v3402
    %3430 = vmatpush.msra.mxu0 %v3401
    %3431 = vmatpush.msra.mxu0 %v3400
    %3432 = vmatpush.msra.mxu0 %v3399
    %3433 = vmatpush.msra.mxu0 %v3398
    %3434 = vmatpush.msra.mxu0 %v3397
    %3435 = vmatpush.msra.mxu0 %v3396
    %3436 = vmatpush.msra.mxu0 %v3395
    %3437 = vmatpush.msra.mxu0 %v3394
    %3438 = vmatpush.msra.mxu0 %v3393
    %3439 = vmatpush.msra.mxu0 %v3392
    %3440 = vmatpush.msra.mxu0 %v3391
    %3441 = vmatpush.msra.mxu0 %v3390
    %3442 = vmatmul.f32.gmra.mxu0 %v3388
    %v3443 = vpop.f32.mrf.mxu0
    %v3444 = vadd.f32 %v3424, %v3443
    %3445 = vdwg.mxu0
    %3446 = vmatpush.msra.mxu0 %v3421
    %3447 = vmatpush.msra.mxu0 %v3420
    %3448 = vmatpush.msra.mxu0 %v3419
    %3449 = vmatpush.msra.mxu0 %v3418
    %3450 = vmatpush.msra.mxu0 %v3417
    %3451 = vmatpush.msra.mxu0 %v3416
    %3452 = vmatpush.msra.mxu0 %v3415
    %3453 = vmatpush.msra.mxu0 %v3414
    %3454 = vmatpush.msra.mxu0 %v3413
    %3455 = vmatpush.msra.mxu0 %v3412
    %3456 = vmatpush.msra.mxu0 %v3411
    %3457 = vmatpush.msra.mxu0 %v3410
    %3458 = vmatpush.msra.mxu0 %v3409
    %3459 = vmatpush.msra.mxu0 %v3408
    %3460 = vmatpush.msra.mxu0 %v3407
    %3461 = vmatpush.msra.mxu0 %v3406
    %3462 = vmatmul.f32.gmra.mxu0 %v3389
    %v3463 = vpop.f32.mrf.mxu0
    %v3464 = vadd.f32 %v3444, %v3463
    %3465 = vdwg.mxu0
    %v3466 = vmax.f32 %v3464, 0.0
    %v3467 = vld [vmem:[%s12] sm:$0x1]
    %v3469 = vperm.slane %v3467, 0
    %v3471 = vmul.f32 %v3466, %v3469
    %v3472 = vsel %vm2265, %v3471, 0.0
    %3473 = vadd.xlane.f32.xlu0 %v3472
    %v3474 = vpop.xlane.xlu0 %3473
    %v3475 = vld [vmem:[#allocation2] sm:$0x1]
    %v3477 = vperm.slane %v3475, 0
    %v3479 = vadd.f32 %v3474, %v3477
    %vm3480 = vcmask 1024
    %3481 = vst.msk [vmem:[%s14] sm:$0x3] %vm3480, %v3479
    // Predicated region
    $region62: #{qmodel_forward.1} parent=1 // pred_check
      _
    $region63: #{qmodel_forward.1} parent=1 // pred_check_branch
      %3483 = sbr.rel (0) target = $region65
    $region64: #{qmodel_forward.1} parent=1 // pred_region
      _
    $region65: #{qmodel_forward.1} parent=1 // pred_fallthru
      _
    // Predicated region
    $region66: #{qmodel_forward.1} parent=1 // pred_check
      _
    $region67: #{qmodel_forward.1} parent=1 // pred_check_branch
      %3485 = sbr.rel (0) target = $region69
    $region68: #{qmodel_forward.1} parent=1 // pred_region
      _
    $region69: #{qmodel_forward.1} parent=1 // pred_fallthru
      _
    %3486 = vsyncpa [#allocation4], 1

</llo_original>
